<compile_context>
chip_gen: v6e
topology: v6e:2x2x1
jax: 0.10.0
libtpu: 0.0.40
codegen_flags: <defaults>
</compile_context>

<pallas_src>
import math
import functools

import jax
import jax.numpy as jnp
import numpy as np
from jax.experimental import pallas as pl
from jax.experimental.pallas import tpu as pltpu

EPS = 1e-6


def _layer_norm(x, a, b, eps=EPS):
    # Matches annotated-transformer LayerNorm: unbiased std, eps added to std.
    mean = jnp.mean(x, axis=-1, keepdims=True)
    var = jnp.sum((x - mean) ** 2, axis=-1, keepdims=True) / (x.shape[-1] - 1)
    std = jnp.sqrt(var)
    return a * (x - mean) / (std + eps) + b


def _encoder_kernel(n_heads,
                    x_ref, mask_ref,
                    wqkv_ref, bqkv_ref, wo_ref,
                    w1_ref, b1_ref, w2_ref,
                    pvec_ref, lnf_ref,
                    out_ref):
    """Grid = (n_layers,). The output block (the full (B,S,D) activation) stays
    VMEM-resident across the single 'arbitrary' layer axis and is the
    layer-to-layer carry; per-layer weights are streamed exactly once."""
    l = pl.program_id(0)
    n_layers = pl.num_programs(0)

    B, S, D = out_ref.shape
    BS = B * S
    d_k = D // n_heads
    scale = 1.0 / math.sqrt(d_k)

    @pl.when(l == 0)
    def _():
        out_ref[...] = x_ref[...]

    # Packed per-layer D-wide vectors: [ln1_a, ln1_b, ln2_a, ln2_b, bo, b2].
    pvec = pvec_ref[0]                                   # (6, D) f32
    ln1a, ln1b = pvec[0:1], pvec[1:2]
    ln2a, ln2b = pvec[2:3], pvec[3:4]
    bo, b2 = pvec[4:5], pvec[5:6]

    x = out_ref[...].reshape(BS, D)                      # f32 carry, (B*S, D)

    # Mask bias hoisted out of the head loop: one compare/select per layer.
    mask_bias = jnp.where(mask_ref[...] == 0.0, -1e9, 0.0)   # (B, 1, S) f32

    # ---- sublayer 0: pre-norm multi-head self-attention + residual ----
    xn = _layer_norm(x, ln1a, ln1b)
    # Fused Q|K|V projection: one (BS,D) @ (D,3D) bf16 MXU op, f32 accumulate.
    qkv = jnp.dot(xn.astype(jnp.bfloat16), wqkv_ref[0],
                  preferred_element_type=jnp.float32) + bqkv_ref[0]     # (BS, 3D)
    wo = wo_ref[0]                                       # (D, D) bf16

    # TODO(synk): for production sizes make d_k a multiple of 128 (or build an
    # (H, S, d_k) batched layout once); tiny d_k lane slices underfill the MXU.
    for b in range(B):                                   # static batch loop
        rows = slice(b * S, (b + 1) * S)
        qb = qkv[rows, 0:D]
        kb = qkv[rows, D:2 * D]
        vb = qkv[rows, 2 * D:3 * D]
        bias_b = mask_bias[b]                            # (1, S)
        acc = jnp.zeros((S, D), jnp.float32)
        for h in range(n_heads):                         # static head loop
            cols = slice(h * d_k, (h + 1) * d_k)
            qh, kh, vh = qb[:, cols], kb[:, cols], vb[:, cols]
            scores = jnp.dot(qh, kh.T,
                             preferred_element_type=jnp.float32) * scale + bias_b
            scores = scores - jnp.max(scores, axis=-1, keepdims=True)
            p = jnp.exp(scores)
            p = p * pl.reciprocal(jnp.sum(p, axis=-1, keepdims=True), approx=True)
            head = jnp.dot(p, vh, preferred_element_type=jnp.float32)   # (S, d_k)
            # Accumulate the output projection per head (no lane-dim concat).
            acc = acc + jnp.dot(head.astype(jnp.bfloat16), wo[cols, :],
                                preferred_element_type=jnp.float32)
        # TODO(synk): dropout is identity (module assumed in eval mode).
        out_ref[b] = x[rows, :] + acc + bo               # residual; bias added once

    # ---- sublayer 1: pre-norm position-wise feed-forward + residual ----
    x = out_ref[...].reshape(BS, D)
    xn2 = _layer_norm(x, ln2a, ln2b)
    h1 = jnp.maximum(
        jnp.dot(xn2.astype(jnp.bfloat16), w1_ref[0],
                preferred_element_type=jnp.float32) + b1_ref[0], 0.0)
    ff = jnp.dot(h1.astype(jnp.bfloat16), w2_ref[0],
                 preferred_element_type=jnp.float32) + b2
    out_ref[...] = (x + ff).reshape(B, S, D)

    # Final Encoder LayerNorm only after the last layer (pl.when-gated).
    @pl.when(l == n_layers - 1)
    def _():
        lnf = lnf_ref[...]                               # (2, D) = [a_2; b_2]
        xf = out_ref[...].reshape(BS, D)
        out_ref[...] = _layer_norm(xf, lnf[0:1], lnf[1:2]).reshape(B, S, D)


def _vmem_limit_bytes(B, S, D, F):
    f32, bf16 = 4, 2
    blk = (2 * B * S * D * f32                  # x input + out carry
           + B * S * f32                        # mask
           + (4 * D * D + 2 * D * F) * bf16     # wqkv + wo + w1 + w2
           + (3 * D + F + 8 * D) * f32)         # bqkv, b1, pvec (6D), lnf (2D)
    # double-buffered weight streams + activation intermediates + headroom
    return int(min(max(4 * blk, 32 << 20), 96 << 20))


def encoder_forward(x, x_mask, params, n_heads):
    B, S, D = x.shape
    n_layers = params["wqkv"].shape[0]
    F = params["w1"].shape[-1]

    lmap3 = lambda l: (l, 0, 0)          # per-layer stacked weights
    cmap3 = lambda l: (0, 0, 0)          # constant blocks (activations / mask)
    gmap2 = lambda l: (0, 0)             # shared final-norm params

    in_specs = [
        pl.BlockSpec((B, S, D), cmap3),        # x
        pl.BlockSpec((B, 1, S), cmap3),        # x_mask
        pl.BlockSpec((1, D, 3 * D), lmap3),    # wqkv  (bf16)
        pl.BlockSpec((1, 1, 3 * D), lmap3),    # bqkv
        pl.BlockSpec((1, D, D), lmap3),        # wo    (bf16)
        pl.BlockSpec((1, D, F), lmap3),        # w1    (bf16)
        pl.BlockSpec((1, 1, F), lmap3),        # b1
        pl.BlockSpec((1, F, D), lmap3),        # w2    (bf16)
        pl.BlockSpec((1, 6, D), lmap3),        # pvec = [ln1_a,ln1_b,ln2_a,ln2_b,bo,b2]
        pl.BlockSpec((2, D), gmap2),           # lnf  = [a_2; b_2]
    ]
    out_spec = pl.BlockSpec((B, S, D), cmap3)

    kernel = functools.partial(_encoder_kernel, n_heads)
    # TODO(synk): on v7x (2 TCs) add a parallel query-tile grid axis; with the
    # full activation folded into one carried block there is no parallel axis.
    return pl.pallas_call(
        kernel,
        out_shape=jax.ShapeDtypeStruct((B, S, D), jnp.float32),
        grid=(n_layers,),
        in_specs=in_specs,
        out_specs=out_spec,
        compiler_params=pltpu.CompilerParams(
            dimension_semantics=("arbitrary",),
            vmem_limit_bytes=_vmem_limit_bytes(B, S, D, F)),
    )(x, x_mask,
      params["wqkv"], params["bqkv"], params["wo"],
      params["w1"], params["b1"], params["w2"],
      params["pvec"], params["lnf"])


def encoder_reference(x, x_mask, params, n_heads):
    """Pure-JAX reference mirroring the PyTorch Encoder forward (eval mode) at
    the kernel's precision: bf16 operands for weight matmuls (f32 accumulate),
    f32 for LayerNorm / softmax / residuals."""
    B, S, D = x.shape
    n_layers = params["wqkv"].shape[0]
    F = params["w1"].shape[-1]
    d_k = D // n_heads
    scale = 1.0 / math.sqrt(d_k)
    mask4 = x_mask[:, :, None, :]        # (B,1,1,S)

    def mm(a, w):                        # bf16 operands, f32 accumulation
        return jnp.dot(a.astype(jnp.bfloat16), w, preferred_element_type=jnp.float32)

    def split(t):
        return t.reshape(B, S, n_heads, d_k).transpose(0, 2, 1, 3)

    for l in range(n_layers):
        pv = params["pvec"][l]
        xn = _layer_norm(x, pv[0:1], pv[1:2])
        qkv = mm(xn.reshape(B * S, D), params["wqkv"][l]).reshape(B, S, 3 * D) \
            + params["bqkv"][l]
        q, k, v = qkv[..., :D], qkv[..., D:2 * D], qkv[..., 2 * D:]
        qh, kh, vh = split(q), split(k), split(v)
        scores = jnp.einsum("bhqd,bhkd->bhqk", qh, kh) * scale
        scores = jnp.where(mask4 == 0.0, -1e9, scores)
        p = jax.nn.softmax(scores, axis=-1)
        o = jnp.einsum("bhqk,bhkd->bhqd", p, vh).transpose(0, 2, 1, 3).reshape(B, S, D)
        x = x + mm(o.reshape(B * S, D), params["wo"][l]).reshape(B, S, D) + pv[4:5]
        xn2 = _layer_norm(x, pv[2:3], pv[3:4])
        h1 = jnp.maximum(
            mm(xn2.reshape(B * S, D), params["w1"][l]).reshape(B, S, F)
            + params["b1"][l], 0.0)
        x = x + mm(h1.reshape(B * S, F), params["w2"][l]).reshape(B, S, D) + pv[5:6]
    return _layer_norm(x, params["lnf"][0:1], params["lnf"][1:2])


def init_params(key, n_layers, d_model, d_ff):
    keys = jax.random.split(key, 8)
    s = 0.1

    def nrm(k, shape, dtype=jnp.float32):
        return (jax.random.normal(k, shape) * s).astype(dtype)

    ones = jnp.ones((n_layers, 1, d_model), jnp.float32)
    zeros = jnp.zeros((n_layers, 1, d_model), jnp.float32)
    bo = nrm(keys[4], (n_layers, 1, d_model))
    b2 = nrm(keys[5], (n_layers, 1, d_model))
    return {
        # MXU weights stored in bf16 (f32 accumulation inside the kernel).
        "wqkv": nrm(keys[0], (n_layers, d_model, 3 * d_model), jnp.bfloat16),
        "wo":   nrm(keys[1], (n_layers, d_model, d_model), jnp.bfloat16),
        "w1":   nrm(keys[2], (n_layers, d_model, d_ff), jnp.bfloat16),
        "w2":   nrm(keys[3], (n_layers, d_ff, d_model), jnp.bfloat16),
        # Small f32 vectors (fused QKV bias, FFN bias 1).
        "bqkv": nrm(keys[6], (n_layers, 1, 3 * d_model)),
        "b1":   nrm(keys[7], (n_layers, 1, d_ff)),
        # Packed per-layer D-wide vectors: [ln1_a, ln1_b, ln2_a, ln2_b, bo, b2]
        # (LayerNorm init matches torch: a_2 = 1, b_2 = 0).
        "pvec": jnp.concatenate([ones, zeros, ones, zeros, bo, b2], axis=1),
        # Final LayerNorm [a_2; b_2].
        "lnf":  jnp.concatenate([jnp.ones((1, d_model), jnp.float32),
                                 jnp.zeros((1, d_model), jnp.float32)], axis=0),
    }


if __name__ == "__main__":
    B, S, D, H, F, N = 2, 8, 32, 4, 64, 2  # batch, seq, d_model, heads, d_ff, layers
    key = jax.random.PRNGKey(0)
    k_x, k_p = jax.random.split(key)

    x = jax.random.normal(k_x, (B, S, D), dtype=jnp.float32)
    lengths = jnp.array([S, 5])
    pos = jnp.arange(S)
    x_mask = (pos[None, :] < lengths[:, None]).astype(jnp.float32)[:, None, :]  # (B,1,S)

    params = init_params(k_p, N, D, F)

    out = jax.block_until_ready(encoder_forward(x, x_mask, params, H))
    ref = encoder_reference(x, x_mask, params, H)
    np.testing.assert_allclose(np.asarray(out), np.asarray(ref), rtol=5e-3, atol=5e-3)
    print("KERNEL_OK")
</pallas_src>

<mosaic_0001>
module attributes {stable_mosaic.version = 11 : i64} {
  func.func @_encoder_kernel(%arg0: i32, %arg1: memref<2x8x32xf32, #tpu.memory_space<vmem>>, %arg2: memref<2x1x8xf32, #tpu.memory_space<vmem>>, %arg3: memref<1x32x96xbf16, #tpu.memory_space<vmem>>, %arg4: memref<1x1x96xf32, #tpu.memory_space<vmem>>, %arg5: memref<1x32x32xbf16, #tpu.memory_space<vmem>>, %arg6: memref<1x32x64xbf16, #tpu.memory_space<vmem>>, %arg7: memref<1x1x64xf32, #tpu.memory_space<vmem>>, %arg8: memref<1x64x32xbf16, #tpu.memory_space<vmem>>, %arg9: memref<1x6x32xf32, #tpu.memory_space<vmem>>, %arg10: memref<2x32xf32, #tpu.memory_space<vmem>>, %arg11: memref<2x8x32xf32, #tpu.memory_space<vmem>>) attributes {dimension_semantics = [#tpu.dimension_semantics<arbitrary>], iteration_bounds = array<i64: 2>, scalar_prefetch = 0 : i64, scratch_operands = 0 : i64, tpu.core_type = #tpu.core_type<tc>, window_params = [{pipeline_mode = #tpu.pipeline_mode<synchronous>, transform_indices = @transform_0, window_bounds = array<i64: 2, 8, 32>}, {pipeline_mode = #tpu.pipeline_mode<synchronous>, transform_indices = @transform_1, window_bounds = array<i64: 2, 1, 8>}, {transform_indices = @transform_2, window_bounds = array<i64: 1, 32, 96>}, {transform_indices = @transform_3, window_bounds = array<i64: 1, 1, 96>}, {transform_indices = @transform_4, window_bounds = array<i64: 1, 32, 32>}, {transform_indices = @transform_5, window_bounds = array<i64: 1, 32, 64>}, {transform_indices = @transform_6, window_bounds = array<i64: 1, 1, 64>}, {transform_indices = @transform_7, window_bounds = array<i64: 1, 64, 32>}, {transform_indices = @transform_8, window_bounds = array<i64: 1, 6, 32>}, {pipeline_mode = #tpu.pipeline_mode<synchronous>, transform_indices = @transform_9, window_bounds = array<i64: 2, 32>}, {pipeline_mode = #tpu.pipeline_mode<synchronous>, transform_indices = @transform_10, window_bounds = array<i64: 2, 8, 32>}]} {
    %c0_i32 = arith.constant 0 : i32
    %0 = arith.cmpi eq, %arg0, %c0_i32 : i32
    %1 = arith.extui %0 : i1 to i32
    %c0_i32_0 = arith.constant 0 : i32
    %2 = arith.cmpi ne, %1, %c0_i32_0 : i32
    scf.if %2 {
      %c0_105 = arith.constant 0 : index
      %c0_106 = arith.constant 0 : index
      %c0_107 = arith.constant 0 : index
      %315 = vector.load %arg1[%c0_105, %c0_106, %c0_107] : memref<2x8x32xf32, #tpu.memory_space<vmem>>, vector<2x8x32xf32>
      %c0_108 = arith.constant 0 : index
      %c0_109 = arith.constant 0 : index
      %c0_110 = arith.constant 0 : index
      %316 = vector.load %arg11[%c0_108, %c0_109, %c0_110] : memref<2x8x32xf32, #tpu.memory_space<vmem>>, vector<2x8x32xf32>
      tpu.vector_store %arg11[%c0_108, %c0_109, %c0_110], %315 {strides = array<i32>} : memref<2x8x32xf32, #tpu.memory_space<vmem>>, vector<2x8x32xf32>,
    } else {
    }
    %c0 = arith.constant 0 : index
    %c0_1 = arith.constant 0 : index
    %c0_2 = arith.constant 0 : index
    %3 = vector.load %arg9[%c0, %c0_1, %c0_2] : memref<1x6x32xf32, #tpu.memory_space<vmem>>, vector<1x6x32xf32>
    %4 = vector.shape_cast %3 : vector<1x6x32xf32> to vector<6x32xf32>
    %5 = vector.extract_strided_slice %4 {offsets = [0, 0], sizes = [1, 32], strides = [1, 1]} : vector<6x32xf32> to vector<1x32xf32>
    %6 = vector.extract_strided_slice %4 {offsets = [1, 0], sizes = [1, 32], strides = [1, 1]} : vector<6x32xf32> to vector<1x32xf32>
    %7 = vector.extract_strided_slice %4 {offsets = [2, 0], sizes = [1, 32], strides = [1, 1]} : vector<6x32xf32> to vector<1x32xf32>
    %8 = vector.extract_strided_slice %4 {offsets = [3, 0], sizes = [1, 32], strides = [1, 1]} : vector<6x32xf32> to vector<1x32xf32>
    %9 = vector.extract_strided_slice %4 {offsets = [4, 0], sizes = [1, 32], strides = [1, 1]} : vector<6x32xf32> to vector<1x32xf32>
    %10 = vector.extract_strided_slice %4 {offsets = [5, 0], sizes = [1, 32], strides = [1, 1]} : vector<6x32xf32> to vector<1x32xf32>
    %c0_3 = arith.constant 0 : index
    %c0_4 = arith.constant 0 : index
    %c0_5 = arith.constant 0 : index
    %11 = vector.load %arg11[%c0_3, %c0_4, %c0_5] : memref<2x8x32xf32, #tpu.memory_space<vmem>>, vector<2x8x32xf32>
    %12 = vector.shape_cast %11 : vector<2x8x32xf32> to vector<16x32xf32>
    %c0_6 = arith.constant 0 : index
    %c0_7 = arith.constant 0 : index
    %c0_8 = arith.constant 0 : index
    %13 = vector.load %arg2[%c0_6, %c0_7, %c0_8] : memref<2x1x8xf32, #tpu.memory_space<vmem>>, vector<2x1x8xf32>
    %cst = arith.constant 0.000000e+00 : f32
    %14 = vector.broadcast %cst : f32 to vector<2x1x8xf32>
    %15 = arith.cmpf oeq, %13, %14 : vector<2x1x8xf32>
    %cst_9 = arith.constant -1.000000e+09 : f32
    %cst_10 = arith.constant 0.000000e+00 : f32
    %16 = vector.broadcast %cst_9 : f32 to vector<2x1x8xf32>
    %17 = vector.broadcast %cst_10 : f32 to vector<2x1x8xf32>
    %18 = arith.select %15, %16, %17 : vector<2x1x8xi1>, vector<2x1x8xf32>
    %cst_11 = arith.constant dense<0.000000e+00> : vector<16xf32>
    %19 = vector.multi_reduction <add>, %12, %cst_11 [1] : vector<16x32xf32> to vector<16xf32>
    %20 = vector.shape_cast %19 : vector<16xf32> to vector<16x1xf32>
    %cst_12 = arith.constant 3.200000e+01 : f32
    %21 = vector.broadcast %cst_12 : f32 to vector<16x1xf32>
    %22 = arith.divf %20, %21 : vector<16x1xf32>
    %23 = vector.broadcast %22 : vector<16x1xf32> to vector<16x32xf32>
    %24 = arith.subf %12, %23 : vector<16x32xf32>
    %25 = arith.mulf %24, %24 : vector<16x32xf32>
    %cst_13 = arith.constant dense<0.000000e+00> : vector<16xf32>
    %26 = vector.multi_reduction <add>, %25, %cst_13 [1] : vector<16x32xf32> to vector<16xf32>
    %27 = vector.shape_cast %26 : vector<16xf32> to vector<16x1xf32>
    %cst_14 = arith.constant 3.100000e+01 : f32
    %28 = vector.broadcast %cst_14 : f32 to vector<16x1xf32>
    %29 = arith.divf %27, %28 : vector<16x1xf32>
    %30 = math.sqrt %29 : vector<16x1xf32>
    %31 = vector.broadcast %22 : vector<16x1xf32> to vector<16x32xf32>
    %32 = arith.subf %12, %31 : vector<16x32xf32>
    %33 = vector.broadcast %5 : vector<1x32xf32> to vector<16x32xf32>
    %34 = arith.mulf %33, %32 : vector<16x32xf32>
    %cst_15 = arith.constant 9.99999997E-7 : f32
    %35 = vector.broadcast %cst_15 : f32 to vector<16x1xf32>
    %36 = arith.addf %30, %35 : vector<16x1xf32>
    %37 = vector.broadcast %36 : vector<16x1xf32> to vector<16x32xf32>
    %38 = arith.divf %34, %37 : vector<16x32xf32>
    %39 = vector.broadcast %6 : vector<1x32xf32> to vector<16x32xf32>
    %40 = arith.addf %38, %39 : vector<16x32xf32>
    %41 = arith.truncf %40 : vector<16x32xf32> to vector<16x32xbf16>
    %c0_16 = arith.constant 0 : index
    %c0_17 = arith.constant 0 : index
    %c0_18 = arith.constant 0 : index
    %42 = vector.load %arg3[%c0_16, %c0_17, %c0_18] : memref<1x32x96xbf16, #tpu.memory_space<vmem>>, vector<1x32x96xbf16>
    %43 = vector.shape_cast %42 : vector<1x32x96xbf16> to vector<32x96xbf16>
    %cst_19 = arith.constant dense<0.000000e+00> : vector<16x96xf32>
    %44 = tpu.matmul %41, %43, %cst_19 {dimension_numbers = #tpu.dot_dimension_numbers<[1], [0], [0], [1], [0, 0, 1, 1], [], []>} : vector<16x32xbf16>, vector<32x96xbf16>, vector<16x96xf32> -> vector<16x96xf32>
    %c0_20 = arith.constant 0 : index
    %c0_21 = arith.constant 0 : index
    %c0_22 = arith.constant 0 : index
    %45 = vector.load %arg4[%c0_20, %c0_21, %c0_22] : memref<1x1x96xf32, #tpu.memory_space<vmem>>, vector<1x1x96xf32>
    %46 = vector.shape_cast %45 : vector<1x1x96xf32> to vector<1x96xf32>
    %47 = vector.broadcast %46 : vector<1x96xf32> to vector<16x96xf32>
    %48 = arith.addf %44, %47 : vector<16x96xf32>
    %c0_23 = arith.constant 0 : index
    %c0_24 = arith.constant 0 : index
    %c0_25 = arith.constant 0 : index
    %49 = vector.load %arg5[%c0_23, %c0_24, %c0_25] : memref<1x32x32xbf16, #tpu.memory_space<vmem>>, vector<1x32x32xbf16>
    %50 = vector.shape_cast %49 : vector<1x32x32xbf16> to vector<32x32xbf16>
    %51 = vector.extract_strided_slice %48 {offsets = [0, 0], sizes = [8, 32], strides = [1, 1]} : vector<16x96xf32> to vector<8x32xf32>
    %52 = vector.extract_strided_slice %48 {offsets = [0, 32], sizes = [8, 32], strides = [1, 1]} : vector<16x96xf32> to vector<8x32xf32>
    %53 = vector.extract_strided_slice %48 {offsets = [0, 64], sizes = [8, 32], strides = [1, 1]} : vector<16x96xf32> to vector<8x32xf32>
    %54 = vector.extract_strided_slice %18 {offsets = [0, 0, 0], sizes = [1, 1, 8], strides = [1, 1, 1]} : vector<2x1x8xf32> to vector<1x1x8xf32>
    %55 = vector.shape_cast %54 : vector<1x1x8xf32> to vector<1x8xf32>
    %cst_26 = arith.constant 0.000000e+00 : f32
    %56 = vector.broadcast %cst_26 : f32 to vector<8x32xf32>
    %57 = vector.extract_strided_slice %51 {offsets = [0, 0], sizes = [8, 8], strides = [1, 1]} : vector<8x32xf32> to vector<8x8xf32>
    %58 = vector.extract_strided_slice %52 {offsets = [0, 0], sizes = [8, 8], strides = [1, 1]} : vector<8x32xf32> to vector<8x8xf32>
    %59 = vector.extract_strided_slice %53 {offsets = [0, 0], sizes = [8, 8], strides = [1, 1]} : vector<8x32xf32> to vector<8x8xf32>
    %60 = tpu.transpose %58, [1, 0] : vector<8x8xf32> -> vector<8x8xf32>
    %cst_27 = arith.constant dense<0.000000e+00> : vector<8x8xf32>
    %61 = tpu.matmul %57, %60, %cst_27 {dimension_numbers = #tpu.dot_dimension_numbers<[1], [0], [0], [1], [0, 0, 1, 1], [], []>} : vector<8x8xf32>, vector<8x8xf32>, vector<8x8xf32> -> vector<8x8xf32>
    %cst_28 = arith.constant 0.353553385 : f32
    %62 = vector.broadcast %cst_28 : f32 to vector<8x8xf32>
    %63 = arith.mulf %61, %62 : vector<8x8xf32>
    %64 = vector.broadcast %55 : vector<1x8xf32> to vector<8x8xf32>
    %65 = arith.addf %63, %64 : vector<8x8xf32>
    %cst_29 = arith.constant dense<0xFF800000> : vector<8xf32>
    %66 = vector.multi_reduction <maximumf>, %65, %cst_29 [1] : vector<8x8xf32> to vector<8xf32>
    %67 = vector.shape_cast %66 : vector<8xf32> to vector<8x1xf32>
    %68 = vector.broadcast %67 : vector<8x1xf32> to vector<8x8xf32>
    %69 = arith.subf %65, %68 : vector<8x8xf32>
    %70 = math.exp %69 : vector<8x8xf32>
    %cst_30 = arith.constant dense<0.000000e+00> : vector<8xf32>
    %71 = vector.multi_reduction <add>, %70, %cst_30 [1] : vector<8x8xf32> to vector<8xf32>
    %72 = vector.shape_cast %71 : vector<8xf32> to vector<8x1xf32>
    %73 = tpu.reciprocal %72 {approx = true} : vector<8x1xf32> -> vector<8x1xf32>
    %74 = vector.broadcast %73 : vector<8x1xf32> to vector<8x8xf32>
    %75 = arith.mulf %70, %74 : vector<8x8xf32>
    %cst_31 = arith.constant dense<0.000000e+00> : vector<8x8xf32>
    %76 = tpu.matmul %75, %59, %cst_31 {dimension_numbers = #tpu.dot_dimension_numbers<[1], [0], [0], [1], [0, 0, 1, 1], [], []>} : vector<8x8xf32>, vector<8x8xf32>, vector<8x8xf32> -> vector<8x8xf32>
    %77 = arith.truncf %76 : vector<8x8xf32> to vector<8x8xbf16>
    %78 = vector.extract_strided_slice %50 {offsets = [0, 0], sizes = [8, 32], strides = [1, 1]} : vector<32x32xbf16> to vector<8x32xbf16>
    %cst_32 = arith.constant dense<0.000000e+00> : vector<8x32xf32>
    %79 = tpu.matmul %77, %78, %cst_32 {dimension_numbers = #tpu.dot_dimension_numbers<[1], [0], [0], [1], [0, 0, 1, 1], [], []>} : vector<8x8xbf16>, vector<8x32xbf16>, vector<8x32xf32> -> vector<8x32xf32>
    %80 = arith.addf %56, %79 : vector<8x32xf32>
    %81 = vector.extract_strided_slice %51 {offsets = [0, 8], sizes = [8, 8], strides = [1, 1]} : vector<8x32xf32> to vector<8x8xf32>
    %82 = vector.extract_strided_slice %52 {offsets = [0, 8], sizes = [8, 8], strides = [1, 1]} : vector<8x32xf32> to vector<8x8xf32>
    %83 = vector.extract_strided_slice %53 {offsets = [0, 8], sizes = [8, 8], strides = [1, 1]} : vector<8x32xf32> to vector<8x8xf32>
    %84 = tpu.transpose %82, [1, 0] : vector<8x8xf32> -> vector<8x8xf32>
    %cst_33 = arith.constant dense<0.000000e+00> : vector<8x8xf32>
    %85 = tpu.matmul %81, %84, %cst_33 {dimension_numbers = #tpu.dot_dimension_numbers<[1], [0], [0], [1], [0, 0, 1, 1], [], []>} : vector<8x8xf32>, vector<8x8xf32>, vector<8x8xf32> -> vector<8x8xf32>
    %cst_34 = arith.constant 0.353553385 : f32
    %86 = vector.broadcast %cst_34 : f32 to vector<8x8xf32>
    %87 = arith.mulf %85, %86 : vector<8x8xf32>
    %88 = vector.broadcast %55 : vector<1x8xf32> to vector<8x8xf32>
    %89 = arith.addf %87, %88 : vector<8x8xf32>
    %cst_35 = arith.constant dense<0xFF800000> : vector<8xf32>
    %90 = vector.multi_reduction <maximumf>, %89, %cst_35 [1] : vector<8x8xf32> to vector<8xf32>
    %91 = vector.shape_cast %90 : vector<8xf32> to vector<8x1xf32>
    %92 = vector.broadcast %91 : vector<8x1xf32> to vector<8x8xf32>
    %93 = arith.subf %89, %92 : vector<8x8xf32>
    %94 = math.exp %93 : vector<8x8xf32>
    %cst_36 = arith.constant dense<0.000000e+00> : vector<8xf32>
    %95 = vector.multi_reduction <add>, %94, %cst_36 [1] : vector<8x8xf32> to vector<8xf32>
    %96 = vector.shape_cast %95 : vector<8xf32> to vector<8x1xf32>
    %97 = tpu.reciprocal %96 {approx = true} : vector<8x1xf32> -> vector<8x1xf32>
    %98 = vector.broadcast %97 : vector<8x1xf32> to vector<8x8xf32>
    %99 = arith.mulf %94, %98 : vector<8x8xf32>
    %cst_37 = arith.constant dense<0.000000e+00> : vector<8x8xf32>
    %100 = tpu.matmul %99, %83, %cst_37 {dimension_numbers = #tpu.dot_dimension_numbers<[1], [0], [0], [1], [0, 0, 1, 1], [], []>} : vector<8x8xf32>, vector<8x8xf32>, vector<8x8xf32> -> vector<8x8xf32>
    %101 = arith.truncf %100 : vector<8x8xf32> to vector<8x8xbf16>
    %102 = vector.extract_strided_slice %50 {offsets = [8, 0], sizes = [8, 32], strides = [1, 1]} : vector<32x32xbf16> to vector<8x32xbf16>
    %cst_38 = arith.constant dense<0.000000e+00> : vector<8x32xf32>
    %103 = tpu.matmul %101, %102, %cst_38 {dimension_numbers = #tpu.dot_dimension_numbers<[1], [0], [0], [1], [0, 0, 1, 1], [], []>} : vector<8x8xbf16>, vector<8x32xbf16>, vector<8x32xf32> -> vector<8x32xf32>
    %104 = arith.addf %80, %103 : vector<8x32xf32>
    %105 = vector.extract_strided_slice %51 {offsets = [0, 16], sizes = [8, 8], strides = [1, 1]} : vector<8x32xf32> to vector<8x8xf32>
    %106 = vector.extract_strided_slice %52 {offsets = [0, 16], sizes = [8, 8], strides = [1, 1]} : vector<8x32xf32> to vector<8x8xf32>
    %107 = vector.extract_strided_slice %53 {offsets = [0, 16], sizes = [8, 8], strides = [1, 1]} : vector<8x32xf32> to vector<8x8xf32>
    %108 = tpu.transpose %106, [1, 0] : vector<8x8xf32> -> vector<8x8xf32>
    %cst_39 = arith.constant dense<0.000000e+00> : vector<8x8xf32>
    %109 = tpu.matmul %105, %108, %cst_39 {dimension_numbers = #tpu.dot_dimension_numbers<[1], [0], [0], [1], [0, 0, 1, 1], [], []>} : vector<8x8xf32>, vector<8x8xf32>, vector<8x8xf32> -> vector<8x8xf32>
    %cst_40 = arith.constant 0.353553385 : f32
    %110 = vector.broadcast %cst_40 : f32 to vector<8x8xf32>
    %111 = arith.mulf %109, %110 : vector<8x8xf32>
    %112 = vector.broadcast %55 : vector<1x8xf32> to vector<8x8xf32>
    %113 = arith.addf %111, %112 : vector<8x8xf32>
    %cst_41 = arith.constant dense<0xFF800000> : vector<8xf32>
    %114 = vector.multi_reduction <maximumf>, %113, %cst_41 [1] : vector<8x8xf32> to vector<8xf32>
    %115 = vector.shape_cast %114 : vector<8xf32> to vector<8x1xf32>
    %116 = vector.broadcast %115 : vector<8x1xf32> to vector<8x8xf32>
    %117 = arith.subf %113, %116 : vector<8x8xf32>
    %118 = math.exp %117 : vector<8x8xf32>
    %cst_42 = arith.constant dense<0.000000e+00> : vector<8xf32>
    %119 = vector.multi_reduction <add>, %118, %cst_42 [1] : vector<8x8xf32> to vector<8xf32>
    %120 = vector.shape_cast %119 : vector<8xf32> to vector<8x1xf32>
    %121 = tpu.reciprocal %120 {approx = true} : vector<8x1xf32> -> vector<8x1xf32>
    %122 = vector.broadcast %121 : vector<8x1xf32> to vector<8x8xf32>
    %123 = arith.mulf %118, %122 : vector<8x8xf32>
    %cst_43 = arith.constant dense<0.000000e+00> : vector<8x8xf32>
    %124 = tpu.matmul %123, %107, %cst_43 {dimension_numbers = #tpu.dot_dimension_numbers<[1], [0], [0], [1], [0, 0, 1, 1], [], []>} : vector<8x8xf32>, vector<8x8xf32>, vector<8x8xf32> -> vector<8x8xf32>
    %125 = arith.truncf %124 : vector<8x8xf32> to vector<8x8xbf16>
    %126 = vector.extract_strided_slice %50 {offsets = [16, 0], sizes = [8, 32], strides = [1, 1]} : vector<32x32xbf16> to vector<8x32xbf16>
    %cst_44 = arith.constant dense<0.000000e+00> : vector<8x32xf32>
    %127 = tpu.matmul %125, %126, %cst_44 {dimension_numbers = #tpu.dot_dimension_numbers<[1], [0], [0], [1], [0, 0, 1, 1], [], []>} : vector<8x8xbf16>, vector<8x32xbf16>, vector<8x32xf32> -> vector<8x32xf32>
    %128 = arith.addf %104, %127 : vector<8x32xf32>
    %129 = vector.extract_strided_slice %51 {offsets = [0, 24], sizes = [8, 8], strides = [1, 1]} : vector<8x32xf32> to vector<8x8xf32>
    %130 = vector.extract_strided_slice %52 {offsets = [0, 24], sizes = [8, 8], strides = [1, 1]} : vector<8x32xf32> to vector<8x8xf32>
    %131 = vector.extract_strided_slice %53 {offsets = [0, 24], sizes = [8, 8], strides = [1, 1]} : vector<8x32xf32> to vector<8x8xf32>
    %132 = tpu.transpose %130, [1, 0] : vector<8x8xf32> -> vector<8x8xf32>
    %cst_45 = arith.constant dense<0.000000e+00> : vector<8x8xf32>
    %133 = tpu.matmul %129, %132, %cst_45 {dimension_numbers = #tpu.dot_dimension_numbers<[1], [0], [0], [1], [0, 0, 1, 1], [], []>} : vector<8x8xf32>, vector<8x8xf32>, vector<8x8xf32> -> vector<8x8xf32>
    %cst_46 = arith.constant 0.353553385 : f32
    %134 = vector.broadcast %cst_46 : f32 to vector<8x8xf32>
    %135 = arith.mulf %133, %134 : vector<8x8xf32>
    %136 = vector.broadcast %55 : vector<1x8xf32> to vector<8x8xf32>
    %137 = arith.addf %135, %136 : vector<8x8xf32>
    %cst_47 = arith.constant dense<0xFF800000> : vector<8xf32>
    %138 = vector.multi_reduction <maximumf>, %137, %cst_47 [1] : vector<8x8xf32> to vector<8xf32>
    %139 = vector.shape_cast %138 : vector<8xf32> to vector<8x1xf32>
    %140 = vector.broadcast %139 : vector<8x1xf32> to vector<8x8xf32>
    %141 = arith.subf %137, %140 : vector<8x8xf32>
    %142 = math.exp %141 : vector<8x8xf32>
    %cst_48 = arith.constant dense<0.000000e+00> : vector<8xf32>
    %143 = vector.multi_reduction <add>, %142, %cst_48 [1] : vector<8x8xf32> to vector<8xf32>
    %144 = vector.shape_cast %143 : vector<8xf32> to vector<8x1xf32>
    %145 = tpu.reciprocal %144 {approx = true} : vector<8x1xf32> -> vector<8x1xf32>
    %146 = vector.broadcast %145 : vector<8x1xf32> to vector<8x8xf32>
    %147 = arith.mulf %142, %146 : vector<8x8xf32>
    %cst_49 = arith.constant dense<0.000000e+00> : vector<8x8xf32>
    %148 = tpu.matmul %147, %131, %cst_49 {dimension_numbers = #tpu.dot_dimension_numbers<[1], [0], [0], [1], [0, 0, 1, 1], [], []>} : vector<8x8xf32>, vector<8x8xf32>, vector<8x8xf32> -> vector<8x8xf32>
    %149 = arith.truncf %148 : vector<8x8xf32> to vector<8x8xbf16>
    %150 = vector.extract_strided_slice %50 {offsets = [24, 0], sizes = [8, 32], strides = [1, 1]} : vector<32x32xbf16> to vector<8x32xbf16>
    %cst_50 = arith.constant dense<0.000000e+00> : vector<8x32xf32>
    %151 = tpu.matmul %149, %150, %cst_50 {dimension_numbers = #tpu.dot_dimension_numbers<[1], [0], [0], [1], [0, 0, 1, 1], [], []>} : vector<8x8xbf16>, vector<8x32xbf16>, vector<8x32xf32> -> vector<8x32xf32>
    %152 = arith.addf %128, %151 : vector<8x32xf32>
    %153 = vector.extract_strided_slice %12 {offsets = [0, 0], sizes = [8, 32], strides = [1, 1]} : vector<16x32xf32> to vector<8x32xf32>
    %154 = arith.addf %153, %152 : vector<8x32xf32>
    %155 = vector.broadcast %9 : vector<1x32xf32> to vector<8x32xf32>
    %156 = arith.addf %154, %155 : vector<8x32xf32>
    %c0_51 = arith.constant 0 : index
    %c0_52 = arith.constant 0 : index
    %c0_53 = arith.constant 0 : index
    %157 = vector.load %arg11[%c0_51, %c0_52, %c0_53] : memref<2x8x32xf32, #tpu.memory_space<vmem>>, vector<1x8x32xf32>
    %158 = vector.shape_cast %157 : vector<1x8x32xf32> to vector<8x32xf32>
    %159 = vector.shape_cast %156 : vector<8x32xf32> to vector<1x8x32xf32>
    tpu.vector_store %arg11[%c0_51, %c0_52, %c0_53], %159 {strides = array<i32>} : memref<2x8x32xf32, #tpu.memory_space<vmem>>, vector<1x8x32xf32>,
    %160 = vector.extract_strided_slice %48 {offsets = [8, 0], sizes = [8, 32], strides = [1, 1]} : vector<16x96xf32> to vector<8x32xf32>
    %161 = vector.extract_strided_slice %48 {offsets = [8, 32], sizes = [8, 32], strides = [1, 1]} : vector<16x96xf32> to vector<8x32xf32>
    %162 = vector.extract_strided_slice %48 {offsets = [8, 64], sizes = [8, 32], strides = [1, 1]} : vector<16x96xf32> to vector<8x32xf32>
    %163 = vector.extract_strided_slice %18 {offsets = [1, 0, 0], sizes = [1, 1, 8], strides = [1, 1, 1]} : vector<2x1x8xf32> to vector<1x1x8xf32>
    %164 = vector.shape_cast %163 : vector<1x1x8xf32> to vector<1x8xf32>
    %cst_54 = arith.constant 0.000000e+00 : f32
    %165 = vector.broadcast %cst_54 : f32 to vector<8x32xf32>
    %166 = vector.extract_strided_slice %160 {offsets = [0, 0], sizes = [8, 8], strides = [1, 1]} : vector<8x32xf32> to vector<8x8xf32>
    %167 = vector.extract_strided_slice %161 {offsets = [0, 0], sizes = [8, 8], strides = [1, 1]} : vector<8x32xf32> to vector<8x8xf32>
    %168 = vector.extract_strided_slice %162 {offsets = [0, 0], sizes = [8, 8], strides = [1, 1]} : vector<8x32xf32> to vector<8x8xf32>
    %169 = tpu.transpose %167, [1, 0] : vector<8x8xf32> -> vector<8x8xf32>
    %cst_55 = arith.constant dense<0.000000e+00> : vector<8x8xf32>
    %170 = tpu.matmul %166, %169, %cst_55 {dimension_numbers = #tpu.dot_dimension_numbers<[1], [0], [0], [1], [0, 0, 1, 1], [], []>} : vector<8x8xf32>, vector<8x8xf32>, vector<8x8xf32> -> vector<8x8xf32>
    %cst_56 = arith.constant 0.353553385 : f32
    %171 = vector.broadcast %cst_56 : f32 to vector<8x8xf32>
    %172 = arith.mulf %170, %171 : vector<8x8xf32>
    %173 = vector.broadcast %164 : vector<1x8xf32> to vector<8x8xf32>
    %174 = arith.addf %172, %173 : vector<8x8xf32>
    %cst_57 = arith.constant dense<0xFF800000> : vector<8xf32>
    %175 = vector.multi_reduction <maximumf>, %174, %cst_57 [1] : vector<8x8xf32> to vector<8xf32>
    %176 = vector.shape_cast %175 : vector<8xf32> to vector<8x1xf32>
    %177 = vector.broadcast %176 : vector<8x1xf32> to vector<8x8xf32>
    %178 = arith.subf %174, %177 : vector<8x8xf32>
    %179 = math.exp %178 : vector<8x8xf32>
    %cst_58 = arith.constant dense<0.000000e+00> : vector<8xf32>
    %180 = vector.multi_reduction <add>, %179, %cst_58 [1] : vector<8x8xf32> to vector<8xf32>
    %181 = vector.shape_cast %180 : vector<8xf32> to vector<8x1xf32>
    %182 = tpu.reciprocal %181 {approx = true} : vector<8x1xf32> -> vector<8x1xf32>
    %183 = vector.broadcast %182 : vector<8x1xf32> to vector<8x8xf32>
    %184 = arith.mulf %179, %183 : vector<8x8xf32>
    %cst_59 = arith.constant dense<0.000000e+00> : vector<8x8xf32>
    %185 = tpu.matmul %184, %168, %cst_59 {dimension_numbers = #tpu.dot_dimension_numbers<[1], [0], [0], [1], [0, 0, 1, 1], [], []>} : vector<8x8xf32>, vector<8x8xf32>, vector<8x8xf32> -> vector<8x8xf32>
    %186 = arith.truncf %185 : vector<8x8xf32> to vector<8x8xbf16>
    %187 = vector.extract_strided_slice %50 {offsets = [0, 0], sizes = [8, 32], strides = [1, 1]} : vector<32x32xbf16> to vector<8x32xbf16>
    %cst_60 = arith.constant dense<0.000000e+00> : vector<8x32xf32>
    %188 = tpu.matmul %186, %187, %cst_60 {dimension_numbers = #tpu.dot_dimension_numbers<[1], [0], [0], [1], [0, 0, 1, 1], [], []>} : vector<8x8xbf16>, vector<8x32xbf16>, vector<8x32xf32> -> vector<8x32xf32>
    %189 = arith.addf %165, %188 : vector<8x32xf32>
    %190 = vector.extract_strided_slice %160 {offsets = [0, 8], sizes = [8, 8], strides = [1, 1]} : vector<8x32xf32> to vector<8x8xf32>
    %191 = vector.extract_strided_slice %161 {offsets = [0, 8], sizes = [8, 8], strides = [1, 1]} : vector<8x32xf32> to vector<8x8xf32>
    %192 = vector.extract_strided_slice %162 {offsets = [0, 8], sizes = [8, 8], strides = [1, 1]} : vector<8x32xf32> to vector<8x8xf32>
    %193 = tpu.transpose %191, [1, 0] : vector<8x8xf32> -> vector<8x8xf32>
    %cst_61 = arith.constant dense<0.000000e+00> : vector<8x8xf32>
    %194 = tpu.matmul %190, %193, %cst_61 {dimension_numbers = #tpu.dot_dimension_numbers<[1], [0], [0], [1], [0, 0, 1, 1], [], []>} : vector<8x8xf32>, vector<8x8xf32>, vector<8x8xf32> -> vector<8x8xf32>
    %cst_62 = arith.constant 0.353553385 : f32
    %195 = vector.broadcast %cst_62 : f32 to vector<8x8xf32>
    %196 = arith.mulf %194, %195 : vector<8x8xf32>
    %197 = vector.broadcast %164 : vector<1x8xf32> to vector<8x8xf32>
    %198 = arith.addf %196, %197 : vector<8x8xf32>
    %cst_63 = arith.constant dense<0xFF800000> : vector<8xf32>
    %199 = vector.multi_reduction <maximumf>, %198, %cst_63 [1] : vector<8x8xf32> to vector<8xf32>
    %200 = vector.shape_cast %199 : vector<8xf32> to vector<8x1xf32>
    %201 = vector.broadcast %200 : vector<8x1xf32> to vector<8x8xf32>
    %202 = arith.subf %198, %201 : vector<8x8xf32>
    %203 = math.exp %202 : vector<8x8xf32>
    %cst_64 = arith.constant dense<0.000000e+00> : vector<8xf32>
    %204 = vector.multi_reduction <add>, %203, %cst_64 [1] : vector<8x8xf32> to vector<8xf32>
    %205 = vector.shape_cast %204 : vector<8xf32> to vector<8x1xf32>
    %206 = tpu.reciprocal %205 {approx = true} : vector<8x1xf32> -> vector<8x1xf32>
    %207 = vector.broadcast %206 : vector<8x1xf32> to vector<8x8xf32>
    %208 = arith.mulf %203, %207 : vector<8x8xf32>
    %cst_65 = arith.constant dense<0.000000e+00> : vector<8x8xf32>
    %209 = tpu.matmul %208, %192, %cst_65 {dimension_numbers = #tpu.dot_dimension_numbers<[1], [0], [0], [1], [0, 0, 1, 1], [], []>} : vector<8x8xf32>, vector<8x8xf32>, vector<8x8xf32> -> vector<8x8xf32>
    %210 = arith.truncf %209 : vector<8x8xf32> to vector<8x8xbf16>
    %211 = vector.extract_strided_slice %50 {offsets = [8, 0], sizes = [8, 32], strides = [1, 1]} : vector<32x32xbf16> to vector<8x32xbf16>
    %cst_66 = arith.constant dense<0.000000e+00> : vector<8x32xf32>
    %212 = tpu.matmul %210, %211, %cst_66 {dimension_numbers = #tpu.dot_dimension_numbers<[1], [0], [0], [1], [0, 0, 1, 1], [], []>} : vector<8x8xbf16>, vector<8x32xbf16>, vector<8x32xf32> -> vector<8x32xf32>
    %213 = arith.addf %189, %212 : vector<8x32xf32>
    %214 = vector.extract_strided_slice %160 {offsets = [0, 16], sizes = [8, 8], strides = [1, 1]} : vector<8x32xf32> to vector<8x8xf32>
    %215 = vector.extract_strided_slice %161 {offsets = [0, 16], sizes = [8, 8], strides = [1, 1]} : vector<8x32xf32> to vector<8x8xf32>
    %216 = vector.extract_strided_slice %162 {offsets = [0, 16], sizes = [8, 8], strides = [1, 1]} : vector<8x32xf32> to vector<8x8xf32>
    %217 = tpu.transpose %215, [1, 0] : vector<8x8xf32> -> vector<8x8xf32>
    %cst_67 = arith.constant dense<0.000000e+00> : vector<8x8xf32>
    %218 = tpu.matmul %214, %217, %cst_67 {dimension_numbers = #tpu.dot_dimension_numbers<[1], [0], [0], [1], [0, 0, 1, 1], [], []>} : vector<8x8xf32>, vector<8x8xf32>, vector<8x8xf32> -> vector<8x8xf32>
    %cst_68 = arith.constant 0.353553385 : f32
    %219 = vector.broadcast %cst_68 : f32 to vector<8x8xf32>
    %220 = arith.mulf %218, %219 : vector<8x8xf32>
    %221 = vector.broadcast %164 : vector<1x8xf32> to vector<8x8xf32>
    %222 = arith.addf %220, %221 : vector<8x8xf32>
    %cst_69 = arith.constant dense<0xFF800000> : vector<8xf32>
    %223 = vector.multi_reduction <maximumf>, %222, %cst_69 [1] : vector<8x8xf32> to vector<8xf32>
    %224 = vector.shape_cast %223 : vector<8xf32> to vector<8x1xf32>
    %225 = vector.broadcast %224 : vector<8x1xf32> to vector<8x8xf32>
    %226 = arith.subf %222, %225 : vector<8x8xf32>
    %227 = math.exp %226 : vector<8x8xf32>
    %cst_70 = arith.constant dense<0.000000e+00> : vector<8xf32>
    %228 = vector.multi_reduction <add>, %227, %cst_70 [1] : vector<8x8xf32> to vector<8xf32>
    %229 = vector.shape_cast %228 : vector<8xf32> to vector<8x1xf32>
    %230 = tpu.reciprocal %229 {approx = true} : vector<8x1xf32> -> vector<8x1xf32>
    %231 = vector.broadcast %230 : vector<8x1xf32> to vector<8x8xf32>
    %232 = arith.mulf %227, %231 : vector<8x8xf32>
    %cst_71 = arith.constant dense<0.000000e+00> : vector<8x8xf32>
    %233 = tpu.matmul %232, %216, %cst_71 {dimension_numbers = #tpu.dot_dimension_numbers<[1], [0], [0], [1], [0, 0, 1, 1], [], []>} : vector<8x8xf32>, vector<8x8xf32>, vector<8x8xf32> -> vector<8x8xf32>
    %234 = arith.truncf %233 : vector<8x8xf32> to vector<8x8xbf16>
    %235 = vector.extract_strided_slice %50 {offsets = [16, 0], sizes = [8, 32], strides = [1, 1]} : vector<32x32xbf16> to vector<8x32xbf16>
    %cst_72 = arith.constant dense<0.000000e+00> : vector<8x32xf32>
    %236 = tpu.matmul %234, %235, %cst_72 {dimension_numbers = #tpu.dot_dimension_numbers<[1], [0], [0], [1], [0, 0, 1, 1], [], []>} : vector<8x8xbf16>, vector<8x32xbf16>, vector<8x32xf32> -> vector<8x32xf32>
    %237 = arith.addf %213, %236 : vector<8x32xf32>
    %238 = vector.extract_strided_slice %160 {offsets = [0, 24], sizes = [8, 8], strides = [1, 1]} : vector<8x32xf32> to vector<8x8xf32>
    %239 = vector.extract_strided_slice %161 {offsets = [0, 24], sizes = [8, 8], strides = [1, 1]} : vector<8x32xf32> to vector<8x8xf32>
    %240 = vector.extract_strided_slice %162 {offsets = [0, 24], sizes = [8, 8], strides = [1, 1]} : vector<8x32xf32> to vector<8x8xf32>
    %241 = tpu.transpose %239, [1, 0] : vector<8x8xf32> -> vector<8x8xf32>
    %cst_73 = arith.constant dense<0.000000e+00> : vector<8x8xf32>
    %242 = tpu.matmul %238, %241, %cst_73 {dimension_numbers = #tpu.dot_dimension_numbers<[1], [0], [0], [1], [0, 0, 1, 1], [], []>} : vector<8x8xf32>, vector<8x8xf32>, vector<8x8xf32> -> vector<8x8xf32>
    %cst_74 = arith.constant 0.353553385 : f32
    %243 = vector.broadcast %cst_74 : f32 to vector<8x8xf32>
    %244 = arith.mulf %242, %243 : vector<8x8xf32>
    %245 = vector.broadcast %164 : vector<1x8xf32> to vector<8x8xf32>
    %246 = arith.addf %244, %245 : vector<8x8xf32>
    %cst_75 = arith.constant dense<0xFF800000> : vector<8xf32>
    %247 = vector.multi_reduction <maximumf>, %246, %cst_75 [1] : vector<8x8xf32> to vector<8xf32>
    %248 = vector.shape_cast %247 : vector<8xf32> to vector<8x1xf32>
    %249 = vector.broadcast %248 : vector<8x1xf32> to vector<8x8xf32>
    %250 = arith.subf %246, %249 : vector<8x8xf32>
    %251 = math.exp %250 : vector<8x8xf32>
    %cst_76 = arith.constant dense<0.000000e+00> : vector<8xf32>
    %252 = vector.multi_reduction <add>, %251, %cst_76 [1] : vector<8x8xf32> to vector<8xf32>
    %253 = vector.shape_cast %252 : vector<8xf32> to vector<8x1xf32>
    %254 = tpu.reciprocal %253 {approx = true} : vector<8x1xf32> -> vector<8x1xf32>
    %255 = vector.broadcast %254 : vector<8x1xf32> to vector<8x8xf32>
    %256 = arith.mulf %251, %255 : vector<8x8xf32>
    %cst_77 = arith.constant dense<0.000000e+00> : vector<8x8xf32>
    %257 = tpu.matmul %256, %240, %cst_77 {dimension_numbers = #tpu.dot_dimension_numbers<[1], [0], [0], [1], [0, 0, 1, 1], [], []>} : vector<8x8xf32>, vector<8x8xf32>, vector<8x8xf32> -> vector<8x8xf32>
    %258 = arith.truncf %257 : vector<8x8xf32> to vector<8x8xbf16>
    %259 = vector.extract_strided_slice %50 {offsets = [24, 0], sizes = [8, 32], strides = [1, 1]} : vector<32x32xbf16> to vector<8x32xbf16>
    %cst_78 = arith.constant dense<0.000000e+00> : vector<8x32xf32>
    %260 = tpu.matmul %258, %259, %cst_78 {dimension_numbers = #tpu.dot_dimension_numbers<[1], [0], [0], [1], [0, 0, 1, 1], [], []>} : vector<8x8xbf16>, vector<8x32xbf16>, vector<8x32xf32> -> vector<8x32xf32>
    %261 = arith.addf %237, %260 : vector<8x32xf32>
    %262 = vector.extract_strided_slice %12 {offsets = [8, 0], sizes = [8, 32], strides = [1, 1]} : vector<16x32xf32> to vector<8x32xf32>
    %263 = arith.addf %262, %261 : vector<8x32xf32>
    %264 = vector.broadcast %9 : vector<1x32xf32> to vector<8x32xf32>
    %265 = arith.addf %263, %264 : vector<8x32xf32>
    %c1 = arith.constant 1 : index
    %c0_79 = arith.constant 0 : index
    %c0_80 = arith.constant 0 : index
    %266 = vector.load %arg11[%c1, %c0_79, %c0_80] : memref<2x8x32xf32, #tpu.memory_space<vmem>>, vector<1x8x32xf32>
    %267 = vector.shape_cast %266 : vector<1x8x32xf32> to vector<8x32xf32>
    %268 = vector.shape_cast %265 : vector<8x32xf32> to vector<1x8x32xf32>
    tpu.vector_store %arg11[%c1, %c0_79, %c0_80], %268 {strides = array<i32>} : memref<2x8x32xf32, #tpu.memory_space<vmem>>, vector<1x8x32xf32>,
    %c0_81 = arith.constant 0 : index
    %c0_82 = arith.constant 0 : index
    %c0_83 = arith.constant 0 : index
    %269 = vector.load %arg11[%c0_81, %c0_82, %c0_83] : memref<2x8x32xf32, #tpu.memory_space<vmem>>, vector<2x8x32xf32>
    %270 = vector.shape_cast %269 : vector<2x8x32xf32> to vector<16x32xf32>
    %cst_84 = arith.constant dense<0.000000e+00> : vector<16xf32>
    %271 = vector.multi_reduction <add>, %270, %cst_84 [1] : vector<16x32xf32> to vector<16xf32>
    %272 = vector.shape_cast %271 : vector<16xf32> to vector<16x1xf32>
    %cst_85 = arith.constant 3.200000e+01 : f32
    %273 = vector.broadcast %cst_85 : f32 to vector<16x1xf32>
    %274 = arith.divf %272, %273 : vector<16x1xf32>
    %275 = vector.broadcast %274 : vector<16x1xf32> to vector<16x32xf32>
    %276 = arith.subf %270, %275 : vector<16x32xf32>
    %277 = arith.mulf %276, %276 : vector<16x32xf32>
    %cst_86 = arith.constant dense<0.000000e+00> : vector<16xf32>
    %278 = vector.multi_reduction <add>, %277, %cst_86 [1] : vector<16x32xf32> to vector<16xf32>
    %279 = vector.shape_cast %278 : vector<16xf32> to vector<16x1xf32>
    %cst_87 = arith.constant 3.100000e+01 : f32
    %280 = vector.broadcast %cst_87 : f32 to vector<16x1xf32>
    %281 = arith.divf %279, %280 : vector<16x1xf32>
    %282 = math.sqrt %281 : vector<16x1xf32>
    %283 = vector.broadcast %274 : vector<16x1xf32> to vector<16x32xf32>
    %284 = arith.subf %270, %283 : vector<16x32xf32>
    %285 = vector.broadcast %7 : vector<1x32xf32> to vector<16x32xf32>
    %286 = arith.mulf %285, %284 : vector<16x32xf32>
    %cst_88 = arith.constant 9.99999997E-7 : f32
    %287 = vector.broadcast %cst_88 : f32 to vector<16x1xf32>
    %288 = arith.addf %282, %287 : vector<16x1xf32>
    %289 = vector.broadcast %288 : vector<16x1xf32> to vector<16x32xf32>
    %290 = arith.divf %286, %289 : vector<16x32xf32>
    %291 = vector.broadcast %8 : vector<1x32xf32> to vector<16x32xf32>
    %292 = arith.addf %290, %291 : vector<16x32xf32>
    %293 = arith.truncf %292 : vector<16x32xf32> to vector<16x32xbf16>
    %c0_89 = arith.constant 0 : index
    %c0_90 = arith.constant 0 : index
    %c0_91 = arith.constant 0 : index
    %294 = vector.load %arg6[%c0_89, %c0_90, %c0_91] : memref<1x32x64xbf16, #tpu.memory_space<vmem>>, vector<1x32x64xbf16>
    %295 = vector.shape_cast %294 : vector<1x32x64xbf16> to vector<32x64xbf16>
    %cst_92 = arith.constant dense<0.000000e+00> : vector<16x64xf32>
    %296 = tpu.matmul %293, %295, %cst_92 {dimension_numbers = #tpu.dot_dimension_numbers<[1], [0], [0], [1], [0, 0, 1, 1], [], []>} : vector<16x32xbf16>, vector<32x64xbf16>, vector<16x64xf32> -> vector<16x64xf32>
    %c0_93 = arith.constant 0 : index
    %c0_94 = arith.constant 0 : index
    %c0_95 = arith.constant 0 : index
    %297 = vector.load %arg7[%c0_93, %c0_94, %c0_95] : memref<1x1x64xf32, #tpu.memory_space<vmem>>, vector<1x1x64xf32>
    %298 = vector.shape_cast %297 : vector<1x1x64xf32> to vector<1x64xf32>
    %299 = vector.broadcast %298 : vector<1x64xf32> to vector<16x64xf32>
    %300 = arith.addf %296, %299 : vector<16x64xf32>
    %cst_96 = arith.constant 0.000000e+00 : f32
    %301 = vector.broadcast %cst_96 : f32 to vector<16x64xf32>
    %302 = arith.maximumf %300, %301 : vector<16x64xf32>
    %303 = arith.truncf %302 : vector<16x64xf32> to vector<16x64xbf16>
    %c0_97 = arith.constant 0 : index
    %c0_98 = arith.constant 0 : index
    %c0_99 = arith.constant 0 : index
    %304 = vector.load %arg8[%c0_97, %c0_98, %c0_99] : memref<1x64x32xbf16, #tpu.memory_space<vmem>>, vector<1x64x32xbf16>
    %305 = vector.shape_cast %304 : vector<1x64x32xbf16> to vector<64x32xbf16>
    %cst_100 = arith.constant dense<0.000000e+00> : vector<16x32xf32>
    %306 = tpu.matmul %303, %305, %cst_100 {dimension_numbers = #tpu.dot_dimension_numbers<[1], [0], [0], [1], [0, 0, 1, 1], [], []>} : vector<16x64xbf16>, vector<64x32xbf16>, vector<16x32xf32> -> vector<16x32xf32>
    %307 = vector.broadcast %10 : vector<1x32xf32> to vector<16x32xf32>
    %308 = arith.addf %306, %307 : vector<16x32xf32>
    %309 = arith.addf %270, %308 : vector<16x32xf32>
    %310 = vector.shape_cast %309 : vector<16x32xf32> to vector<2x8x32xf32>
    %c0_101 = arith.constant 0 : index
    %c0_102 = arith.constant 0 : index
    %c0_103 = arith.constant 0 : index
    %311 = vector.load %arg11[%c0_101, %c0_102, %c0_103] : memref<2x8x32xf32, #tpu.memory_space<vmem>>, vector<2x8x32xf32>
    tpu.vector_store %arg11[%c0_101, %c0_102, %c0_103], %310 {strides = array<i32>} : memref<2x8x32xf32, #tpu.memory_space<vmem>>, vector<2x8x32xf32>,
    %c1_i32 = arith.constant 1 : i32
    %312 = arith.cmpi eq, %arg0, %c1_i32 : i32
    %313 = arith.extui %312 : i1 to i32
    %c0_i32_104 = arith.constant 0 : i32
    %314 = arith.cmpi ne, %313, %c0_i32_104 : i32
    scf.if %314 {
      %c0_105 = arith.constant 0 : index
      %c0_106 = arith.constant 0 : index
      %315 = vector.load %arg10[%c0_105, %c0_106] : memref<2x32xf32, #tpu.memory_space<vmem>>, vector<2x32xf32>
      %c0_107 = arith.constant 0 : index
      %c0_108 = arith.constant 0 : index
      %c0_109 = arith.constant 0 : index
      %316 = vector.load %arg11[%c0_107, %c0_108, %c0_109] : memref<2x8x32xf32, #tpu.memory_space<vmem>>, vector<2x8x32xf32>
      %317 = vector.shape_cast %316 : vector<2x8x32xf32> to vector<16x32xf32>
      %318 = vector.extract_strided_slice %315 {offsets = [0, 0], sizes = [1, 32], strides = [1, 1]} : vector<2x32xf32> to vector<1x32xf32>
      %319 = vector.extract_strided_slice %315 {offsets = [1, 0], sizes = [1, 32], strides = [1, 1]} : vector<2x32xf32> to vector<1x32xf32>
      %cst_110 = arith.constant dense<0.000000e+00> : vector<16xf32>
      %320 = vector.multi_reduction <add>, %317, %cst_110 [1] : vector<16x32xf32> to vector<16xf32>
      %321 = vector.shape_cast %320 : vector<16xf32> to vector<16x1xf32>
      %cst_111 = arith.constant 3.200000e+01 : f32
      %322 = vector.broadcast %cst_111 : f32 to vector<16x1xf32>
      %323 = arith.divf %321, %322 : vector<16x1xf32>
      %324 = vector.broadcast %323 : vector<16x1xf32> to vector<16x32xf32>
      %325 = arith.subf %317, %324 : vector<16x32xf32>
      %326 = arith.mulf %325, %325 : vector<16x32xf32>
      %cst_112 = arith.constant dense<0.000000e+00> : vector<16xf32>
      %327 = vector.multi_reduction <add>, %326, %cst_112 [1] : vector<16x32xf32> to vector<16xf32>
      %328 = vector.shape_cast %327 : vector<16xf32> to vector<16x1xf32>
      %cst_113 = arith.constant 3.100000e+01 : f32
      %329 = vector.broadcast %cst_113 : f32 to vector<16x1xf32>
      %330 = arith.divf %328, %329 : vector<16x1xf32>
      %331 = math.sqrt %330 : vector<16x1xf32>
      %332 = vector.broadcast %323 : vector<16x1xf32> to vector<16x32xf32>
      %333 = arith.subf %317, %332 : vector<16x32xf32>
      %334 = vector.broadcast %318 : vector<1x32xf32> to vector<16x32xf32>
      %335 = arith.mulf %334, %333 : vector<16x32xf32>
      %cst_114 = arith.constant 9.99999997E-7 : f32
      %336 = vector.broadcast %cst_114 : f32 to vector<16x1xf32>
      %337 = arith.addf %331, %336 : vector<16x1xf32>
      %338 = vector.broadcast %337 : vector<16x1xf32> to vector<16x32xf32>
      %339 = arith.divf %335, %338 : vector<16x32xf32>
      %340 = vector.broadcast %319 : vector<1x32xf32> to vector<16x32xf32>
      %341 = arith.addf %339, %340 : vector<16x32xf32>
      %342 = vector.shape_cast %341 : vector<16x32xf32> to vector<2x8x32xf32>
      %c0_115 = arith.constant 0 : index
      %c0_116 = arith.constant 0 : index
      %c0_117 = arith.constant 0 : index
      %343 = vector.load %arg11[%c0_115, %c0_116, %c0_117] : memref<2x8x32xf32, #tpu.memory_space<vmem>>, vector<2x8x32xf32>
      tpu.vector_store %arg11[%c0_115, %c0_116, %c0_117], %342 {strides = array<i32>} : memref<2x8x32xf32, #tpu.memory_space<vmem>>, vector<2x8x32xf32>,
    } else {
    }
    return
  }
  func.func @transform_0(%arg0: i32) -> (i32, i32, i32) {
    %c0_i32 = arith.constant 0 : i32
    %c0_i32_0 = arith.constant 0 : i32
    %c0_i32_1 = arith.constant 0 : i32
    %c0_i32_2 = arith.constant 0 : i32
    return %c0_i32, %c0_i32_0, %c0_i32_1 : i32, i32, i32
  }
  func.func @transform_1(%arg0: i32) -> (i32, i32, i32) {
    %c0_i32 = arith.constant 0 : i32
    %c0_i32_0 = arith.constant 0 : i32
    %c0_i32_1 = arith.constant 0 : i32
    %c0_i32_2 = arith.constant 0 : i32
    return %c0_i32, %c0_i32_0, %c0_i32_1 : i32, i32, i32
  }
  func.func @transform_2(%arg0: i32) -> (i32, i32, i32) {
    %c0_i32 = arith.constant 0 : i32
    %c0_i32_0 = arith.constant 0 : i32
    %c0_i32_1 = arith.constant 0 : i32
    return %arg0, %c0_i32, %c0_i32_0 : i32, i32, i32
  }
  func.func @transform_3(%arg0: i32) -> (i32, i32, i32) {
    %c0_i32 = arith.constant 0 : i32
    %c0_i32_0 = arith.constant 0 : i32
    %c0_i32_1 = arith.constant 0 : i32
    return %arg0, %c0_i32, %c0_i32_0 : i32, i32, i32
  }
  func.func @transform_4(%arg0: i32) -> (i32, i32, i32) {
    %c0_i32 = arith.constant 0 : i32
    %c0_i32_0 = arith.constant 0 : i32
    %c0_i32_1 = arith.constant 0 : i32
    return %arg0, %c0_i32, %c0_i32_0 : i32, i32, i32
  }
  func.func @transform_5(%arg0: i32) -> (i32, i32, i32) {
    %c0_i32 = arith.constant 0 : i32
    %c0_i32_0 = arith.constant 0 : i32
    %c0_i32_1 = arith.constant 0 : i32
    return %arg0, %c0_i32, %c0_i32_0 : i32, i32, i32
  }
  func.func @transform_6(%arg0: i32) -> (i32, i32, i32) {
    %c0_i32 = arith.constant 0 : i32
    %c0_i32_0 = arith.constant 0 : i32
    %c0_i32_1 = arith.constant 0 : i32
    return %arg0, %c0_i32, %c0_i32_0 : i32, i32, i32
  }
  func.func @transform_7(%arg0: i32) -> (i32, i32, i32) {
    %c0_i32 = arith.constant 0 : i32
    %c0_i32_0 = arith.constant 0 : i32
    %c0_i32_1 = arith.constant 0 : i32
    return %arg0, %c0_i32, %c0_i32_0 : i32, i32, i32
  }
  func.func @transform_8(%arg0: i32) -> (i32, i32, i32) {
    %c0_i32 = arith.constant 0 : i32
    %c0_i32_0 = arith.constant 0 : i32
    %c0_i32_1 = arith.constant 0 : i32
    return %arg0, %c0_i32, %c0_i32_0 : i32, i32, i32
  }
  func.func @transform_9(%arg0: i32) -> (i32, i32) {
    %c0_i32 = arith.constant 0 : i32
    %c0_i32_0 = arith.constant 0 : i32
    %c0_i32_1 = arith.constant 0 : i32
    return %c0_i32, %c0_i32_0 : i32, i32
  }
  func.func @transform_10(%arg0: i32) -> (i32, i32, i32) {
    %c0_i32 = arith.constant 0 : i32
    %c0_i32_0 = arith.constant 0 : i32
    %c0_i32_1 = arith.constant 0 : i32
    %c0_i32_2 = arith.constant 0 : i32
    return %c0_i32, %c0_i32_0, %c0_i32_1 : i32, i32, i32
  }
}

</mosaic_0001>

<llo_original>
// kernel: tpu_custom_call.1
$region0: #{tpu_custom_call.1}
  #allocation0 [shape = 'u32[]', space=smem, size = 0x4, offset = 0x4, fixed_abs, tag = 'smem constant byte address 0x4 - core index']
  #allocation1 [shape = 'u32[144,128]{1,0:T(1,128)}', space=vmem, size = 0x12000, scoped, tag = 'internal scratch']
  %s0 = inlined_call_operand.hbm [shape: f32[2,8,32], index: 0, kind: input, shape index: {}]
  %s1 = inlined_call_operand.vmem [shape: f32[2,1,8], index: 1, kind: input, shape index: {}]
  %s2 = inlined_call_operand.vmem [shape: bf16[2,32,96], index: 2, kind: input, shape index: {}]
  %s3 = inlined_call_operand.vmem [shape: f32[2,1,96], index: 3, kind: input, shape index: {}]
  %s4 = inlined_call_operand.vmem [shape: bf16[2,32,32], index: 4, kind: input, shape index: {}]
  %s5 = inlined_call_operand.vmem [shape: bf16[2,32,64], index: 5, kind: input, shape index: {}]
  %s6 = inlined_call_operand.vmem [shape: f32[2,1,64], index: 6, kind: input, shape index: {}]
  %s7 = inlined_call_operand.vmem [shape: bf16[2,64,32], index: 7, kind: input, shape index: {}]
  %s8 = inlined_call_operand.vmem [shape: f32[2,6,32], index: 8, kind: input, shape index: {}]
  %s9 = inlined_call_operand.vmem [shape: f32[2,32], index: 9, kind: input, shape index: {}]
  %s10 = inlined_call_operand.hbm [shape: f32[2,8,32], index: 10, kind: output, shape index: {}]
  %s11 = sld [smem:[#allocation0]]
  $region85: #{tpu_custom_call.1} parent=0
    _
  %s13 = ssub.s32 1, %s11
  %s14 = scalar_select 0, %s13, %s11
  $region1: #{tpu_custom_call.1} parent=0
    #allocation2 [shape = 'u8[8192]{0}', space=vmem, size = 0x2000, scoped, tag = 'input window, operand 0, single buffered']
    #allocation3 [shape = 's32[2]{0}', space=sflag, size = 0x8, scoped, tag = 'scoped memory for tpu_custom_call.1']
    #allocation4 [shape = 's32[2]{0}', space=sflag, size = 0x8, scoped, tag = 'scoped memory for tpu_custom_call.1']
    #allocation5 [shape = 'u8[8192]{0}', space=vmem, size = 0x2000, scoped, tag = 'output window, operand 0, single buffered']
    %15 = vsyncpa [#allocation3], 0
    %16 = vsyncpa [#allocation4], 0
    loop: start=0, step=1, limit=4
    $region2: #{tpu_custom_call.1} parent=1 // loop_pre_header
      _
    $region3: #{tpu_custom_call.1} parent=1 // loop_header
      %s18 = sphi 0, %s22
      %p19 = scmp.ge.s32.totalorder %s18, 4
      %s26 = sphi 0, %s26
      %s28 = sphi 0, %s26
      %s29 = sphi 0, %s28
      %s43 = sphi 0, %s29
      %s47 = sphi 0, %s47
      %s49 = sphi 0, %s47
      %s50 = sphi 0, %s49
      %s64 = sphi 0, %s50
      %s70 = sphi 0, %s72
      %s73 = sphi 0, %s70
      %s74 = sphi 0, %s73
      %s90 = sphi 0, %s74
      %s96 = sphi 0, %s98
      %s99 = sphi 0, %s96
      %s100 = sphi 0, %s99
      %s116 = sphi 0, %s100
      %s122 = sphi 0, %s124
      %s125 = sphi 0, %s122
      %s126 = sphi 0, %s125
      %s142 = sphi 0, %s126
      %s148 = sphi 0, %s150
      %s151 = sphi 0, %s148
      %s152 = sphi 0, %s151
      %s168 = sphi 0, %s152
      %s174 = sphi 0, %s176
      %s177 = sphi 0, %s174
      %s178 = sphi 0, %s177
      %s194 = sphi 0, %s178
      %s200 = sphi 0, %s202
      %s203 = sphi 0, %s200
      %s204 = sphi 0, %s203
      %s220 = sphi 0, %s204
      %s226 = sphi 0, %s228
      %s229 = sphi 0, %s226
      %s230 = sphi 0, %s229
      %s246 = sphi 0, %s230
      %s250 = sphi 0, %s250
      %s252 = sphi 0, %s250
      %s253 = sphi 0, %s252
      %s267 = sphi 0, %s253
      %s271 = sphi 0, %s271
      %s273 = sphi 0, %s271
      %s274 = sphi 0, %s273
      %s288 = sphi 0, %s274
    $region4: #{tpu_custom_call.1} parent=1 // loop_header_branch
      %21 = sbr.rel (%p19) target = $region8
    $region5: #{tpu_custom_call.1} parent=1 // loop_body
      %s23 = ssub.s32 %s18, 1
      %s24 = ssub.s32 %s18, 2
      %s25 = sadd.s32 %s18, 1
      %s27 = sadd.s32 %s26, 1
      %p30 = scmp.eq.s32.totalorder %s18, 1
      %p31 = scmp.ne.s32.totalorder %s26, %s28
      %p32 = scmp.eq.s32.totalorder %s18, 0
      %p33 = por %p31, %p32
      %p34 = scmp.ne.s32.totalorder %s26, %s28
      %p35 = scmp.eq.s32.totalorder %s23, 1
      %p36 = por %p34, %p35
      %p37 = scmp.ne.s32.totalorder %s28, %s29
      %p38 = scmp.eq.s32.totalorder %s23, 0
      %p39 = por %p37, %p38
      %p40 = scmp.ne.s32.totalorder %s28, %s29
      %p41 = scmp.eq.s32.totalorder %s24, 1
      %p42 = por %p40, %p41
      %p44 = scmp.ne.s32.totalorder %s29, %s43
      %p45 = scmp.eq.s32.totalorder %s24, 0
      %p46 = por %p44, %p45
      %s48 = sadd.s32 %s47, 1
      %p51 = scmp.eq.s32.totalorder %s18, 1
      %p52 = scmp.ne.s32.totalorder %s47, %s49
      %p53 = scmp.eq.s32.totalorder %s18, 0
      %p54 = por %p52, %p53
      %p55 = scmp.ne.s32.totalorder %s47, %s49
      %p56 = scmp.eq.s32.totalorder %s23, 1
      %p57 = por %p55, %p56
      %p58 = scmp.ne.s32.totalorder %s49, %s50
      %p59 = scmp.eq.s32.totalorder %s23, 0
      %p60 = por %p58, %p59
      %p61 = scmp.ne.s32.totalorder %s49, %s50
      %p62 = scmp.eq.s32.totalorder %s24, 1
      %p63 = por %p61, %p62
      %p65 = scmp.ne.s32.totalorder %s50, %s64
      %p66 = scmp.eq.s32.totalorder %s24, 0
      %p67 = por %p65, %p66
      %s68 = ssub.s32 %s18, %s25
      %p69 = scmp.eq.s32.totalorder %s68, 0
      %s71 = sadd.s32 %s70, 1
      %s72 = scalar_select %p69, %s70, %s71
      %p75 = pneg %p69
      %p76 = scmp.eq.s32.totalorder %s18, 1
      %p77 = por %p75, %p76
      %p78 = scmp.ne.s32.totalorder %s70, %s73
      %p79 = scmp.eq.s32.totalorder %s18, 0
      %p80 = por %p78, %p79
      %p81 = scmp.ne.s32.totalorder %s70, %s73
      %p82 = scmp.eq.s32.totalorder %s23, 1
      %p83 = por %p81, %p82
      %p84 = scmp.ne.s32.totalorder %s73, %s74
      %p85 = scmp.eq.s32.totalorder %s23, 0
      %p86 = por %p84, %p85
      %p87 = scmp.ne.s32.totalorder %s73, %s74
      %p88 = scmp.eq.s32.totalorder %s24, 1
      %p89 = por %p87, %p88
      %p91 = scmp.ne.s32.totalorder %s74, %s90
      %p92 = scmp.eq.s32.totalorder %s24, 0
      %p93 = por %p91, %p92
      %s94 = ssub.s32 %s18, %s25
      %p95 = scmp.eq.s32.totalorder %s94, 0
      %s97 = sadd.s32 %s96, 1
      %s98 = scalar_select %p95, %s96, %s97
      %p101 = pneg %p95
      %p102 = scmp.eq.s32.totalorder %s18, 1
      %p103 = por %p101, %p102
      %p104 = scmp.ne.s32.totalorder %s96, %s99
      %p105 = scmp.eq.s32.totalorder %s18, 0
      %p106 = por %p104, %p105
      %p107 = scmp.ne.s32.totalorder %s96, %s99
      %p108 = scmp.eq.s32.totalorder %s23, 1
      %p109 = por %p107, %p108
      %p110 = scmp.ne.s32.totalorder %s99, %s100
      %p111 = scmp.eq.s32.totalorder %s23, 0
      %p112 = por %p110, %p111
      %p113 = scmp.ne.s32.totalorder %s99, %s100
      %p114 = scmp.eq.s32.totalorder %s24, 1
      %p115 = por %p113, %p114
      %p117 = scmp.ne.s32.totalorder %s100, %s116
      %p118 = scmp.eq.s32.totalorder %s24, 0
      %p119 = por %p117, %p118
      %s120 = ssub.s32 %s18, %s25
      %p121 = scmp.eq.s32.totalorder %s120, 0
      %s123 = sadd.s32 %s122, 1
      %s124 = scalar_select %p121, %s122, %s123
      %p127 = pneg %p121
      %p128 = scmp.eq.s32.totalorder %s18, 1
      %p129 = por %p127, %p128
      %p130 = scmp.ne.s32.totalorder %s122, %s125
      %p131 = scmp.eq.s32.totalorder %s18, 0
      %p132 = por %p130, %p131
      %p133 = scmp.ne.s32.totalorder %s122, %s125
      %p134 = scmp.eq.s32.totalorder %s23, 1
      %p135 = por %p133, %p134
      %p136 = scmp.ne.s32.totalorder %s125, %s126
      %p137 = scmp.eq.s32.totalorder %s23, 0
      %p138 = por %p136, %p137
      %p139 = scmp.ne.s32.totalorder %s125, %s126
      %p140 = scmp.eq.s32.totalorder %s24, 1
      %p141 = por %p139, %p140
      %p143 = scmp.ne.s32.totalorder %s126, %s142
      %p144 = scmp.eq.s32.totalorder %s24, 0
      %p145 = por %p143, %p144
      %s146 = ssub.s32 %s18, %s25
      %p147 = scmp.eq.s32.totalorder %s146, 0
      %s149 = sadd.s32 %s148, 1
      %s150 = scalar_select %p147, %s148, %s149
      %p153 = pneg %p147
      %p154 = scmp.eq.s32.totalorder %s18, 1
      %p155 = por %p153, %p154
      %p156 = scmp.ne.s32.totalorder %s148, %s151
      %p157 = scmp.eq.s32.totalorder %s18, 0
      %p158 = por %p156, %p157
      %p159 = scmp.ne.s32.totalorder %s148, %s151
      %p160 = scmp.eq.s32.totalorder %s23, 1
      %p161 = por %p159, %p160
      %p162 = scmp.ne.s32.totalorder %s151, %s152
      %p163 = scmp.eq.s32.totalorder %s23, 0
      %p164 = por %p162, %p163
      %p165 = scmp.ne.s32.totalorder %s151, %s152
      %p166 = scmp.eq.s32.totalorder %s24, 1
      %p167 = por %p165, %p166
      %p169 = scmp.ne.s32.totalorder %s152, %s168
      %p170 = scmp.eq.s32.totalorder %s24, 0
      %p171 = por %p169, %p170
      %s172 = ssub.s32 %s18, %s25
      %p173 = scmp.eq.s32.totalorder %s172, 0
      %s175 = sadd.s32 %s174, 1
      %s176 = scalar_select %p173, %s174, %s175
      %p179 = pneg %p173
      %p180 = scmp.eq.s32.totalorder %s18, 1
      %p181 = por %p179, %p180
      %p182 = scmp.ne.s32.totalorder %s174, %s177
      %p183 = scmp.eq.s32.totalorder %s18, 0
      %p184 = por %p182, %p183
      %p185 = scmp.ne.s32.totalorder %s174, %s177
      %p186 = scmp.eq.s32.totalorder %s23, 1
      %p187 = por %p185, %p186
      %p188 = scmp.ne.s32.totalorder %s177, %s178
      %p189 = scmp.eq.s32.totalorder %s23, 0
      %p190 = por %p188, %p189
      %p191 = scmp.ne.s32.totalorder %s177, %s178
      %p192 = scmp.eq.s32.totalorder %s24, 1
      %p193 = por %p191, %p192
      %p195 = scmp.ne.s32.totalorder %s178, %s194
      %p196 = scmp.eq.s32.totalorder %s24, 0
      %p197 = por %p195, %p196
      %s198 = ssub.s32 %s18, %s25
      %p199 = scmp.eq.s32.totalorder %s198, 0
      %s201 = sadd.s32 %s200, 1
      %s202 = scalar_select %p199, %s200, %s201
      %p205 = pneg %p199
      %p206 = scmp.eq.s32.totalorder %s18, 1
      %p207 = por %p205, %p206
      %p208 = scmp.ne.s32.totalorder %s200, %s203
      %p209 = scmp.eq.s32.totalorder %s18, 0
      %p210 = por %p208, %p209
      %p211 = scmp.ne.s32.totalorder %s200, %s203
      %p212 = scmp.eq.s32.totalorder %s23, 1
      %p213 = por %p211, %p212
      %p214 = scmp.ne.s32.totalorder %s203, %s204
      %p215 = scmp.eq.s32.totalorder %s23, 0
      %p216 = por %p214, %p215
      %p217 = scmp.ne.s32.totalorder %s203, %s204
      %p218 = scmp.eq.s32.totalorder %s24, 1
      %p219 = por %p217, %p218
      %p221 = scmp.ne.s32.totalorder %s204, %s220
      %p222 = scmp.eq.s32.totalorder %s24, 0
      %p223 = por %p221, %p222
      %s224 = ssub.s32 %s18, %s25
      %p225 = scmp.eq.s32.totalorder %s224, 0
      %s227 = sadd.s32 %s226, 1
      %s228 = scalar_select %p225, %s226, %s227
      %p231 = pneg %p225
      %p232 = scmp.eq.s32.totalorder %s18, 1
      %p233 = por %p231, %p232
      %p234 = scmp.ne.s32.totalorder %s226, %s229
      %p235 = scmp.eq.s32.totalorder %s18, 0
      %p236 = por %p234, %p235
      %p237 = scmp.ne.s32.totalorder %s226, %s229
      %p238 = scmp.eq.s32.totalorder %s23, 1
      %p239 = por %p237, %p238
      %p240 = scmp.ne.s32.totalorder %s229, %s230
      %p241 = scmp.eq.s32.totalorder %s23, 0
      %p242 = por %p240, %p241
      %p243 = scmp.ne.s32.totalorder %s229, %s230
      %p244 = scmp.eq.s32.totalorder %s24, 1
      %p245 = por %p243, %p244
      %p247 = scmp.ne.s32.totalorder %s230, %s246
      %p248 = scmp.eq.s32.totalorder %s24, 0
      %p249 = por %p247, %p248
      %s251 = sadd.s32 %s250, 1
      %p254 = scmp.eq.s32.totalorder %s18, 1
      %p255 = scmp.ne.s32.totalorder %s250, %s252
      %p256 = scmp.eq.s32.totalorder %s18, 0
      %p257 = por %p255, %p256
      %p258 = scmp.ne.s32.totalorder %s250, %s252
      %p259 = scmp.eq.s32.totalorder %s23, 1
      %p260 = por %p258, %p259
      %p261 = scmp.ne.s32.totalorder %s252, %s253
      %p262 = scmp.eq.s32.totalorder %s23, 0
      %p263 = por %p261, %p262
      %p264 = scmp.ne.s32.totalorder %s252, %s253
      %p265 = scmp.eq.s32.totalorder %s24, 1
      %p266 = por %p264, %p265
      %p268 = scmp.ne.s32.totalorder %s253, %s267
      %p269 = scmp.eq.s32.totalorder %s24, 0
      %p270 = por %p268, %p269
      %s272 = sadd.s32 %s271, 1
      %p275 = scmp.eq.s32.totalorder %s18, 1
      %p276 = scmp.ne.s32.totalorder %s271, %s273
      %p277 = scmp.eq.s32.totalorder %s18, 0
      %p278 = por %p276, %p277
      %p279 = scmp.ne.s32.totalorder %s271, %s273
      %p280 = scmp.eq.s32.totalorder %s23, 1
      %p281 = por %p279, %p280
      %p282 = scmp.ne.s32.totalorder %s273, %s274
      %p283 = scmp.eq.s32.totalorder %s23, 0
      %p284 = por %p282, %p283
      %p285 = scmp.ne.s32.totalorder %s273, %s274
      %p286 = scmp.eq.s32.totalorder %s24, 1
      %p287 = por %p285, %p286
      %p289 = scmp.ne.s32.totalorder %s274, %s288
      %p290 = scmp.eq.s32.totalorder %s24, 0
      %p291 = por %p289, %p290
      %p292 = scmp.le.s32.totalorder 1, %s18
      %p293 = scmp.lt.s32.totalorder %s18, 3
      %p294 = pnand %p292, %p293
      %p295 = pneg %p294
      // Predicated region
      $region9: #{tpu_custom_call.1} parent=5 // pred_check
        _
      $region10: #{tpu_custom_call.1} parent=5 // pred_check_branch
        %297 = sbr.rel (%p294) target = $region12
      $region11: #{tpu_custom_call.1} parent=5 // pred_region
        %s298 = ssub.s32 %s18, 1
        // Predicated region
        $region13: #{tpu_custom_call.1} parent=11 // pred_check
          %p299 = pneg %p39
        $region14: #{tpu_custom_call.1} parent=11 // pred_check_branch
          %301 = sbr.rel (%p299) target = $region16
        $region15: #{tpu_custom_call.1} parent=11 // pred_region
          %s303 = ssub.s32 256, 256
          %304 = vsyncadd [#allocation3], %s303
          %s305 = sshll.u32 [#allocation2], 4
          %s306 = int_to_ptr.vmem [resolvable:$true] %s305
          %311 = dma.hbm_to_vmem [thread:$0]  %s0, 256, %s306, [#allocation3], 128, 128, 8
        $region16: #{tpu_custom_call.1} parent=11 // pred_fallthru
          _
        // Predicated region
        $region17: #{tpu_custom_call.1} parent=11 // pred_check
          %p312 = pneg %p60
        $region18: #{tpu_custom_call.1} parent=11 // pred_check_branch
          %314 = sbr.rel (%p312) target = $region20
        $region19: #{tpu_custom_call.1} parent=11 // pred_region
          _
        $region20: #{tpu_custom_call.1} parent=11 // pred_fallthru
          _
        // Predicated region
        $region21: #{tpu_custom_call.1} parent=11 // pred_check
          %p315 = pneg %p263
        $region22: #{tpu_custom_call.1} parent=11 // pred_check_branch
          %317 = sbr.rel (%p315) target = $region24
        $region23: #{tpu_custom_call.1} parent=11 // pred_region
          _
        $region24: #{tpu_custom_call.1} parent=11 // pred_fallthru
          _
      $region12: #{tpu_custom_call.1} parent=5 // pred_fallthru
        _
      %p318 = scmp.lt.s32.totalorder %s18, 2
      // Predicated region
      $region25: #{tpu_custom_call.1} parent=5 // pred_check
        %p319 = pneg %p318
      $region26: #{tpu_custom_call.1} parent=5 // pred_check_branch
        %321 = sbr.rel (%p319) target = $region28
      $region27: #{tpu_custom_call.1} parent=5 // pred_region
        // Predicated region
        $region29: #{tpu_custom_call.1} parent=27 // pred_check
          %p322 = pneg %p80
        $region30: #{tpu_custom_call.1} parent=27 // pred_check_branch
          %324 = sbr.rel (%p322) target = $region32
        $region31: #{tpu_custom_call.1} parent=27 // pred_region
          %p325 = scmp.lt.s32.totalorder %s18, 1
          %s326 = scalar_select %p325, %s18, 1
          %s327 = smul.addr %s326, 4
          %s328 = smul.addr %s327, 4
          %s329 = scalar_lea.vmem %s2, %s328
        $region32: #{tpu_custom_call.1} parent=27 // pred_fallthru
          _
        // Predicated region
        $region33: #{tpu_custom_call.1} parent=27 // pred_check
          %p330 = pneg %p106
        $region34: #{tpu_custom_call.1} parent=27 // pred_check_branch
          %332 = sbr.rel (%p330) target = $region36
        $region35: #{tpu_custom_call.1} parent=27 // pred_region
          %p333 = scmp.lt.s32.totalorder %s18, 1
          %s334 = scalar_select %p333, %s18, 1
          %s335 = scalar_lea.vmem %s3, %s334
        $region36: #{tpu_custom_call.1} parent=27 // pred_fallthru
          _
        // Predicated region
        $region37: #{tpu_custom_call.1} parent=27 // pred_check
          %p336 = pneg %p132
        $region38: #{tpu_custom_call.1} parent=27 // pred_check_branch
          %338 = sbr.rel (%p336) target = $region40
        $region39: #{tpu_custom_call.1} parent=27 // pred_region
          %p339 = scmp.lt.s32.totalorder %s18, 1
          %s340 = scalar_select %p339, %s18, 1
          %s341 = smul.addr %s340, 4
          %s342 = smul.addr %s341, 4
          %s343 = scalar_lea.vmem %s4, %s342
        $region40: #{tpu_custom_call.1} parent=27 // pred_fallthru
          _
        // Predicated region
        $region41: #{tpu_custom_call.1} parent=27 // pred_check
          %p344 = pneg %p158
        $region42: #{tpu_custom_call.1} parent=27 // pred_check_branch
          %346 = sbr.rel (%p344) target = $region44
        $region43: #{tpu_custom_call.1} parent=27 // pred_region
          %p347 = scmp.lt.s32.totalorder %s18, 1
          %s348 = scalar_select %p347, %s18, 1
          %s349 = smul.addr %s348, 4
          %s350 = smul.addr %s349, 4
          %s351 = scalar_lea.vmem %s5, %s350
        $region44: #{tpu_custom_call.1} parent=27 // pred_fallthru
          _
        // Predicated region
        $region45: #{tpu_custom_call.1} parent=27 // pred_check
          %p352 = pneg %p184
        $region46: #{tpu_custom_call.1} parent=27 // pred_check_branch
          %354 = sbr.rel (%p352) target = $region48
        $region47: #{tpu_custom_call.1} parent=27 // pred_region
          %p355 = scmp.lt.s32.totalorder %s18, 1
          %s356 = scalar_select %p355, %s18, 1
          %s357 = scalar_lea.vmem %s6, %s356
        $region48: #{tpu_custom_call.1} parent=27 // pred_fallthru
          _
        // Predicated region
        $region49: #{tpu_custom_call.1} parent=27 // pred_check
          %p358 = pneg %p210
        $region50: #{tpu_custom_call.1} parent=27 // pred_check_branch
          %360 = sbr.rel (%p358) target = $region52
        $region51: #{tpu_custom_call.1} parent=27 // pred_region
          %p361 = scmp.lt.s32.totalorder %s18, 1
          %s362 = scalar_select %p361, %s18, 1
          %s363 = smul.addr %s362, 8
          %s364 = smul.addr %s363, 4
          %s365 = scalar_lea.vmem %s7, %s364
        $region52: #{tpu_custom_call.1} parent=27 // pred_fallthru
          _
        // Predicated region
        $region53: #{tpu_custom_call.1} parent=27 // pred_check
          %p366 = pneg %p236
        $region54: #{tpu_custom_call.1} parent=27 // pred_check_branch
          %368 = sbr.rel (%p366) target = $region56
        $region55: #{tpu_custom_call.1} parent=27 // pred_region
          %p369 = scmp.lt.s32.totalorder %s18, 1
          %s370 = scalar_select %p369, %s18, 1
          %s371 = smul.addr %s370, 8
          %s372 = scalar_lea.vmem %s8, %s371
        $region56: #{tpu_custom_call.1} parent=27 // pred_fallthru
          _
      $region28: #{tpu_custom_call.1} parent=5 // pred_fallthru
        _
      %p373 = scmp.le.s32.totalorder 1, %s18
      %p374 = scmp.lt.s32.totalorder %s18, 3
      %p375 = pnand %p373, %p374
      %p376 = pneg %p375
      // Predicated region
      $region57: #{tpu_custom_call.1} parent=5 // pred_check
        _
      $region58: #{tpu_custom_call.1} parent=5 // pred_check_branch
        %378 = sbr.rel (%p375) target = $region60
      $region59: #{tpu_custom_call.1} parent=5 // pred_region
        %s379 = ssub.s32 %s18, 1
        // Predicated region
        $region61: #{tpu_custom_call.1} parent=59 // pred_check
          %p380 = pneg %p39
        $region62: #{tpu_custom_call.1} parent=59 // pred_check_branch
          %382 = sbr.rel (%p380) target = $region64
        $region63: #{tpu_custom_call.1} parent=59 // pred_region
          %383 = dma.done [#allocation3], 256
        $region64: #{tpu_custom_call.1} parent=59 // pred_fallthru
          _
        %p384 = pneg %p39
        %p385 = pneg %p36
        %p386 = pneg %p60
        %p387 = pneg %p57
        %p388 = scmp.lt.s32.totalorder %s23, 1
        %s389 = scalar_select %p388, %s23, 1
        %s390 = smul.addr %s389, 4
        %s391 = smul.addr %s390, 4
        %s392 = scalar_lea.vmem %s2, %s391
        %p393 = pneg %p86
        %p394 = pneg %p83
        %p395 = scmp.lt.s32.totalorder %s23, 1
        %s396 = scalar_select %p395, %s23, 1
        %s397 = scalar_lea.vmem %s3, %s396
        %p398 = pneg %p112
        %p399 = pneg %p109
        %p400 = scmp.lt.s32.totalorder %s23, 1
        %s401 = scalar_select %p400, %s23, 1
        %s402 = smul.addr %s401, 4
        %s403 = smul.addr %s402, 4
        %s404 = scalar_lea.vmem %s4, %s403
        %p405 = pneg %p138
        %p406 = pneg %p135
        %p407 = scmp.lt.s32.totalorder %s23, 1
        %s408 = scalar_select %p407, %s23, 1
        %s409 = smul.addr %s408, 4
        %s410 = smul.addr %s409, 4
        %s411 = scalar_lea.vmem %s5, %s410
        %p412 = pneg %p164
        %p413 = pneg %p161
        %p414 = scmp.lt.s32.totalorder %s23, 1
        %s415 = scalar_select %p414, %s23, 1
        %s416 = scalar_lea.vmem %s6, %s415
        %p417 = pneg %p190
        %p418 = pneg %p187
        %p419 = scmp.lt.s32.totalorder %s23, 1
        %s420 = scalar_select %p419, %s23, 1
        %s421 = smul.addr %s420, 8
        %s422 = smul.addr %s421, 4
        %s423 = scalar_lea.vmem %s7, %s422
        %p424 = pneg %p216
        %p425 = pneg %p213
        %p426 = scmp.lt.s32.totalorder %s23, 1
        %s427 = scalar_select %p426, %s23, 1
        %s428 = smul.addr %s427, 8
        %s429 = scalar_lea.vmem %s8, %s428
        %p430 = pneg %p242
        %p431 = pneg %p239
        %p432 = pneg %p263
        %p433 = pneg %p260
        %p434 = pneg %p284
        %p435 = pneg %p281
        %p436 = scmp.lt.s32.totalorder %s23, 1
        %s437 = scalar_select %p436, %s23, 1
        %s438 = smul.addr %s437, 4
        %s439 = smul.addr %s438, 4
        %s440 = scalar_lea.vmem %s2, %s439
        %p441 = scmp.lt.s32.totalorder %s23, 1
        %s442 = scalar_select %p441, %s23, 1
        %s443 = scalar_lea.vmem %s3, %s442
        %p444 = scmp.lt.s32.totalorder %s23, 1
        %s445 = scalar_select %p444, %s23, 1
        %s446 = smul.addr %s445, 4
        %s447 = smul.addr %s446, 4
        %s448 = scalar_lea.vmem %s4, %s447
        %p449 = scmp.lt.s32.totalorder %s23, 1
        %s450 = scalar_select %p449, %s23, 1
        %s451 = smul.addr %s450, 4
        %s452 = smul.addr %s451, 4
        %s453 = scalar_lea.vmem %s5, %s452
        %p454 = scmp.lt.s32.totalorder %s23, 1
        %s455 = scalar_select %p454, %s23, 1
        %s456 = scalar_lea.vmem %s6, %s455
        %p457 = scmp.lt.s32.totalorder %s23, 1
        %s458 = scalar_select %p457, %s23, 1
        %s459 = smul.addr %s458, 8
        %s460 = smul.addr %s459, 4
        %s461 = scalar_lea.vmem %s7, %s460
        %p462 = scmp.lt.s32.totalorder %s23, 1
        %s463 = scalar_select %p462, %s23, 1
        %s464 = smul.addr %s463, 8
        %s465 = scalar_lea.vmem %s8, %s464
        %p467 = scmp.eq.s32.totalorder %s23, 0
        // Predicated region
        $region65: #{tpu_custom_call.1} parent=59 // pred_check
          %p468 = pneg %p467
        $region66: #{tpu_custom_call.1} parent=59 // pred_check_branch
          %470 = sbr.rel (%p468) target = $region68
        $region67: #{tpu_custom_call.1} parent=59 // pred_region
          %v471 = vld [vmem:[#allocation2] sm:$0xff]
          %v472 = vld [vmem:[#allocation2 + $0x8] sm:$0xff]
          %vm473 = vcmask 261120
          %474 = vst.msk [vmem:[#allocation5] sm:$0xff] %vm473, %v471
          %475 = vst.msk [vmem:[#allocation5 + $0x8] sm:$0xff] %vm473, %v472
        $region68: #{tpu_custom_call.1} parent=59 // pred_fallthru
          _
        %v476 = vld [vmem:[%s465] sm:$0x3f]
        %v477 = vld [vmem:[#allocation5] sm:$0xff]
        %v478 = vld [vmem:[#allocation5 + $0x8] sm:$0xff]
        %v479 = vld [vmem:[%s1] sm:$0x1]
        %v480 = vld [vmem:[%s1 + $0x1] sm:$0x1]
        %vm481 = vcmp.eq.f32.partialorder %v479, 0.0
        %vm482 = vcmp.eq.f32.partialorder %v480, 0.0
        %v483 = vsel %vm481, -1e+09, 0.0
        %v484 = vsel %vm482, -1e+09, 0.0
        %vm485 = vcmask 261120
        %v486 = vsel %vm485, %v477, 0.0
        %487 = vadd.xlane.f32.xlu0 %v486
        %v488 = vpop.xlane.xlu0 %487
        %v489 = vsel %vm485, %v478, 0.0
        %490 = vadd.xlane.f32.xlu0 %v489
        %v491 = vpop.xlane.xlu0 %490
        %v492 = vrcp.pop 32.0
        %v493 = vmul.f32 %v488, %v492
        %v494 = vmul.f32 %v491, %v492
        %v495 = vsub.f32 %v477, %v493
        %v496 = vsub.f32 %v478, %v494
        %v497 = vmul.f32 %v495, %v495
        %v498 = vmul.f32 %v496, %v496
        %v499 = vsel %vm485, %v497, 0.0
        %500 = vadd.xlane.f32.xlu0 %v499
        %v501 = vpop.xlane.xlu0 %500
        %v502 = vsel %vm485, %v498, 0.0
        %503 = vadd.xlane.f32.xlu0 %v502
        %v504 = vpop.xlane.xlu0 %503
        %v505 = vrcp.pop 31.0
        %v506 = vmul.f32 %v501, %v505
        %v507 = vmul.f32 %v504, %v505
        %v508 = vrsqrt.pop %v506
        %v509 = vmul.f32 %v506, %v508
        %vm510 = vcmp.eq.f32.partialorder %v506, inf
        %v511 = vsel %vm510, %v506, %v509
        %vm512 = vcmp.eq.f32.partialorder %v506, 0.0
        %v513 = vand.u32 %v506, 2147483648
        %v514 = vsel %vm512, %v513, %v511
        %v515 = vrsqrt.pop %v507
        %v516 = vmul.f32 %v507, %v515
        %vm517 = vcmp.eq.f32.partialorder %v507, inf
        %v518 = vsel %vm517, %v507, %v516
        %vm519 = vcmp.eq.f32.partialorder %v507, 0.0
        %v520 = vand.u32 %v507, 2147483648
        %v521 = vsel %vm519, %v520, %v518
        %v522 = vlaneseq
        %v523 = vshrl.u32 %v522, 7
        %v524 = vsub.s32 0, %v523
        %v525 = vrot.slane %v476, %v524
        %v526 = vmul.f32 %v525, %v495
        %v527 = vmul.f32 %v525, %v496
        %v528 = vadd.f32 %v514, 1e-06
        %v529 = vadd.f32 %v521, 1e-06
        %v530 = vrcp.pop %v528
        %v531 = vmul.f32 %v526, %v530
        %v532 = vrcp.pop %v529
        %v533 = vmul.f32 %v527, %v532
        %v534 = vlaneseq
        %v535 = vshrl.u32 %v534, 7
        %v536 = vsub.s32 1, %v535
        %v537 = vrot.slane %v476, %v536
        %v538 = vadd.f32 %v531, %v537
        %v539 = vadd.f32 %v533, %v537
        %v540 = vpack.c.bf16 %v539, %v538
        %v541 = vld [vmem:[%s440] sm:$0xf]
        %v542 = vld [vmem:[%s440 + $0x4] sm:$0xf]
        %v543 = vld [vmem:[%s440 + $0x8] sm:$0xf]
        %v544 = vld [vmem:[%s440 + $0xc] sm:$0xf]
        %v545 = vld [vmem:[%s443] sm:$0x1]
        %v547 = vlaneseq
        %v548 = vshrl.u32 %v547, 7
        %v549 = vsub.s32 0, %v548
        %v550 = vrot.slane %v545, %v549
        %v556 = vunpack.c.l.b16 %v541
        %v557 = vunpack.c.l.b16 %v542
        %v558 = vunpack.c.l.b16 %v543
        %v559 = vunpack.c.l.b16 %v544
        %v560 = vpack.c.b16 %v557, %v556
        %v561 = vpack.c.b16 %v559, %v558
        %v565 = vsel %vm485, %v540, 0
        %567 = vmatprep.subr.bf16.mxu0 0
        %568 = vmatpush1.bf16.msra.mxu0 0
        %569 = vmatprep.subr.bf16.mxu0 0
        %570 = vmatpush1.bf16.msra.mxu0 0
        %571 = vmatprep.subr.bf16.mxu0 0
        %572 = vmatpush1.bf16.msra.mxu0 0
        %573 = vmatprep.subr.bf16.mxu0 0
        %574 = vmatpush1.bf16.msra.mxu0 0
        %575 = vmatprep.subr.bf16.mxu0 0
        %576 = vmatpush1.bf16.msra.mxu0 0
        %577 = vmatprep.subr.bf16.mxu0 0
        %578 = vmatpush1.bf16.msra.mxu0 0
        %579 = vmatprep.subr.bf16.mxu0 0
        %580 = vmatpush1.bf16.msra.mxu0 %v561
        %581 = vmatprep.subr.bf16.mxu0 0
        %582 = vmatpush1.bf16.msra.mxu0 %v560
        %583 = vmatprep.subr.bf16.mxu0 0
        %584 = vmatpush2.bf16.msra.mxu0 0
        %585 = vmatprep.subr.bf16.mxu0 0
        %586 = vmatpush2.bf16.msra.mxu0 0
        %587 = vmatprep.subr.bf16.mxu0 0
        %588 = vmatpush2.bf16.msra.mxu0 0
        %589 = vmatprep.subr.bf16.mxu0 0
        %590 = vmatpush2.bf16.msra.mxu0 0
        %591 = vmatprep.subr.bf16.mxu0 0
        %592 = vmatpush2.bf16.msra.mxu0 0
        %593 = vmatprep.subr.bf16.mxu0 0
        %594 = vmatpush2.bf16.msra.mxu0 0
        %595 = vmatprep.subr.bf16.mxu0 0
        %596 = vmatpush2.bf16.msra.mxu0 0
        %597 = vmatprep.subr.bf16.mxu0 0
        %598 = vmatpush2.bf16.msra.mxu0 0
        %599 = vmatprep.mubr.bf16.mxu0 0
        %600 = vmatmul.mubr.bf16.gmra.mxu0 %v565
        %v601 = vpop.f32.mrf.mxu0
        %v602 = vadd.f32 %v550, %v601
        %v603 = vpop.f32.mrf.mxu0
        %v604 = vpop.f32.mrf.mxu0
        %v605 = vadd.f32 %v550, %v604
        %v606 = vpop.f32.mrf.mxu0
        %607 = vdwg.mxu0
        %v608 = vld [vmem:[%s448] sm:$0xf]
        %v609 = vld [vmem:[%s448 + $0x4] sm:$0xf]
        %v610 = vld [vmem:[%s448 + $0x8] sm:$0xf]
        %v611 = vld [vmem:[%s448 + $0xc] sm:$0xf]
        %613 = vrot.lane.b32.xlu0 %v602, 96
        %v614 = vpop.permute.xlu0 %613
        %vm615 = vcmask 64512
        %v616 = vsel %vm615, %v602, 0
        %v618 = vsel %vm615, %v614, 0
        %620 = vmatprep.subr.mxu0 0.0
        %621 = vmatpush1.xpose.msra.mxu0 0.0
        %622 = vmatprep.subr.mxu0 0.0
        %623 = vmatpush1.xpose.msra.mxu0 0.0
        %624 = vmatprep.subr.mxu0 0.0
        %625 = vmatpush1.xpose.msra.mxu0 0.0
        %626 = vmatprep.subr.mxu0 0.0
        %627 = vmatpush1.xpose.msra.mxu0 0.0
        %628 = vmatprep.subr.mxu0 0.0
        %629 = vmatpush1.xpose.msra.mxu0 0.0
        %630 = vmatprep.subr.mxu0 0.0
        %631 = vmatpush1.xpose.msra.mxu0 0.0
        %632 = vmatprep.subr.mxu0 0.0
        %633 = vmatpush1.xpose.msra.mxu0 0.0
        %634 = vmatprep.subr.mxu0 0.0
        %635 = vmatpush1.xpose.msra.mxu0 0.0
        %636 = vmatprep.subr.mxu0 0.0
        %637 = vmatpush1.xpose.msra.mxu0 0.0
        %638 = vmatprep.subr.mxu0 0.0
        %639 = vmatpush1.xpose.msra.mxu0 0.0
        %640 = vmatprep.subr.mxu0 0.0
        %641 = vmatpush1.xpose.msra.mxu0 0.0
        %642 = vmatprep.subr.mxu0 0.0
        %643 = vmatpush1.xpose.msra.mxu0 0.0
        %644 = vmatprep.subr.mxu0 0.0
        %645 = vmatpush1.xpose.msra.mxu0 0.0
        %646 = vmatprep.subr.mxu0 0.0
        %647 = vmatpush1.xpose.msra.mxu0 0.0
        %648 = vmatprep.subr.mxu0 0.0
        %649 = vmatpush1.xpose.msra.mxu0 0.0
        %650 = vmatprep.subr.mxu0 0.0
        %651 = vmatpush1.xpose.msra.mxu0 %v618
        %652 = vmatprep.subr.mxu0 0.0
        %653 = vmatpush2.xpose.msra.mxu0 0.0
        %654 = vmatprep.subr.mxu0 0.0
        %655 = vmatpush2.xpose.msra.mxu0 0.0
        %656 = vmatprep.subr.mxu0 0.0
        %657 = vmatpush2.xpose.msra.mxu0 0.0
        %658 = vmatprep.subr.mxu0 0.0
        %659 = vmatpush2.xpose.msra.mxu0 0.0
        %660 = vmatprep.subr.mxu0 0.0
        %661 = vmatpush2.xpose.msra.mxu0 0.0
        %662 = vmatprep.subr.mxu0 0.0
        %663 = vmatpush2.xpose.msra.mxu0 0.0
        %664 = vmatprep.subr.mxu0 0.0
        %665 = vmatpush2.xpose.msra.mxu0 0.0
        %666 = vmatprep.subr.mxu0 0.0
        %667 = vmatpush2.xpose.msra.mxu0 0.0
        %668 = vmatprep.subr.mxu0 0.0
        %669 = vmatpush2.xpose.msra.mxu0 0.0
        %670 = vmatprep.subr.mxu0 0.0
        %671 = vmatpush2.xpose.msra.mxu0 0.0
        %672 = vmatprep.subr.mxu0 0.0
        %673 = vmatpush2.xpose.msra.mxu0 0.0
        %674 = vmatprep.subr.mxu0 0.0
        %675 = vmatpush2.xpose.msra.mxu0 0.0
        %676 = vmatprep.subr.mxu0 0.0
        %677 = vmatpush2.xpose.msra.mxu0 0.0
        %678 = vmatprep.subr.mxu0 0.0
        %679 = vmatpush2.xpose.msra.mxu0 0.0
        %680 = vmatprep.subr.mxu0 0.0
        %681 = vmatpush2.xpose.msra.mxu0 0.0
        %682 = vmatprep.subr.mxu0 0.0
        %683 = vmatpush2.xpose.msra.mxu0 0.0
        %684 = vmatprep.mubr.f32.mxu0 0.0
        %685 = vmatmul.mubr.f32.gmra.mxu0 %v616
        %v686 = vpop.f32.mrf.mxu0
        %v687 = vadd.f32 0.0, %v686
        %v688 = vpop.f32.mrf.mxu0
        %689 = vdwg.mxu0
        %v690 = vmul.f32 %v687, 0.35355338
        %v692 = vlaneseq
        %v693 = vshrl.u32 %v692, 7
        %v694 = vsub.s32 0, %v693
        %v695 = vrot.slane %v483, %v694
        %v697 = vadd.f32 %v690, %v695
        %v698 = vsel %vm615, %v697, -inf
        %699 = vmax.xlane.f32.xlu0 %v698
        %v700 = vpop.xlane.xlu0 %699
        %v701 = vsub.f32 %v697, %v700
        %v702 = vmul.f32 %v701, 1.442695
        %v703 = vpow.pop %v702
        %v704 = vsel %vm615, %v703, 0.0
        %705 = vadd.xlane.f32.xlu0 %v704
        %v706 = vpop.xlane.xlu0 %705
        %v707 = vrcp.pop %v706
        %v708 = vmul.f32 %v703, %v707
        %709 = vrot.lane.b32.xlu0 %v602, 64
        %v710 = vpop.permute.xlu0 %709
        %v713 = vsel %vm615, %v708, 0
        %715 = vmatprep.subr.mxu0 0.0
        %716 = vmatpush1.msra.mxu0 0.0
        %717 = vmatprep.subr.mxu0 0.0
        %718 = vmatpush1.msra.mxu0 0.0
        %719 = vmatprep.subr.mxu0 0.0
        %720 = vmatpush1.msra.mxu0 0.0
        %721 = vmatprep.subr.mxu0 0.0
        %722 = vmatpush1.msra.mxu0 0.0
        %723 = vmatprep.subr.mxu0 0.0
        %724 = vmatpush1.msra.mxu0 0.0
        %725 = vmatprep.subr.mxu0 0.0
        %726 = vmatpush1.msra.mxu0 0.0
        %727 = vmatprep.subr.mxu0 0.0
        %728 = vmatpush1.msra.mxu0 0.0
        %729 = vmatprep.subr.mxu0 0.0
        %730 = vmatpush1.msra.mxu0 0.0
        %731 = vmatprep.subr.mxu0 0.0
        %732 = vmatpush1.msra.mxu0 0.0
        %733 = vmatprep.subr.mxu0 0.0
        %734 = vmatpush1.msra.mxu0 0.0
        %735 = vmatprep.subr.mxu0 0.0
        %736 = vmatpush1.msra.mxu0 0.0
        %737 = vmatprep.subr.mxu0 0.0
        %738 = vmatpush1.msra.mxu0 0.0
        %739 = vmatprep.subr.mxu0 0.0
        %740 = vmatpush1.msra.mxu0 0.0
        %741 = vmatprep.subr.mxu0 0.0
        %742 = vmatpush1.msra.mxu0 0.0
        %743 = vmatprep.subr.mxu0 0.0
        %744 = vmatpush1.msra.mxu0 0.0
        %745 = vmatprep.subr.mxu0 0.0
        %746 = vmatpush1.msra.mxu0 %v710
        %747 = vmatprep.subr.mxu0 0.0
        %748 = vmatpush2.msra.mxu0 0.0
        %749 = vmatprep.subr.mxu0 0.0
        %750 = vmatpush2.msra.mxu0 0.0
        %751 = vmatprep.subr.mxu0 0.0
        %752 = vmatpush2.msra.mxu0 0.0
        %753 = vmatprep.subr.mxu0 0.0
        %754 = vmatpush2.msra.mxu0 0.0
        %755 = vmatprep.subr.mxu0 0.0
        %756 = vmatpush2.msra.mxu0 0.0
        %757 = vmatprep.subr.mxu0 0.0
        %758 = vmatpush2.msra.mxu0 0.0
        %759 = vmatprep.subr.mxu0 0.0
        %760 = vmatpush2.msra.mxu0 0.0
        %761 = vmatprep.subr.mxu0 0.0
        %762 = vmatpush2.msra.mxu0 0.0
        %763 = vmatprep.subr.mxu0 0.0
        %764 = vmatpush2.msra.mxu0 0.0
        %765 = vmatprep.subr.mxu0 0.0
        %766 = vmatpush2.msra.mxu0 0.0
        %767 = vmatprep.subr.mxu0 0.0
        %768 = vmatpush2.msra.mxu0 0.0
        %769 = vmatprep.subr.mxu0 0.0
        %770 = vmatpush2.msra.mxu0 0.0
        %771 = vmatprep.subr.mxu0 0.0
        %772 = vmatpush2.msra.mxu0 0.0
        %773 = vmatprep.subr.mxu0 0.0
        %774 = vmatpush2.msra.mxu0 0.0
        %775 = vmatprep.subr.mxu0 0.0
        %776 = vmatpush2.msra.mxu0 0.0
        %777 = vmatprep.subr.mxu0 0.0
        %778 = vmatpush2.msra.mxu0 0.0
        %779 = vmatprep.mubr.f32.mxu0 0.0
        %780 = vmatmul.mubr.f32.gmra.mxu0 %v713
        %v781 = vpop.f32.mrf.mxu0
        %v782 = vadd.f32 0.0, %v781
        %v783 = vpop.f32.mrf.mxu0
        %784 = vdwg.mxu0
        %v785 = vpack.c.bf16 %v782, %v782
        %786 = vrot.lane.b32.xlu0 %v602, 120
        %v787 = vpop.permute.xlu0 %786
        %788 = vrot.lane.b32.xlu0 %v602, 88
        %v789 = vpop.permute.xlu0 %788
        %v790 = vsel %vm615, %v787, 0
        %v792 = vsel %vm615, %v789, 0
        %794 = vmatprep.subr.mxu0 0.0
        %795 = vmatpush1.xpose.msra.mxu0 0.0
        %796 = vmatprep.subr.mxu0 0.0
        %797 = vmatpush1.xpose.msra.mxu0 0.0
        %798 = vmatprep.subr.mxu0 0.0
        %799 = vmatpush1.xpose.msra.mxu0 0.0
        %800 = vmatprep.subr.mxu0 0.0
        %801 = vmatpush1.xpose.msra.mxu0 0.0
        %802 = vmatprep.subr.mxu0 0.0
        %803 = vmatpush1.xpose.msra.mxu0 0.0
        %804 = vmatprep.subr.mxu0 0.0
        %805 = vmatpush1.xpose.msra.mxu0 0.0
        %806 = vmatprep.subr.mxu0 0.0
        %807 = vmatpush1.xpose.msra.mxu0 0.0
        %808 = vmatprep.subr.mxu0 0.0
        %809 = vmatpush1.xpose.msra.mxu0 0.0
        %810 = vmatprep.subr.mxu0 0.0
        %811 = vmatpush1.xpose.msra.mxu0 0.0
        %812 = vmatprep.subr.mxu0 0.0
        %813 = vmatpush1.xpose.msra.mxu0 0.0
        %814 = vmatprep.subr.mxu0 0.0
        %815 = vmatpush1.xpose.msra.mxu0 0.0
        %816 = vmatprep.subr.mxu0 0.0
        %817 = vmatpush1.xpose.msra.mxu0 0.0
        %818 = vmatprep.subr.mxu0 0.0
        %819 = vmatpush1.xpose.msra.mxu0 0.0
        %820 = vmatprep.subr.mxu0 0.0
        %821 = vmatpush1.xpose.msra.mxu0 0.0
        %822 = vmatprep.subr.mxu0 0.0
        %823 = vmatpush1.xpose.msra.mxu0 0.0
        %824 = vmatprep.subr.mxu0 0.0
        %825 = vmatpush1.xpose.msra.mxu0 %v792
        %826 = vmatprep.subr.mxu0 0.0
        %827 = vmatpush2.xpose.msra.mxu0 0.0
        %828 = vmatprep.subr.mxu0 0.0
        %829 = vmatpush2.xpose.msra.mxu0 0.0
        %830 = vmatprep.subr.mxu0 0.0
        %831 = vmatpush2.xpose.msra.mxu0 0.0
        %832 = vmatprep.subr.mxu0 0.0
        %833 = vmatpush2.xpose.msra.mxu0 0.0
        %834 = vmatprep.subr.mxu0 0.0
        %835 = vmatpush2.xpose.msra.mxu0 0.0
        %836 = vmatprep.subr.mxu0 0.0
        %837 = vmatpush2.xpose.msra.mxu0 0.0
        %838 = vmatprep.subr.mxu0 0.0
        %839 = vmatpush2.xpose.msra.mxu0 0.0
        %840 = vmatprep.subr.mxu0 0.0
        %841 = vmatpush2.xpose.msra.mxu0 0.0
        %842 = vmatprep.subr.mxu0 0.0
        %843 = vmatpush2.xpose.msra.mxu0 0.0
        %844 = vmatprep.subr.mxu0 0.0
        %845 = vmatpush2.xpose.msra.mxu0 0.0
        %846 = vmatprep.subr.mxu0 0.0
        %847 = vmatpush2.xpose.msra.mxu0 0.0
        %848 = vmatprep.subr.mxu0 0.0
        %849 = vmatpush2.xpose.msra.mxu0 0.0
        %850 = vmatprep.subr.mxu0 0.0
        %851 = vmatpush2.xpose.msra.mxu0 0.0
        %852 = vmatprep.subr.mxu0 0.0
        %853 = vmatpush2.xpose.msra.mxu0 0.0
        %854 = vmatprep.subr.mxu0 0.0
        %855 = vmatpush2.xpose.msra.mxu0 0.0
        %856 = vmatprep.subr.mxu0 0.0
        %857 = vmatpush2.xpose.msra.mxu0 0.0
        %858 = vmatprep.mubr.f32.mxu0 0.0
        %859 = vmatmul.mubr.f32.gmra.mxu0 %v790
        %v860 = vpop.f32.mrf.mxu0
        %v861 = vadd.f32 0.0, %v860
        %v862 = vpop.f32.mrf.mxu0
        %863 = vdwg.mxu0
        %v864 = vmul.f32 %v861, 0.35355338
        %v865 = vadd.f32 %v864, %v695
        %v866 = vsel %vm615, %v865, -inf
        %867 = vmax.xlane.f32.xlu0 %v866
        %v868 = vpop.xlane.xlu0 %867
        %v869 = vsub.f32 %v865, %v868
        %v870 = vmul.f32 %v869, 1.442695
        %v871 = vpow.pop %v870
        %v872 = vsel %vm615, %v871, 0.0
        %873 = vadd.xlane.f32.xlu0 %v872
        %v874 = vpop.xlane.xlu0 %873
        %v875 = vrcp.pop %v874
        %v876 = vmul.f32 %v871, %v875
        %877 = vrot.lane.b32.xlu0 %v602, 56
        %v878 = vpop.permute.xlu0 %877
        %v881 = vsel %vm615, %v876, 0
        %883 = vmatprep.subr.mxu0 0.0
        %884 = vmatpush1.msra.mxu0 0.0
        %885 = vmatprep.subr.mxu0 0.0
        %886 = vmatpush1.msra.mxu0 0.0
        %887 = vmatprep.subr.mxu0 0.0
        %888 = vmatpush1.msra.mxu0 0.0
        %889 = vmatprep.subr.mxu0 0.0
        %890 = vmatpush1.msra.mxu0 0.0
        %891 = vmatprep.subr.mxu0 0.0
        %892 = vmatpush1.msra.mxu0 0.0
        %893 = vmatprep.subr.mxu0 0.0
        %894 = vmatpush1.msra.mxu0 0.0
        %895 = vmatprep.subr.mxu0 0.0
        %896 = vmatpush1.msra.mxu0 0.0
        %897 = vmatprep.subr.mxu0 0.0
        %898 = vmatpush1.msra.mxu0 0.0
        %899 = vmatprep.subr.mxu0 0.0
        %900 = vmatpush1.msra.mxu0 0.0
        %901 = vmatprep.subr.mxu0 0.0
        %902 = vmatpush1.msra.mxu0 0.0
        %903 = vmatprep.subr.mxu0 0.0
        %904 = vmatpush1.msra.mxu0 0.0
        %905 = vmatprep.subr.mxu0 0.0
        %906 = vmatpush1.msra.mxu0 0.0
        %907 = vmatprep.subr.mxu0 0.0
        %908 = vmatpush1.msra.mxu0 0.0
        %909 = vmatprep.subr.mxu0 0.0
        %910 = vmatpush1.msra.mxu0 0.0
        %911 = vmatprep.subr.mxu0 0.0
        %912 = vmatpush1.msra.mxu0 0.0
        %913 = vmatprep.subr.mxu0 0.0
        %914 = vmatpush1.msra.mxu0 %v878
        %915 = vmatprep.subr.mxu0 0.0
        %916 = vmatpush2.msra.mxu0 0.0
        %917 = vmatprep.subr.mxu0 0.0
        %918 = vmatpush2.msra.mxu0 0.0
        %919 = vmatprep.subr.mxu0 0.0
        %920 = vmatpush2.msra.mxu0 0.0
        %921 = vmatprep.subr.mxu0 0.0
        %922 = vmatpush2.msra.mxu0 0.0
        %923 = vmatprep.subr.mxu0 0.0
        %924 = vmatpush2.msra.mxu0 0.0
        %925 = vmatprep.subr.mxu0 0.0
        %926 = vmatpush2.msra.mxu0 0.0
        %927 = vmatprep.subr.mxu0 0.0
        %928 = vmatpush2.msra.mxu0 0.0
        %929 = vmatprep.subr.mxu0 0.0
        %930 = vmatpush2.msra.mxu0 0.0
        %931 = vmatprep.subr.mxu0 0.0
        %932 = vmatpush2.msra.mxu0 0.0
        %933 = vmatprep.subr.mxu0 0.0
        %934 = vmatpush2.msra.mxu0 0.0
        %935 = vmatprep.subr.mxu0 0.0
        %936 = vmatpush2.msra.mxu0 0.0
        %937 = vmatprep.subr.mxu0 0.0
        %938 = vmatpush2.msra.mxu0 0.0
        %939 = vmatprep.subr.mxu0 0.0
        %940 = vmatpush2.msra.mxu0 0.0
        %941 = vmatprep.subr.mxu0 0.0
        %942 = vmatpush2.msra.mxu0 0.0
        %943 = vmatprep.subr.mxu0 0.0
        %944 = vmatpush2.msra.mxu0 0.0
        %945 = vmatprep.subr.mxu0 0.0
        %946 = vmatpush2.msra.mxu0 0.0
        %947 = vmatprep.mubr.f32.mxu0 0.0
        %948 = vmatmul.mubr.f32.gmra.mxu0 %v881
        %v949 = vpop.f32.mrf.mxu0
        %v950 = vadd.f32 0.0, %v949
        %v951 = vpop.f32.mrf.mxu0
        %952 = vdwg.mxu0
        %v953 = vpack.c.bf16 %v950, %v950
        %v955 = vsel %vm615, %v953, 0
        %vm957 = vcmask 1043456
        %v959 = vsel %vm957, %v609, 0
        %961 = vmatprep.subr.bf16.mxu0 0
        %962 = vmatpush1.bf16.msra.mxu0 0
        %963 = vmatprep.subr.bf16.mxu0 0
        %964 = vmatpush1.bf16.msra.mxu0 0
        %965 = vmatprep.subr.bf16.mxu0 0
        %966 = vmatpush1.bf16.msra.mxu0 0
        %967 = vmatprep.subr.bf16.mxu0 0
        %968 = vmatpush1.bf16.msra.mxu0 0
        %969 = vmatprep.subr.bf16.mxu0 0
        %970 = vmatpush1.bf16.msra.mxu0 0
        %971 = vmatprep.subr.bf16.mxu0 0
        %972 = vmatpush1.bf16.msra.mxu0 0
        %973 = vmatprep.subr.bf16.mxu0 0
        %974 = vmatpush1.bf16.msra.mxu0 0
        %975 = vmatprep.subr.bf16.mxu0 0
        %976 = vmatpush1.bf16.msra.mxu0 %v959
        %977 = vmatprep.subr.bf16.mxu0 0
        %978 = vmatpush2.bf16.msra.mxu0 0
        %979 = vmatprep.subr.bf16.mxu0 0
        %980 = vmatpush2.bf16.msra.mxu0 0
        %981 = vmatprep.subr.bf16.mxu0 0
        %982 = vmatpush2.bf16.msra.mxu0 0
        %983 = vmatprep.subr.bf16.mxu0 0
        %984 = vmatpush2.bf16.msra.mxu0 0
        %985 = vmatprep.subr.bf16.mxu0 0
        %986 = vmatpush2.bf16.msra.mxu0 0
        %987 = vmatprep.subr.bf16.mxu0 0
        %988 = vmatpush2.bf16.msra.mxu0 0
        %989 = vmatprep.subr.bf16.mxu0 0
        %990 = vmatpush2.bf16.msra.mxu0 0
        %991 = vmatprep.subr.bf16.mxu0 0
        %992 = vmatpush2.bf16.msra.mxu0 0
        %993 = vmatprep.mubr.bf16.mxu0 0
        %994 = vmatmul.mubr.bf16.gmra.mxu0 %v955
        %v995 = vpop.f32.mrf.mxu0
        %v996 = vadd.f32 0.0, %v995
        %v997 = vpop.f32.mrf.mxu0
        %v998 = vpop.f32.mrf.mxu0
        %v999 = vpop.f32.mrf.mxu0
        %1000 = vdwg.mxu0
        %v1002 = vsel %vm615, %v785, 0
        %v1005 = vsel %vm957, %v608, 0
        %1007 = vmatprep.subr.bf16.mxu0 0
        %1008 = vmatpush1.bf16.msra.mxu0 0
        %1009 = vmatprep.subr.bf16.mxu0 0
        %1010 = vmatpush1.bf16.msra.mxu0 0
        %1011 = vmatprep.subr.bf16.mxu0 0
        %1012 = vmatpush1.bf16.msra.mxu0 0
        %1013 = vmatprep.subr.bf16.mxu0 0
        %1014 = vmatpush1.bf16.msra.mxu0 0
        %1015 = vmatprep.subr.bf16.mxu0 0
        %1016 = vmatpush1.bf16.msra.mxu0 0
        %1017 = vmatprep.subr.bf16.mxu0 0
        %1018 = vmatpush1.bf16.msra.mxu0 0
        %1019 = vmatprep.subr.bf16.mxu0 0
        %1020 = vmatpush1.bf16.msra.mxu0 0
        %1021 = vmatprep.subr.bf16.mxu0 0
        %1022 = vmatpush1.bf16.msra.mxu0 %v1005
        %1023 = vmatprep.subr.bf16.mxu0 0
        %1024 = vmatpush2.bf16.msra.mxu0 0
        %1025 = vmatprep.subr.bf16.mxu0 0
        %1026 = vmatpush2.bf16.msra.mxu0 0
        %1027 = vmatprep.subr.bf16.mxu0 0
        %1028 = vmatpush2.bf16.msra.mxu0 0
        %1029 = vmatprep.subr.bf16.mxu0 0
        %1030 = vmatpush2.bf16.msra.mxu0 0
        %1031 = vmatprep.subr.bf16.mxu0 0
        %1032 = vmatpush2.bf16.msra.mxu0 0
        %1033 = vmatprep.subr.bf16.mxu0 0
        %1034 = vmatpush2.bf16.msra.mxu0 0
        %1035 = vmatprep.subr.bf16.mxu0 0
        %1036 = vmatpush2.bf16.msra.mxu0 0
        %1037 = vmatprep.subr.bf16.mxu0 0
        %1038 = vmatpush2.bf16.msra.mxu0 0
        %1039 = vmatprep.mubr.bf16.mxu0 0
        %1040 = vmatmul.mubr.bf16.gmra.mxu0 %v1002
        %v1041 = vpop.f32.mrf.mxu0
        %v1042 = vadd.f32 %v996, %v1041
        %v1043 = vpop.f32.mrf.mxu0
        %v1044 = vpop.f32.mrf.mxu0
        %v1045 = vpop.f32.mrf.mxu0
        %1046 = vdwg.mxu0
        %1047 = vrot.lane.b32.xlu0 %v602, 112
        %v1048 = vpop.permute.xlu0 %1047
        %1049 = vrot.lane.b32.xlu0 %v602, 80
        %v1050 = vpop.permute.xlu0 %1049
        %v1051 = vsel %vm615, %v1048, 0
        %v1053 = vsel %vm615, %v1050, 0
        %1055 = vmatprep.subr.mxu0 0.0
        %1056 = vmatpush1.xpose.msra.mxu0 0.0
        %1057 = vmatprep.subr.mxu0 0.0
        %1058 = vmatpush1.xpose.msra.mxu0 0.0
        %1059 = vmatprep.subr.mxu0 0.0
        %1060 = vmatpush1.xpose.msra.mxu0 0.0
        %1061 = vmatprep.subr.mxu0 0.0
        %1062 = vmatpush1.xpose.msra.mxu0 0.0
        %1063 = vmatprep.subr.mxu0 0.0
        %1064 = vmatpush1.xpose.msra.mxu0 0.0
        %1065 = vmatprep.subr.mxu0 0.0
        %1066 = vmatpush1.xpose.msra.mxu0 0.0
        %1067 = vmatprep.subr.mxu0 0.0
        %1068 = vmatpush1.xpose.msra.mxu0 0.0
        %1069 = vmatprep.subr.mxu0 0.0
        %1070 = vmatpush1.xpose.msra.mxu0 0.0
        %1071 = vmatprep.subr.mxu0 0.0
        %1072 = vmatpush1.xpose.msra.mxu0 0.0
        %1073 = vmatprep.subr.mxu0 0.0
        %1074 = vmatpush1.xpose.msra.mxu0 0.0
        %1075 = vmatprep.subr.mxu0 0.0
        %1076 = vmatpush1.xpose.msra.mxu0 0.0
        %1077 = vmatprep.subr.mxu0 0.0
        %1078 = vmatpush1.xpose.msra.mxu0 0.0
        %1079 = vmatprep.subr.mxu0 0.0
        %1080 = vmatpush1.xpose.msra.mxu0 0.0
        %1081 = vmatprep.subr.mxu0 0.0
        %1082 = vmatpush1.xpose.msra.mxu0 0.0
        %1083 = vmatprep.subr.mxu0 0.0
        %1084 = vmatpush1.xpose.msra.mxu0 0.0
        %1085 = vmatprep.subr.mxu0 0.0
        %1086 = vmatpush1.xpose.msra.mxu0 %v1053
        %1087 = vmatprep.subr.mxu0 0.0
        %1088 = vmatpush2.xpose.msra.mxu0 0.0
        %1089 = vmatprep.subr.mxu0 0.0
        %1090 = vmatpush2.xpose.msra.mxu0 0.0
        %1091 = vmatprep.subr.mxu0 0.0
        %1092 = vmatpush2.xpose.msra.mxu0 0.0
        %1093 = vmatprep.subr.mxu0 0.0
        %1094 = vmatpush2.xpose.msra.mxu0 0.0
        %1095 = vmatprep.subr.mxu0 0.0
        %1096 = vmatpush2.xpose.msra.mxu0 0.0
        %1097 = vmatprep.subr.mxu0 0.0
        %1098 = vmatpush2.xpose.msra.mxu0 0.0
        %1099 = vmatprep.subr.mxu0 0.0
        %1100 = vmatpush2.xpose.msra.mxu0 0.0
        %1101 = vmatprep.subr.mxu0 0.0
        %1102 = vmatpush2.xpose.msra.mxu0 0.0
        %1103 = vmatprep.subr.mxu0 0.0
        %1104 = vmatpush2.xpose.msra.mxu0 0.0
        %1105 = vmatprep.subr.mxu0 0.0
        %1106 = vmatpush2.xpose.msra.mxu0 0.0
        %1107 = vmatprep.subr.mxu0 0.0
        %1108 = vmatpush2.xpose.msra.mxu0 0.0
        %1109 = vmatprep.subr.mxu0 0.0
        %1110 = vmatpush2.xpose.msra.mxu0 0.0
        %1111 = vmatprep.subr.mxu0 0.0
        %1112 = vmatpush2.xpose.msra.mxu0 0.0
        %1113 = vmatprep.subr.mxu0 0.0
        %1114 = vmatpush2.xpose.msra.mxu0 0.0
        %1115 = vmatprep.subr.mxu0 0.0
        %1116 = vmatpush2.xpose.msra.mxu0 0.0
        %1117 = vmatprep.subr.mxu0 0.0
        %1118 = vmatpush2.xpose.msra.mxu0 0.0
        %1119 = vmatprep.mubr.f32.mxu0 0.0
        %1120 = vmatmul.mubr.f32.gmra.mxu0 %v1051
        %v1121 = vpop.f32.mrf.mxu0
        %v1122 = vadd.f32 0.0, %v1121
        %v1123 = vpop.f32.mrf.mxu0
        %1124 = vdwg.mxu0
        %v1125 = vmul.f32 %v1122, 0.35355338
        %v1126 = vadd.f32 %v1125, %v695
        %v1127 = vsel %vm615, %v1126, -inf
        %1128 = vmax.xlane.f32.xlu0 %v1127
        %v1129 = vpop.xlane.xlu0 %1128
        %v1130 = vsub.f32 %v1126, %v1129
        %v1131 = vmul.f32 %v1130, 1.442695
        %v1132 = vpow.pop %v1131
        %v1133 = vsel %vm615, %v1132, 0.0
        %1134 = vadd.xlane.f32.xlu0 %v1133
        %v1135 = vpop.xlane.xlu0 %1134
        %v1136 = vrcp.pop %v1135
        %v1137 = vmul.f32 %v1132, %v1136
        %1138 = vrot.lane.b32.xlu0 %v602, 48
        %v1139 = vpop.permute.xlu0 %1138
        %v1142 = vsel %vm615, %v1137, 0
        %1144 = vmatprep.subr.mxu0 0.0
        %1145 = vmatpush1.msra.mxu0 0.0
        %1146 = vmatprep.subr.mxu0 0.0
        %1147 = vmatpush1.msra.mxu0 0.0
        %1148 = vmatprep.subr.mxu0 0.0
        %1149 = vmatpush1.msra.mxu0 0.0
        %1150 = vmatprep.subr.mxu0 0.0
        %1151 = vmatpush1.msra.mxu0 0.0
        %1152 = vmatprep.subr.mxu0 0.0
        %1153 = vmatpush1.msra.mxu0 0.0
        %1154 = vmatprep.subr.mxu0 0.0
        %1155 = vmatpush1.msra.mxu0 0.0
        %1156 = vmatprep.subr.mxu0 0.0
        %1157 = vmatpush1.msra.mxu0 0.0
        %1158 = vmatprep.subr.mxu0 0.0
        %1159 = vmatpush1.msra.mxu0 0.0
        %1160 = vmatprep.subr.mxu0 0.0
        %1161 = vmatpush1.msra.mxu0 0.0
        %1162 = vmatprep.subr.mxu0 0.0
        %1163 = vmatpush1.msra.mxu0 0.0
        %1164 = vmatprep.subr.mxu0 0.0
        %1165 = vmatpush1.msra.mxu0 0.0
        %1166 = vmatprep.subr.mxu0 0.0
        %1167 = vmatpush1.msra.mxu0 0.0
        %1168 = vmatprep.subr.mxu0 0.0
        %1169 = vmatpush1.msra.mxu0 0.0
        %1170 = vmatprep.subr.mxu0 0.0
        %1171 = vmatpush1.msra.mxu0 0.0
        %1172 = vmatprep.subr.mxu0 0.0
        %1173 = vmatpush1.msra.mxu0 0.0
        %1174 = vmatprep.subr.mxu0 0.0
        %1175 = vmatpush1.msra.mxu0 %v1139
        %1176 = vmatprep.subr.mxu0 0.0
        %1177 = vmatpush2.msra.mxu0 0.0
        %1178 = vmatprep.subr.mxu0 0.0
        %1179 = vmatpush2.msra.mxu0 0.0
        %1180 = vmatprep.subr.mxu0 0.0
        %1181 = vmatpush2.msra.mxu0 0.0
        %1182 = vmatprep.subr.mxu0 0.0
        %1183 = vmatpush2.msra.mxu0 0.0
        %1184 = vmatprep.subr.mxu0 0.0
        %1185 = vmatpush2.msra.mxu0 0.0
        %1186 = vmatprep.subr.mxu0 0.0
        %1187 = vmatpush2.msra.mxu0 0.0
        %1188 = vmatprep.subr.mxu0 0.0
        %1189 = vmatpush2.msra.mxu0 0.0
        %1190 = vmatprep.subr.mxu0 0.0
        %1191 = vmatpush2.msra.mxu0 0.0
        %1192 = vmatprep.subr.mxu0 0.0
        %1193 = vmatpush2.msra.mxu0 0.0
        %1194 = vmatprep.subr.mxu0 0.0
        %1195 = vmatpush2.msra.mxu0 0.0
        %1196 = vmatprep.subr.mxu0 0.0
        %1197 = vmatpush2.msra.mxu0 0.0
        %1198 = vmatprep.subr.mxu0 0.0
        %1199 = vmatpush2.msra.mxu0 0.0
        %1200 = vmatprep.subr.mxu0 0.0
        %1201 = vmatpush2.msra.mxu0 0.0
        %1202 = vmatprep.subr.mxu0 0.0
        %1203 = vmatpush2.msra.mxu0 0.0
        %1204 = vmatprep.subr.mxu0 0.0
        %1205 = vmatpush2.msra.mxu0 0.0
        %1206 = vmatprep.subr.mxu0 0.0
        %1207 = vmatpush2.msra.mxu0 0.0
        %1208 = vmatprep.mubr.f32.mxu0 0.0
        %1209 = vmatmul.mubr.f32.gmra.mxu0 %v1142
        %v1210 = vpop.f32.mrf.mxu0
        %v1211 = vadd.f32 0.0, %v1210
        %v1212 = vpop.f32.mrf.mxu0
        %1213 = vdwg.mxu0
        %v1214 = vpack.c.bf16 %v1211, %v1211
        %v1216 = vsel %vm615, %v1214, 0
        %v1219 = vsel %vm957, %v610, 0
        %1221 = vmatprep.subr.bf16.mxu0 0
        %1222 = vmatpush1.bf16.msra.mxu0 0
        %1223 = vmatprep.subr.bf16.mxu0 0
        %1224 = vmatpush1.bf16.msra.mxu0 0
        %1225 = vmatprep.subr.bf16.mxu0 0
        %1226 = vmatpush1.bf16.msra.mxu0 0
        %1227 = vmatprep.subr.bf16.mxu0 0
        %1228 = vmatpush1.bf16.msra.mxu0 0
        %1229 = vmatprep.subr.bf16.mxu0 0
        %1230 = vmatpush1.bf16.msra.mxu0 0
        %1231 = vmatprep.subr.bf16.mxu0 0
        %1232 = vmatpush1.bf16.msra.mxu0 0
        %1233 = vmatprep.subr.bf16.mxu0 0
        %1234 = vmatpush1.bf16.msra.mxu0 0
        %1235 = vmatprep.subr.bf16.mxu0 0
        %1236 = vmatpush1.bf16.msra.mxu0 %v1219
        %1237 = vmatprep.subr.bf16.mxu0 0
        %1238 = vmatpush2.bf16.msra.mxu0 0
        %1239 = vmatprep.subr.bf16.mxu0 0
        %1240 = vmatpush2.bf16.msra.mxu0 0
        %1241 = vmatprep.subr.bf16.mxu0 0
        %1242 = vmatpush2.bf16.msra.mxu0 0
        %1243 = vmatprep.subr.bf16.mxu0 0
        %1244 = vmatpush2.bf16.msra.mxu0 0
        %1245 = vmatprep.subr.bf16.mxu0 0
        %1246 = vmatpush2.bf16.msra.mxu0 0
        %1247 = vmatprep.subr.bf16.mxu0 0
        %1248 = vmatpush2.bf16.msra.mxu0 0
        %1249 = vmatprep.subr.bf16.mxu0 0
        %1250 = vmatpush2.bf16.msra.mxu0 0
        %1251 = vmatprep.subr.bf16.mxu0 0
        %1252 = vmatpush2.bf16.msra.mxu0 0
        %1253 = vmatprep.mubr.bf16.mxu0 0
        %1254 = vmatmul.mubr.bf16.gmra.mxu0 %v1216
        %v1255 = vpop.f32.mrf.mxu0
        %v1256 = vadd.f32 0.0, %v1255
        %v1257 = vpop.f32.mrf.mxu0
        %v1258 = vpop.f32.mrf.mxu0
        %v1259 = vpop.f32.mrf.mxu0
        %1260 = vdwg.mxu0
        %v1261 = vadd.f32 %v1042, %v1256
        %1262 = vrot.lane.b32.xlu0 %v602, 104
        %v1263 = vpop.permute.xlu0 %1262
        %1264 = vrot.lane.b32.xlu0 %v602, 72
        %v1265 = vpop.permute.xlu0 %1264
        %v1266 = vsel %vm615, %v1263, 0
        %v1268 = vsel %vm615, %v1265, 0
        %1270 = vmatprep.subr.mxu0 0.0
        %1271 = vmatpush1.xpose.msra.mxu0 0.0
        %1272 = vmatprep.subr.mxu0 0.0
        %1273 = vmatpush1.xpose.msra.mxu0 0.0
        %1274 = vmatprep.subr.mxu0 0.0
        %1275 = vmatpush1.xpose.msra.mxu0 0.0
        %1276 = vmatprep.subr.mxu0 0.0
        %1277 = vmatpush1.xpose.msra.mxu0 0.0
        %1278 = vmatprep.subr.mxu0 0.0
        %1279 = vmatpush1.xpose.msra.mxu0 0.0
        %1280 = vmatprep.subr.mxu0 0.0
        %1281 = vmatpush1.xpose.msra.mxu0 0.0
        %1282 = vmatprep.subr.mxu0 0.0
        %1283 = vmatpush1.xpose.msra.mxu0 0.0
        %1284 = vmatprep.subr.mxu0 0.0
        %1285 = vmatpush1.xpose.msra.mxu0 0.0
        %1286 = vmatprep.subr.mxu0 0.0
        %1287 = vmatpush1.xpose.msra.mxu0 0.0
        %1288 = vmatprep.subr.mxu0 0.0
        %1289 = vmatpush1.xpose.msra.mxu0 0.0
        %1290 = vmatprep.subr.mxu0 0.0
        %1291 = vmatpush1.xpose.msra.mxu0 0.0
        %1292 = vmatprep.subr.mxu0 0.0
        %1293 = vmatpush1.xpose.msra.mxu0 0.0
        %1294 = vmatprep.subr.mxu0 0.0
        %1295 = vmatpush1.xpose.msra.mxu0 0.0
        %1296 = vmatprep.subr.mxu0 0.0
        %1297 = vmatpush1.xpose.msra.mxu0 0.0
        %1298 = vmatprep.subr.mxu0 0.0
        %1299 = vmatpush1.xpose.msra.mxu0 0.0
        %1300 = vmatprep.subr.mxu0 0.0
        %1301 = vmatpush1.xpose.msra.mxu0 %v1268
        %1302 = vmatprep.subr.mxu0 0.0
        %1303 = vmatpush2.xpose.msra.mxu0 0.0
        %1304 = vmatprep.subr.mxu0 0.0
        %1305 = vmatpush2.xpose.msra.mxu0 0.0
        %1306 = vmatprep.subr.mxu0 0.0
        %1307 = vmatpush2.xpose.msra.mxu0 0.0
        %1308 = vmatprep.subr.mxu0 0.0
        %1309 = vmatpush2.xpose.msra.mxu0 0.0
        %1310 = vmatprep.subr.mxu0 0.0
        %1311 = vmatpush2.xpose.msra.mxu0 0.0
        %1312 = vmatprep.subr.mxu0 0.0
        %1313 = vmatpush2.xpose.msra.mxu0 0.0
        %1314 = vmatprep.subr.mxu0 0.0
        %1315 = vmatpush2.xpose.msra.mxu0 0.0
        %1316 = vmatprep.subr.mxu0 0.0
        %1317 = vmatpush2.xpose.msra.mxu0 0.0
        %1318 = vmatprep.subr.mxu0 0.0
        %1319 = vmatpush2.xpose.msra.mxu0 0.0
        %1320 = vmatprep.subr.mxu0 0.0
        %1321 = vmatpush2.xpose.msra.mxu0 0.0
        %1322 = vmatprep.subr.mxu0 0.0
        %1323 = vmatpush2.xpose.msra.mxu0 0.0
        %1324 = vmatprep.subr.mxu0 0.0
        %1325 = vmatpush2.xpose.msra.mxu0 0.0
        %1326 = vmatprep.subr.mxu0 0.0
        %1327 = vmatpush2.xpose.msra.mxu0 0.0
        %1328 = vmatprep.subr.mxu0 0.0
        %1329 = vmatpush2.xpose.msra.mxu0 0.0
        %1330 = vmatprep.subr.mxu0 0.0
        %1331 = vmatpush2.xpose.msra.mxu0 0.0
        %1332 = vmatprep.subr.mxu0 0.0
        %1333 = vmatpush2.xpose.msra.mxu0 0.0
        %1334 = vmatprep.mubr.f32.mxu0 0.0
        %1335 = vmatmul.mubr.f32.gmra.mxu0 %v1266
        %v1336 = vpop.f32.mrf.mxu0
        %v1337 = vadd.f32 0.0, %v1336
        %v1338 = vpop.f32.mrf.mxu0
        %1339 = vdwg.mxu0
        %v1340 = vmul.f32 %v1337, 0.35355338
        %v1341 = vadd.f32 %v1340, %v695
        %v1342 = vsel %vm615, %v1341, -inf
        %1343 = vmax.xlane.f32.xlu0 %v1342
        %v1344 = vpop.xlane.xlu0 %1343
        %v1345 = vsub.f32 %v1341, %v1344
        %v1346 = vmul.f32 %v1345, 1.442695
        %v1347 = vpow.pop %v1346
        %v1348 = vsel %vm615, %v1347, 0.0
        %1349 = vadd.xlane.f32.xlu0 %v1348
        %v1350 = vpop.xlane.xlu0 %1349
        %v1351 = vrcp.pop %v1350
        %v1352 = vmul.f32 %v1347, %v1351
        %1353 = vrot.lane.b32.xlu0 %v602, 40
        %v1354 = vpop.permute.xlu0 %1353
        %v1357 = vsel %vm615, %v1352, 0
        %1359 = vmatprep.subr.mxu0 0.0
        %1360 = vmatpush1.msra.mxu0 0.0
        %1361 = vmatprep.subr.mxu0 0.0
        %1362 = vmatpush1.msra.mxu0 0.0
        %1363 = vmatprep.subr.mxu0 0.0
        %1364 = vmatpush1.msra.mxu0 0.0
        %1365 = vmatprep.subr.mxu0 0.0
        %1366 = vmatpush1.msra.mxu0 0.0
        %1367 = vmatprep.subr.mxu0 0.0
        %1368 = vmatpush1.msra.mxu0 0.0
        %1369 = vmatprep.subr.mxu0 0.0
        %1370 = vmatpush1.msra.mxu0 0.0
        %1371 = vmatprep.subr.mxu0 0.0
        %1372 = vmatpush1.msra.mxu0 0.0
        %1373 = vmatprep.subr.mxu0 0.0
        %1374 = vmatpush1.msra.mxu0 0.0
        %1375 = vmatprep.subr.mxu0 0.0
        %1376 = vmatpush1.msra.mxu0 0.0
        %1377 = vmatprep.subr.mxu0 0.0
        %1378 = vmatpush1.msra.mxu0 0.0
        %1379 = vmatprep.subr.mxu0 0.0
        %1380 = vmatpush1.msra.mxu0 0.0
        %1381 = vmatprep.subr.mxu0 0.0
        %1382 = vmatpush1.msra.mxu0 0.0
        %1383 = vmatprep.subr.mxu0 0.0
        %1384 = vmatpush1.msra.mxu0 0.0
        %1385 = vmatprep.subr.mxu0 0.0
        %1386 = vmatpush1.msra.mxu0 0.0
        %1387 = vmatprep.subr.mxu0 0.0
        %1388 = vmatpush1.msra.mxu0 0.0
        %1389 = vmatprep.subr.mxu0 0.0
        %1390 = vmatpush1.msra.mxu0 %v1354
        %1391 = vmatprep.subr.mxu0 0.0
        %1392 = vmatpush2.msra.mxu0 0.0
        %1393 = vmatprep.subr.mxu0 0.0
        %1394 = vmatpush2.msra.mxu0 0.0
        %1395 = vmatprep.subr.mxu0 0.0
        %1396 = vmatpush2.msra.mxu0 0.0
        %1397 = vmatprep.subr.mxu0 0.0
        %1398 = vmatpush2.msra.mxu0 0.0
        %1399 = vmatprep.subr.mxu0 0.0
        %1400 = vmatpush2.msra.mxu0 0.0
        %1401 = vmatprep.subr.mxu0 0.0
        %1402 = vmatpush2.msra.mxu0 0.0
        %1403 = vmatprep.subr.mxu0 0.0
        %1404 = vmatpush2.msra.mxu0 0.0
        %1405 = vmatprep.subr.mxu0 0.0
        %1406 = vmatpush2.msra.mxu0 0.0
        %1407 = vmatprep.subr.mxu0 0.0
        %1408 = vmatpush2.msra.mxu0 0.0
        %1409 = vmatprep.subr.mxu0 0.0
        %1410 = vmatpush2.msra.mxu0 0.0
        %1411 = vmatprep.subr.mxu0 0.0
        %1412 = vmatpush2.msra.mxu0 0.0
        %1413 = vmatprep.subr.mxu0 0.0
        %1414 = vmatpush2.msra.mxu0 0.0
        %1415 = vmatprep.subr.mxu0 0.0
        %1416 = vmatpush2.msra.mxu0 0.0
        %1417 = vmatprep.subr.mxu0 0.0
        %1418 = vmatpush2.msra.mxu0 0.0
        %1419 = vmatprep.subr.mxu0 0.0
        %1420 = vmatpush2.msra.mxu0 0.0
        %1421 = vmatprep.subr.mxu0 0.0
        %1422 = vmatpush2.msra.mxu0 0.0
        %1423 = vmatprep.mubr.f32.mxu0 0.0
        %1424 = vmatmul.mubr.f32.gmra.mxu0 %v1357
        %v1425 = vpop.f32.mrf.mxu0
        %v1426 = vadd.f32 0.0, %v1425
        %v1427 = vpop.f32.mrf.mxu0
        %1428 = vdwg.mxu0
        %v1429 = vpack.c.bf16 %v1426, %v1426
        %v1431 = vsel %vm615, %v1429, 0
        %v1434 = vsel %vm957, %v611, 0
        %1436 = vmatprep.subr.bf16.mxu0 0
        %1437 = vmatpush1.bf16.msra.mxu0 0
        %1438 = vmatprep.subr.bf16.mxu0 0
        %1439 = vmatpush1.bf16.msra.mxu0 0
        %1440 = vmatprep.subr.bf16.mxu0 0
        %1441 = vmatpush1.bf16.msra.mxu0 0
        %1442 = vmatprep.subr.bf16.mxu0 0
        %1443 = vmatpush1.bf16.msra.mxu0 0
        %1444 = vmatprep.subr.bf16.mxu0 0
        %1445 = vmatpush1.bf16.msra.mxu0 0
        %1446 = vmatprep.subr.bf16.mxu0 0
        %1447 = vmatpush1.bf16.msra.mxu0 0
        %1448 = vmatprep.subr.bf16.mxu0 0
        %1449 = vmatpush1.bf16.msra.mxu0 0
        %1450 = vmatprep.subr.bf16.mxu0 0
        %1451 = vmatpush1.bf16.msra.mxu0 %v1434
        %1452 = vmatprep.subr.bf16.mxu0 0
        %1453 = vmatpush2.bf16.msra.mxu0 0
        %1454 = vmatprep.subr.bf16.mxu0 0
        %1455 = vmatpush2.bf16.msra.mxu0 0
        %1456 = vmatprep.subr.bf16.mxu0 0
        %1457 = vmatpush2.bf16.msra.mxu0 0
        %1458 = vmatprep.subr.bf16.mxu0 0
        %1459 = vmatpush2.bf16.msra.mxu0 0
        %1460 = vmatprep.subr.bf16.mxu0 0
        %1461 = vmatpush2.bf16.msra.mxu0 0
        %1462 = vmatprep.subr.bf16.mxu0 0
        %1463 = vmatpush2.bf16.msra.mxu0 0
        %1464 = vmatprep.subr.bf16.mxu0 0
        %1465 = vmatpush2.bf16.msra.mxu0 0
        %1466 = vmatprep.subr.bf16.mxu0 0
        %1467 = vmatpush2.bf16.msra.mxu0 0
        %1468 = vmatprep.mubr.bf16.mxu0 0
        %1469 = vmatmul.mubr.bf16.gmra.mxu0 %v1431
        %v1470 = vpop.f32.mrf.mxu0
        %v1471 = vadd.f32 0.0, %v1470
        %v1472 = vpop.f32.mrf.mxu0
        %v1473 = vpop.f32.mrf.mxu0
        %v1474 = vpop.f32.mrf.mxu0
        %1475 = vdwg.mxu0
        %v1476 = vadd.f32 %v1261, %v1471
        %v1477 = vadd.f32 %v477, %v1476
        %v1478 = vlaneseq
        %v1479 = vshrl.u32 %v1478, 7
        %v1480 = vsub.s32 4, %v1479
        %v1481 = vrot.slane %v476, %v1480
        %v1482 = vadd.f32 %v1477, %v1481
        %1483 = vst.msk [vmem:[#allocation5] sm:$0xff] %vm485, %v1482
        %1485 = vrot.lane.b32.xlu0 %v605, 96
        %v1486 = vpop.permute.xlu0 %1485
        %v1487 = vsel %vm615, %v605, 0
        %v1489 = vsel %vm615, %v1486, 0
        %1491 = vmatprep.subr.mxu0 0.0
        %1492 = vmatpush1.xpose.msra.mxu0 0.0
        %1493 = vmatprep.subr.mxu0 0.0
        %1494 = vmatpush1.xpose.msra.mxu0 0.0
        %1495 = vmatprep.subr.mxu0 0.0
        %1496 = vmatpush1.xpose.msra.mxu0 0.0
        %1497 = vmatprep.subr.mxu0 0.0
        %1498 = vmatpush1.xpose.msra.mxu0 0.0
        %1499 = vmatprep.subr.mxu0 0.0
        %1500 = vmatpush1.xpose.msra.mxu0 0.0
        %1501 = vmatprep.subr.mxu0 0.0
        %1502 = vmatpush1.xpose.msra.mxu0 0.0
        %1503 = vmatprep.subr.mxu0 0.0
        %1504 = vmatpush1.xpose.msra.mxu0 0.0
        %1505 = vmatprep.subr.mxu0 0.0
        %1506 = vmatpush1.xpose.msra.mxu0 0.0
        %1507 = vmatprep.subr.mxu0 0.0
        %1508 = vmatpush1.xpose.msra.mxu0 0.0
        %1509 = vmatprep.subr.mxu0 0.0
        %1510 = vmatpush1.xpose.msra.mxu0 0.0
        %1511 = vmatprep.subr.mxu0 0.0
        %1512 = vmatpush1.xpose.msra.mxu0 0.0
        %1513 = vmatprep.subr.mxu0 0.0
        %1514 = vmatpush1.xpose.msra.mxu0 0.0
        %1515 = vmatprep.subr.mxu0 0.0
        %1516 = vmatpush1.xpose.msra.mxu0 0.0
        %1517 = vmatprep.subr.mxu0 0.0
        %1518 = vmatpush1.xpose.msra.mxu0 0.0
        %1519 = vmatprep.subr.mxu0 0.0
        %1520 = vmatpush1.xpose.msra.mxu0 0.0
        %1521 = vmatprep.subr.mxu0 0.0
        %1522 = vmatpush1.xpose.msra.mxu0 %v1489
        %1523 = vmatprep.subr.mxu0 0.0
        %1524 = vmatpush2.xpose.msra.mxu0 0.0
        %1525 = vmatprep.subr.mxu0 0.0
        %1526 = vmatpush2.xpose.msra.mxu0 0.0
        %1527 = vmatprep.subr.mxu0 0.0
        %1528 = vmatpush2.xpose.msra.mxu0 0.0
        %1529 = vmatprep.subr.mxu0 0.0
        %1530 = vmatpush2.xpose.msra.mxu0 0.0
        %1531 = vmatprep.subr.mxu0 0.0
        %1532 = vmatpush2.xpose.msra.mxu0 0.0
        %1533 = vmatprep.subr.mxu0 0.0
        %1534 = vmatpush2.xpose.msra.mxu0 0.0
        %1535 = vmatprep.subr.mxu0 0.0
        %1536 = vmatpush2.xpose.msra.mxu0 0.0
        %1537 = vmatprep.subr.mxu0 0.0
        %1538 = vmatpush2.xpose.msra.mxu0 0.0
        %1539 = vmatprep.subr.mxu0 0.0
        %1540 = vmatpush2.xpose.msra.mxu0 0.0
        %1541 = vmatprep.subr.mxu0 0.0
        %1542 = vmatpush2.xpose.msra.mxu0 0.0
        %1543 = vmatprep.subr.mxu0 0.0
        %1544 = vmatpush2.xpose.msra.mxu0 0.0
        %1545 = vmatprep.subr.mxu0 0.0
        %1546 = vmatpush2.xpose.msra.mxu0 0.0
        %1547 = vmatprep.subr.mxu0 0.0
        %1548 = vmatpush2.xpose.msra.mxu0 0.0
        %1549 = vmatprep.subr.mxu0 0.0
        %1550 = vmatpush2.xpose.msra.mxu0 0.0
        %1551 = vmatprep.subr.mxu0 0.0
        %1552 = vmatpush2.xpose.msra.mxu0 0.0
        %1553 = vmatprep.subr.mxu0 0.0
        %1554 = vmatpush2.xpose.msra.mxu0 0.0
        %1555 = vmatprep.mubr.f32.mxu0 0.0
        %1556 = vmatmul.mubr.f32.gmra.mxu0 %v1487
        %v1557 = vpop.f32.mrf.mxu0
        %v1558 = vadd.f32 0.0, %v1557
        %v1559 = vpop.f32.mrf.mxu0
        %1560 = vdwg.mxu0
        %v1561 = vmul.f32 %v1558, 0.35355338
        %v1563 = vlaneseq
        %v1564 = vshrl.u32 %v1563, 7
        %v1565 = vsub.s32 0, %v1564
        %v1566 = vrot.slane %v484, %v1565
        %v1568 = vadd.f32 %v1561, %v1566
        %v1569 = vsel %vm615, %v1568, -inf
        %1570 = vmax.xlane.f32.xlu0 %v1569
        %v1571 = vpop.xlane.xlu0 %1570
        %v1572 = vsub.f32 %v1568, %v1571
        %v1573 = vmul.f32 %v1572, 1.442695
        %v1574 = vpow.pop %v1573
        %v1575 = vsel %vm615, %v1574, 0.0
        %1576 = vadd.xlane.f32.xlu0 %v1575
        %v1577 = vpop.xlane.xlu0 %1576
        %v1578 = vrcp.pop %v1577
        %v1579 = vmul.f32 %v1574, %v1578
        %1580 = vrot.lane.b32.xlu0 %v605, 64
        %v1581 = vpop.permute.xlu0 %1580
        %v1584 = vsel %vm615, %v1579, 0
        %1586 = vmatprep.subr.mxu0 0.0
        %1587 = vmatpush1.msra.mxu0 0.0
        %1588 = vmatprep.subr.mxu0 0.0
        %1589 = vmatpush1.msra.mxu0 0.0
        %1590 = vmatprep.subr.mxu0 0.0
        %1591 = vmatpush1.msra.mxu0 0.0
        %1592 = vmatprep.subr.mxu0 0.0
        %1593 = vmatpush1.msra.mxu0 0.0
        %1594 = vmatprep.subr.mxu0 0.0
        %1595 = vmatpush1.msra.mxu0 0.0
        %1596 = vmatprep.subr.mxu0 0.0
        %1597 = vmatpush1.msra.mxu0 0.0
        %1598 = vmatprep.subr.mxu0 0.0
        %1599 = vmatpush1.msra.mxu0 0.0
        %1600 = vmatprep.subr.mxu0 0.0
        %1601 = vmatpush1.msra.mxu0 0.0
        %1602 = vmatprep.subr.mxu0 0.0
        %1603 = vmatpush1.msra.mxu0 0.0
        %1604 = vmatprep.subr.mxu0 0.0
        %1605 = vmatpush1.msra.mxu0 0.0
        %1606 = vmatprep.subr.mxu0 0.0
        %1607 = vmatpush1.msra.mxu0 0.0
        %1608 = vmatprep.subr.mxu0 0.0
        %1609 = vmatpush1.msra.mxu0 0.0
        %1610 = vmatprep.subr.mxu0 0.0
        %1611 = vmatpush1.msra.mxu0 0.0
        %1612 = vmatprep.subr.mxu0 0.0
        %1613 = vmatpush1.msra.mxu0 0.0
        %1614 = vmatprep.subr.mxu0 0.0
        %1615 = vmatpush1.msra.mxu0 0.0
        %1616 = vmatprep.subr.mxu0 0.0
        %1617 = vmatpush1.msra.mxu0 %v1581
        %1618 = vmatprep.subr.mxu0 0.0
        %1619 = vmatpush2.msra.mxu0 0.0
        %1620 = vmatprep.subr.mxu0 0.0
        %1621 = vmatpush2.msra.mxu0 0.0
        %1622 = vmatprep.subr.mxu0 0.0
        %1623 = vmatpush2.msra.mxu0 0.0
        %1624 = vmatprep.subr.mxu0 0.0
        %1625 = vmatpush2.msra.mxu0 0.0
        %1626 = vmatprep.subr.mxu0 0.0
        %1627 = vmatpush2.msra.mxu0 0.0
        %1628 = vmatprep.subr.mxu0 0.0
        %1629 = vmatpush2.msra.mxu0 0.0
        %1630 = vmatprep.subr.mxu0 0.0
        %1631 = vmatpush2.msra.mxu0 0.0
        %1632 = vmatprep.subr.mxu0 0.0
        %1633 = vmatpush2.msra.mxu0 0.0
        %1634 = vmatprep.subr.mxu0 0.0
        %1635 = vmatpush2.msra.mxu0 0.0
        %1636 = vmatprep.subr.mxu0 0.0
        %1637 = vmatpush2.msra.mxu0 0.0
        %1638 = vmatprep.subr.mxu0 0.0
        %1639 = vmatpush2.msra.mxu0 0.0
        %1640 = vmatprep.subr.mxu0 0.0
        %1641 = vmatpush2.msra.mxu0 0.0
        %1642 = vmatprep.subr.mxu0 0.0
        %1643 = vmatpush2.msra.mxu0 0.0
        %1644 = vmatprep.subr.mxu0 0.0
        %1645 = vmatpush2.msra.mxu0 0.0
        %1646 = vmatprep.subr.mxu0 0.0
        %1647 = vmatpush2.msra.mxu0 0.0
        %1648 = vmatprep.subr.mxu0 0.0
        %1649 = vmatpush2.msra.mxu0 0.0
        %1650 = vmatprep.mubr.f32.mxu0 0.0
        %1651 = vmatmul.mubr.f32.gmra.mxu0 %v1584
        %v1652 = vpop.f32.mrf.mxu0
        %v1653 = vadd.f32 0.0, %v1652
        %v1654 = vpop.f32.mrf.mxu0
        %1655 = vdwg.mxu0
        %v1656 = vpack.c.bf16 %v1653, %v1653
        %1657 = vrot.lane.b32.xlu0 %v605, 120
        %v1658 = vpop.permute.xlu0 %1657
        %1659 = vrot.lane.b32.xlu0 %v605, 88
        %v1660 = vpop.permute.xlu0 %1659
        %v1661 = vsel %vm615, %v1658, 0
        %v1663 = vsel %vm615, %v1660, 0
        %1665 = vmatprep.subr.mxu0 0.0
        %1666 = vmatpush1.xpose.msra.mxu0 0.0
        %1667 = vmatprep.subr.mxu0 0.0
        %1668 = vmatpush1.xpose.msra.mxu0 0.0
        %1669 = vmatprep.subr.mxu0 0.0
        %1670 = vmatpush1.xpose.msra.mxu0 0.0
        %1671 = vmatprep.subr.mxu0 0.0
        %1672 = vmatpush1.xpose.msra.mxu0 0.0
        %1673 = vmatprep.subr.mxu0 0.0
        %1674 = vmatpush1.xpose.msra.mxu0 0.0
        %1675 = vmatprep.subr.mxu0 0.0
        %1676 = vmatpush1.xpose.msra.mxu0 0.0
        %1677 = vmatprep.subr.mxu0 0.0
        %1678 = vmatpush1.xpose.msra.mxu0 0.0
        %1679 = vmatprep.subr.mxu0 0.0
        %1680 = vmatpush1.xpose.msra.mxu0 0.0
        %1681 = vmatprep.subr.mxu0 0.0
        %1682 = vmatpush1.xpose.msra.mxu0 0.0
        %1683 = vmatprep.subr.mxu0 0.0
        %1684 = vmatpush1.xpose.msra.mxu0 0.0
        %1685 = vmatprep.subr.mxu0 0.0
        %1686 = vmatpush1.xpose.msra.mxu0 0.0
        %1687 = vmatprep.subr.mxu0 0.0
        %1688 = vmatpush1.xpose.msra.mxu0 0.0
        %1689 = vmatprep.subr.mxu0 0.0
        %1690 = vmatpush1.xpose.msra.mxu0 0.0
        %1691 = vmatprep.subr.mxu0 0.0
        %1692 = vmatpush1.xpose.msra.mxu0 0.0
        %1693 = vmatprep.subr.mxu0 0.0
        %1694 = vmatpush1.xpose.msra.mxu0 0.0
        %1695 = vmatprep.subr.mxu0 0.0
        %1696 = vmatpush1.xpose.msra.mxu0 %v1663
        %1697 = vmatprep.subr.mxu0 0.0
        %1698 = vmatpush2.xpose.msra.mxu0 0.0
        %1699 = vmatprep.subr.mxu0 0.0
        %1700 = vmatpush2.xpose.msra.mxu0 0.0
        %1701 = vmatprep.subr.mxu0 0.0
        %1702 = vmatpush2.xpose.msra.mxu0 0.0
        %1703 = vmatprep.subr.mxu0 0.0
        %1704 = vmatpush2.xpose.msra.mxu0 0.0
        %1705 = vmatprep.subr.mxu0 0.0
        %1706 = vmatpush2.xpose.msra.mxu0 0.0
        %1707 = vmatprep.subr.mxu0 0.0
        %1708 = vmatpush2.xpose.msra.mxu0 0.0
        %1709 = vmatprep.subr.mxu0 0.0
        %1710 = vmatpush2.xpose.msra.mxu0 0.0
        %1711 = vmatprep.subr.mxu0 0.0
        %1712 = vmatpush2.xpose.msra.mxu0 0.0
        %1713 = vmatprep.subr.mxu0 0.0
        %1714 = vmatpush2.xpose.msra.mxu0 0.0
        %1715 = vmatprep.subr.mxu0 0.0
        %1716 = vmatpush2.xpose.msra.mxu0 0.0
        %1717 = vmatprep.subr.mxu0 0.0
        %1718 = vmatpush2.xpose.msra.mxu0 0.0
        %1719 = vmatprep.subr.mxu0 0.0
        %1720 = vmatpush2.xpose.msra.mxu0 0.0
        %1721 = vmatprep.subr.mxu0 0.0
        %1722 = vmatpush2.xpose.msra.mxu0 0.0
        %1723 = vmatprep.subr.mxu0 0.0
        %1724 = vmatpush2.xpose.msra.mxu0 0.0
        %1725 = vmatprep.subr.mxu0 0.0
        %1726 = vmatpush2.xpose.msra.mxu0 0.0
        %1727 = vmatprep.subr.mxu0 0.0
        %1728 = vmatpush2.xpose.msra.mxu0 0.0
        %1729 = vmatprep.mubr.f32.mxu0 0.0
        %1730 = vmatmul.mubr.f32.gmra.mxu0 %v1661
        %v1731 = vpop.f32.mrf.mxu0
        %v1732 = vadd.f32 0.0, %v1731
        %v1733 = vpop.f32.mrf.mxu0
        %1734 = vdwg.mxu0
        %v1735 = vmul.f32 %v1732, 0.35355338
        %v1736 = vadd.f32 %v1735, %v1566
        %v1737 = vsel %vm615, %v1736, -inf
        %1738 = vmax.xlane.f32.xlu0 %v1737
        %v1739 = vpop.xlane.xlu0 %1738
        %v1740 = vsub.f32 %v1736, %v1739
        %v1741 = vmul.f32 %v1740, 1.442695
        %v1742 = vpow.pop %v1741
        %v1743 = vsel %vm615, %v1742, 0.0
        %1744 = vadd.xlane.f32.xlu0 %v1743
        %v1745 = vpop.xlane.xlu0 %1744
        %v1746 = vrcp.pop %v1745
        %v1747 = vmul.f32 %v1742, %v1746
        %1748 = vrot.lane.b32.xlu0 %v605, 56
        %v1749 = vpop.permute.xlu0 %1748
        %v1752 = vsel %vm615, %v1747, 0
        %1754 = vmatprep.subr.mxu0 0.0
        %1755 = vmatpush1.msra.mxu0 0.0
        %1756 = vmatprep.subr.mxu0 0.0
        %1757 = vmatpush1.msra.mxu0 0.0
        %1758 = vmatprep.subr.mxu0 0.0
        %1759 = vmatpush1.msra.mxu0 0.0
        %1760 = vmatprep.subr.mxu0 0.0
        %1761 = vmatpush1.msra.mxu0 0.0
        %1762 = vmatprep.subr.mxu0 0.0
        %1763 = vmatpush1.msra.mxu0 0.0
        %1764 = vmatprep.subr.mxu0 0.0
        %1765 = vmatpush1.msra.mxu0 0.0
        %1766 = vmatprep.subr.mxu0 0.0
        %1767 = vmatpush1.msra.mxu0 0.0
        %1768 = vmatprep.subr.mxu0 0.0
        %1769 = vmatpush1.msra.mxu0 0.0
        %1770 = vmatprep.subr.mxu0 0.0
        %1771 = vmatpush1.msra.mxu0 0.0
        %1772 = vmatprep.subr.mxu0 0.0
        %1773 = vmatpush1.msra.mxu0 0.0
        %1774 = vmatprep.subr.mxu0 0.0
        %1775 = vmatpush1.msra.mxu0 0.0
        %1776 = vmatprep.subr.mxu0 0.0
        %1777 = vmatpush1.msra.mxu0 0.0
        %1778 = vmatprep.subr.mxu0 0.0
        %1779 = vmatpush1.msra.mxu0 0.0
        %1780 = vmatprep.subr.mxu0 0.0
        %1781 = vmatpush1.msra.mxu0 0.0
        %1782 = vmatprep.subr.mxu0 0.0
        %1783 = vmatpush1.msra.mxu0 0.0
        %1784 = vmatprep.subr.mxu0 0.0
        %1785 = vmatpush1.msra.mxu0 %v1749
        %1786 = vmatprep.subr.mxu0 0.0
        %1787 = vmatpush2.msra.mxu0 0.0
        %1788 = vmatprep.subr.mxu0 0.0
        %1789 = vmatpush2.msra.mxu0 0.0
        %1790 = vmatprep.subr.mxu0 0.0
        %1791 = vmatpush2.msra.mxu0 0.0
        %1792 = vmatprep.subr.mxu0 0.0
        %1793 = vmatpush2.msra.mxu0 0.0
        %1794 = vmatprep.subr.mxu0 0.0
        %1795 = vmatpush2.msra.mxu0 0.0
        %1796 = vmatprep.subr.mxu0 0.0
        %1797 = vmatpush2.msra.mxu0 0.0
        %1798 = vmatprep.subr.mxu0 0.0
        %1799 = vmatpush2.msra.mxu0 0.0
        %1800 = vmatprep.subr.mxu0 0.0
        %1801 = vmatpush2.msra.mxu0 0.0
        %1802 = vmatprep.subr.mxu0 0.0
        %1803 = vmatpush2.msra.mxu0 0.0
        %1804 = vmatprep.subr.mxu0 0.0
        %1805 = vmatpush2.msra.mxu0 0.0
        %1806 = vmatprep.subr.mxu0 0.0
        %1807 = vmatpush2.msra.mxu0 0.0
        %1808 = vmatprep.subr.mxu0 0.0
        %1809 = vmatpush2.msra.mxu0 0.0
        %1810 = vmatprep.subr.mxu0 0.0
        %1811 = vmatpush2.msra.mxu0 0.0
        %1812 = vmatprep.subr.mxu0 0.0
        %1813 = vmatpush2.msra.mxu0 0.0
        %1814 = vmatprep.subr.mxu0 0.0
        %1815 = vmatpush2.msra.mxu0 0.0
        %1816 = vmatprep.subr.mxu0 0.0
        %1817 = vmatpush2.msra.mxu0 0.0
        %1818 = vmatprep.mubr.f32.mxu0 0.0
        %1819 = vmatmul.mubr.f32.gmra.mxu0 %v1752
        %v1820 = vpop.f32.mrf.mxu0
        %v1821 = vadd.f32 0.0, %v1820
        %v1822 = vpop.f32.mrf.mxu0
        %1823 = vdwg.mxu0
        %v1824 = vpack.c.bf16 %v1821, %v1821
        %v1826 = vsel %vm615, %v1824, 0
        %1828 = vmatprep.subr.bf16.mxu0 0
        %1829 = vmatpush1.bf16.msra.mxu0 0
        %1830 = vmatprep.subr.bf16.mxu0 0
        %1831 = vmatpush1.bf16.msra.mxu0 0
        %1832 = vmatprep.subr.bf16.mxu0 0
        %1833 = vmatpush1.bf16.msra.mxu0 0
        %1834 = vmatprep.subr.bf16.mxu0 0
        %1835 = vmatpush1.bf16.msra.mxu0 0
        %1836 = vmatprep.subr.bf16.mxu0 0
        %1837 = vmatpush1.bf16.msra.mxu0 0
        %1838 = vmatprep.subr.bf16.mxu0 0
        %1839 = vmatpush1.bf16.msra.mxu0 0
        %1840 = vmatprep.subr.bf16.mxu0 0
        %1841 = vmatpush1.bf16.msra.mxu0 0
        %1842 = vmatprep.subr.bf16.mxu0 0
        %1843 = vmatpush1.bf16.msra.mxu0 %v959
        %1844 = vmatprep.subr.bf16.mxu0 0
        %1845 = vmatpush2.bf16.msra.mxu0 0
        %1846 = vmatprep.subr.bf16.mxu0 0
        %1847 = vmatpush2.bf16.msra.mxu0 0
        %1848 = vmatprep.subr.bf16.mxu0 0
        %1849 = vmatpush2.bf16.msra.mxu0 0
        %1850 = vmatprep.subr.bf16.mxu0 0
        %1851 = vmatpush2.bf16.msra.mxu0 0
        %1852 = vmatprep.subr.bf16.mxu0 0
        %1853 = vmatpush2.bf16.msra.mxu0 0
        %1854 = vmatprep.subr.bf16.mxu0 0
        %1855 = vmatpush2.bf16.msra.mxu0 0
        %1856 = vmatprep.subr.bf16.mxu0 0
        %1857 = vmatpush2.bf16.msra.mxu0 0
        %1858 = vmatprep.subr.bf16.mxu0 0
        %1859 = vmatpush2.bf16.msra.mxu0 0
        %1860 = vmatprep.mubr.bf16.mxu0 0
        %1861 = vmatmul.mubr.bf16.gmra.mxu0 %v1826
        %v1862 = vpop.f32.mrf.mxu0
        %v1863 = vadd.f32 0.0, %v1862
        %v1864 = vpop.f32.mrf.mxu0
        %v1865 = vpop.f32.mrf.mxu0
        %v1866 = vpop.f32.mrf.mxu0
        %1867 = vdwg.mxu0
        %v1869 = vsel %vm615, %v1656, 0
        %1871 = vmatprep.subr.bf16.mxu0 0
        %1872 = vmatpush1.bf16.msra.mxu0 0
        %1873 = vmatprep.subr.bf16.mxu0 0
        %1874 = vmatpush1.bf16.msra.mxu0 0
        %1875 = vmatprep.subr.bf16.mxu0 0
        %1876 = vmatpush1.bf16.msra.mxu0 0
        %1877 = vmatprep.subr.bf16.mxu0 0
        %1878 = vmatpush1.bf16.msra.mxu0 0
        %1879 = vmatprep.subr.bf16.mxu0 0
        %1880 = vmatpush1.bf16.msra.mxu0 0
        %1881 = vmatprep.subr.bf16.mxu0 0
        %1882 = vmatpush1.bf16.msra.mxu0 0
        %1883 = vmatprep.subr.bf16.mxu0 0
        %1884 = vmatpush1.bf16.msra.mxu0 0
        %1885 = vmatprep.subr.bf16.mxu0 0
        %1886 = vmatpush1.bf16.msra.mxu0 %v1005
        %1887 = vmatprep.subr.bf16.mxu0 0
        %1888 = vmatpush2.bf16.msra.mxu0 0
        %1889 = vmatprep.subr.bf16.mxu0 0
        %1890 = vmatpush2.bf16.msra.mxu0 0
        %1891 = vmatprep.subr.bf16.mxu0 0
        %1892 = vmatpush2.bf16.msra.mxu0 0
        %1893 = vmatprep.subr.bf16.mxu0 0
        %1894 = vmatpush2.bf16.msra.mxu0 0
        %1895 = vmatprep.subr.bf16.mxu0 0
        %1896 = vmatpush2.bf16.msra.mxu0 0
        %1897 = vmatprep.subr.bf16.mxu0 0
        %1898 = vmatpush2.bf16.msra.mxu0 0
        %1899 = vmatprep.subr.bf16.mxu0 0
        %1900 = vmatpush2.bf16.msra.mxu0 0
        %1901 = vmatprep.subr.bf16.mxu0 0
        %1902 = vmatpush2.bf16.msra.mxu0 0
        %1903 = vmatprep.mubr.bf16.mxu0 0
        %1904 = vmatmul.mubr.bf16.gmra.mxu0 %v1869
        %v1905 = vpop.f32.mrf.mxu0
        %v1906 = vadd.f32 %v1863, %v1905
        %v1907 = vpop.f32.mrf.mxu0
        %v1908 = vpop.f32.mrf.mxu0
        %v1909 = vpop.f32.mrf.mxu0
        %1910 = vdwg.mxu0
        %1911 = vrot.lane.b32.xlu0 %v605, 112
        %v1912 = vpop.permute.xlu0 %1911
        %1913 = vrot.lane.b32.xlu0 %v605, 80
        %v1914 = vpop.permute.xlu0 %1913
        %v1915 = vsel %vm615, %v1912, 0
        %v1917 = vsel %vm615, %v1914, 0
        %1919 = vmatprep.subr.mxu0 0.0
        %1920 = vmatpush1.xpose.msra.mxu0 0.0
        %1921 = vmatprep.subr.mxu0 0.0
        %1922 = vmatpush1.xpose.msra.mxu0 0.0
        %1923 = vmatprep.subr.mxu0 0.0
        %1924 = vmatpush1.xpose.msra.mxu0 0.0
        %1925 = vmatprep.subr.mxu0 0.0
        %1926 = vmatpush1.xpose.msra.mxu0 0.0
        %1927 = vmatprep.subr.mxu0 0.0
        %1928 = vmatpush1.xpose.msra.mxu0 0.0
        %1929 = vmatprep.subr.mxu0 0.0
        %1930 = vmatpush1.xpose.msra.mxu0 0.0
        %1931 = vmatprep.subr.mxu0 0.0
        %1932 = vmatpush1.xpose.msra.mxu0 0.0
        %1933 = vmatprep.subr.mxu0 0.0
        %1934 = vmatpush1.xpose.msra.mxu0 0.0
        %1935 = vmatprep.subr.mxu0 0.0
        %1936 = vmatpush1.xpose.msra.mxu0 0.0
        %1937 = vmatprep.subr.mxu0 0.0
        %1938 = vmatpush1.xpose.msra.mxu0 0.0
        %1939 = vmatprep.subr.mxu0 0.0
        %1940 = vmatpush1.xpose.msra.mxu0 0.0
        %1941 = vmatprep.subr.mxu0 0.0
        %1942 = vmatpush1.xpose.msra.mxu0 0.0
        %1943 = vmatprep.subr.mxu0 0.0
        %1944 = vmatpush1.xpose.msra.mxu0 0.0
        %1945 = vmatprep.subr.mxu0 0.0
        %1946 = vmatpush1.xpose.msra.mxu0 0.0
        %1947 = vmatprep.subr.mxu0 0.0
        %1948 = vmatpush1.xpose.msra.mxu0 0.0
        %1949 = vmatprep.subr.mxu0 0.0
        %1950 = vmatpush1.xpose.msra.mxu0 %v1917
        %1951 = vmatprep.subr.mxu0 0.0
        %1952 = vmatpush2.xpose.msra.mxu0 0.0
        %1953 = vmatprep.subr.mxu0 0.0
        %1954 = vmatpush2.xpose.msra.mxu0 0.0
        %1955 = vmatprep.subr.mxu0 0.0
        %1956 = vmatpush2.xpose.msra.mxu0 0.0
        %1957 = vmatprep.subr.mxu0 0.0
        %1958 = vmatpush2.xpose.msra.mxu0 0.0
        %1959 = vmatprep.subr.mxu0 0.0
        %1960 = vmatpush2.xpose.msra.mxu0 0.0
        %1961 = vmatprep.subr.mxu0 0.0
        %1962 = vmatpush2.xpose.msra.mxu0 0.0
        %1963 = vmatprep.subr.mxu0 0.0
        %1964 = vmatpush2.xpose.msra.mxu0 0.0
        %1965 = vmatprep.subr.mxu0 0.0
        %1966 = vmatpush2.xpose.msra.mxu0 0.0
        %1967 = vmatprep.subr.mxu0 0.0
        %1968 = vmatpush2.xpose.msra.mxu0 0.0
        %1969 = vmatprep.subr.mxu0 0.0
        %1970 = vmatpush2.xpose.msra.mxu0 0.0
        %1971 = vmatprep.subr.mxu0 0.0
        %1972 = vmatpush2.xpose.msra.mxu0 0.0
        %1973 = vmatprep.subr.mxu0 0.0
        %1974 = vmatpush2.xpose.msra.mxu0 0.0
        %1975 = vmatprep.subr.mxu0 0.0
        %1976 = vmatpush2.xpose.msra.mxu0 0.0
        %1977 = vmatprep.subr.mxu0 0.0
        %1978 = vmatpush2.xpose.msra.mxu0 0.0
        %1979 = vmatprep.subr.mxu0 0.0
        %1980 = vmatpush2.xpose.msra.mxu0 0.0
        %1981 = vmatprep.subr.mxu0 0.0
        %1982 = vmatpush2.xpose.msra.mxu0 0.0
        %1983 = vmatprep.mubr.f32.mxu0 0.0
        %1984 = vmatmul.mubr.f32.gmra.mxu0 %v1915
        %v1985 = vpop.f32.mrf.mxu0
        %v1986 = vadd.f32 0.0, %v1985
        %v1987 = vpop.f32.mrf.mxu0
        %1988 = vdwg.mxu0
        %v1989 = vmul.f32 %v1986, 0.35355338
        %v1990 = vadd.f32 %v1989, %v1566
        %v1991 = vsel %vm615, %v1990, -inf
        %1992 = vmax.xlane.f32.xlu0 %v1991
        %v1993 = vpop.xlane.xlu0 %1992
        %v1994 = vsub.f32 %v1990, %v1993
        %v1995 = vmul.f32 %v1994, 1.442695
        %v1996 = vpow.pop %v1995
        %v1997 = vsel %vm615, %v1996, 0.0
        %1998 = vadd.xlane.f32.xlu0 %v1997
        %v1999 = vpop.xlane.xlu0 %1998
        %v2000 = vrcp.pop %v1999
        %v2001 = vmul.f32 %v1996, %v2000
        %2002 = vrot.lane.b32.xlu0 %v605, 48
        %v2003 = vpop.permute.xlu0 %2002
        %v2006 = vsel %vm615, %v2001, 0
        %2008 = vmatprep.subr.mxu0 0.0
        %2009 = vmatpush1.msra.mxu0 0.0
        %2010 = vmatprep.subr.mxu0 0.0
        %2011 = vmatpush1.msra.mxu0 0.0
        %2012 = vmatprep.subr.mxu0 0.0
        %2013 = vmatpush1.msra.mxu0 0.0
        %2014 = vmatprep.subr.mxu0 0.0
        %2015 = vmatpush1.msra.mxu0 0.0
        %2016 = vmatprep.subr.mxu0 0.0
        %2017 = vmatpush1.msra.mxu0 0.0
        %2018 = vmatprep.subr.mxu0 0.0
        %2019 = vmatpush1.msra.mxu0 0.0
        %2020 = vmatprep.subr.mxu0 0.0
        %2021 = vmatpush1.msra.mxu0 0.0
        %2022 = vmatprep.subr.mxu0 0.0
        %2023 = vmatpush1.msra.mxu0 0.0
        %2024 = vmatprep.subr.mxu0 0.0
        %2025 = vmatpush1.msra.mxu0 0.0
        %2026 = vmatprep.subr.mxu0 0.0
        %2027 = vmatpush1.msra.mxu0 0.0
        %2028 = vmatprep.subr.mxu0 0.0
        %2029 = vmatpush1.msra.mxu0 0.0
        %2030 = vmatprep.subr.mxu0 0.0
        %2031 = vmatpush1.msra.mxu0 0.0
        %2032 = vmatprep.subr.mxu0 0.0
        %2033 = vmatpush1.msra.mxu0 0.0
        %2034 = vmatprep.subr.mxu0 0.0
        %2035 = vmatpush1.msra.mxu0 0.0
        %2036 = vmatprep.subr.mxu0 0.0
        %2037 = vmatpush1.msra.mxu0 0.0
        %2038 = vmatprep.subr.mxu0 0.0
        %2039 = vmatpush1.msra.mxu0 %v2003
        %2040 = vmatprep.subr.mxu0 0.0
        %2041 = vmatpush2.msra.mxu0 0.0
        %2042 = vmatprep.subr.mxu0 0.0
        %2043 = vmatpush2.msra.mxu0 0.0
        %2044 = vmatprep.subr.mxu0 0.0
        %2045 = vmatpush2.msra.mxu0 0.0
        %2046 = vmatprep.subr.mxu0 0.0
        %2047 = vmatpush2.msra.mxu0 0.0
        %2048 = vmatprep.subr.mxu0 0.0
        %2049 = vmatpush2.msra.mxu0 0.0
        %2050 = vmatprep.subr.mxu0 0.0
        %2051 = vmatpush2.msra.mxu0 0.0
        %2052 = vmatprep.subr.mxu0 0.0
        %2053 = vmatpush2.msra.mxu0 0.0
        %2054 = vmatprep.subr.mxu0 0.0
        %2055 = vmatpush2.msra.mxu0 0.0
        %2056 = vmatprep.subr.mxu0 0.0
        %2057 = vmatpush2.msra.mxu0 0.0
        %2058 = vmatprep.subr.mxu0 0.0
        %2059 = vmatpush2.msra.mxu0 0.0
        %2060 = vmatprep.subr.mxu0 0.0
        %2061 = vmatpush2.msra.mxu0 0.0
        %2062 = vmatprep.subr.mxu0 0.0
        %2063 = vmatpush2.msra.mxu0 0.0
        %2064 = vmatprep.subr.mxu0 0.0
        %2065 = vmatpush2.msra.mxu0 0.0
        %2066 = vmatprep.subr.mxu0 0.0
        %2067 = vmatpush2.msra.mxu0 0.0
        %2068 = vmatprep.subr.mxu0 0.0
        %2069 = vmatpush2.msra.mxu0 0.0
        %2070 = vmatprep.subr.mxu0 0.0
        %2071 = vmatpush2.msra.mxu0 0.0
        %2072 = vmatprep.mubr.f32.mxu0 0.0
        %2073 = vmatmul.mubr.f32.gmra.mxu0 %v2006
        %v2074 = vpop.f32.mrf.mxu0
        %v2075 = vadd.f32 0.0, %v2074
        %v2076 = vpop.f32.mrf.mxu0
        %2077 = vdwg.mxu0
        %v2078 = vpack.c.bf16 %v2075, %v2075
        %v2080 = vsel %vm615, %v2078, 0
        %2082 = vmatprep.subr.bf16.mxu0 0
        %2083 = vmatpush1.bf16.msra.mxu0 0
        %2084 = vmatprep.subr.bf16.mxu0 0
        %2085 = vmatpush1.bf16.msra.mxu0 0
        %2086 = vmatprep.subr.bf16.mxu0 0
        %2087 = vmatpush1.bf16.msra.mxu0 0
        %2088 = vmatprep.subr.bf16.mxu0 0
        %2089 = vmatpush1.bf16.msra.mxu0 0
        %2090 = vmatprep.subr.bf16.mxu0 0
        %2091 = vmatpush1.bf16.msra.mxu0 0
        %2092 = vmatprep.subr.bf16.mxu0 0
        %2093 = vmatpush1.bf16.msra.mxu0 0
        %2094 = vmatprep.subr.bf16.mxu0 0
        %2095 = vmatpush1.bf16.msra.mxu0 0
        %2096 = vmatprep.subr.bf16.mxu0 0
        %2097 = vmatpush1.bf16.msra.mxu0 %v1219
        %2098 = vmatprep.subr.bf16.mxu0 0
        %2099 = vmatpush2.bf16.msra.mxu0 0
        %2100 = vmatprep.subr.bf16.mxu0 0
        %2101 = vmatpush2.bf16.msra.mxu0 0
        %2102 = vmatprep.subr.bf16.mxu0 0
        %2103 = vmatpush2.bf16.msra.mxu0 0
        %2104 = vmatprep.subr.bf16.mxu0 0
        %2105 = vmatpush2.bf16.msra.mxu0 0
        %2106 = vmatprep.subr.bf16.mxu0 0
        %2107 = vmatpush2.bf16.msra.mxu0 0
        %2108 = vmatprep.subr.bf16.mxu0 0
        %2109 = vmatpush2.bf16.msra.mxu0 0
        %2110 = vmatprep.subr.bf16.mxu0 0
        %2111 = vmatpush2.bf16.msra.mxu0 0
        %2112 = vmatprep.subr.bf16.mxu0 0
        %2113 = vmatpush2.bf16.msra.mxu0 0
        %2114 = vmatprep.mubr.bf16.mxu0 0
        %2115 = vmatmul.mubr.bf16.gmra.mxu0 %v2080
        %v2116 = vpop.f32.mrf.mxu0
        %v2117 = vadd.f32 0.0, %v2116
        %v2118 = vpop.f32.mrf.mxu0
        %v2119 = vpop.f32.mrf.mxu0
        %v2120 = vpop.f32.mrf.mxu0
        %2121 = vdwg.mxu0
        %v2122 = vadd.f32 %v1906, %v2117
        %2123 = vrot.lane.b32.xlu0 %v605, 104
        %v2124 = vpop.permute.xlu0 %2123
        %2125 = vrot.lane.b32.xlu0 %v605, 72
        %v2126 = vpop.permute.xlu0 %2125
        %v2127 = vsel %vm615, %v2124, 0
        %v2129 = vsel %vm615, %v2126, 0
        %2131 = vmatprep.subr.mxu0 0.0
        %2132 = vmatpush1.xpose.msra.mxu0 0.0
        %2133 = vmatprep.subr.mxu0 0.0
        %2134 = vmatpush1.xpose.msra.mxu0 0.0
        %2135 = vmatprep.subr.mxu0 0.0
        %2136 = vmatpush1.xpose.msra.mxu0 0.0
        %2137 = vmatprep.subr.mxu0 0.0
        %2138 = vmatpush1.xpose.msra.mxu0 0.0
        %2139 = vmatprep.subr.mxu0 0.0
        %2140 = vmatpush1.xpose.msra.mxu0 0.0
        %2141 = vmatprep.subr.mxu0 0.0
        %2142 = vmatpush1.xpose.msra.mxu0 0.0
        %2143 = vmatprep.subr.mxu0 0.0
        %2144 = vmatpush1.xpose.msra.mxu0 0.0
        %2145 = vmatprep.subr.mxu0 0.0
        %2146 = vmatpush1.xpose.msra.mxu0 0.0
        %2147 = vmatprep.subr.mxu0 0.0
        %2148 = vmatpush1.xpose.msra.mxu0 0.0
        %2149 = vmatprep.subr.mxu0 0.0
        %2150 = vmatpush1.xpose.msra.mxu0 0.0
        %2151 = vmatprep.subr.mxu0 0.0
        %2152 = vmatpush1.xpose.msra.mxu0 0.0
        %2153 = vmatprep.subr.mxu0 0.0
        %2154 = vmatpush1.xpose.msra.mxu0 0.0
        %2155 = vmatprep.subr.mxu0 0.0
        %2156 = vmatpush1.xpose.msra.mxu0 0.0
        %2157 = vmatprep.subr.mxu0 0.0
        %2158 = vmatpush1.xpose.msra.mxu0 0.0
        %2159 = vmatprep.subr.mxu0 0.0
        %2160 = vmatpush1.xpose.msra.mxu0 0.0
        %2161 = vmatprep.subr.mxu0 0.0
        %2162 = vmatpush1.xpose.msra.mxu0 %v2129
        %2163 = vmatprep.subr.mxu0 0.0
        %2164 = vmatpush2.xpose.msra.mxu0 0.0
        %2165 = vmatprep.subr.mxu0 0.0
        %2166 = vmatpush2.xpose.msra.mxu0 0.0
        %2167 = vmatprep.subr.mxu0 0.0
        %2168 = vmatpush2.xpose.msra.mxu0 0.0
        %2169 = vmatprep.subr.mxu0 0.0
        %2170 = vmatpush2.xpose.msra.mxu0 0.0
        %2171 = vmatprep.subr.mxu0 0.0
        %2172 = vmatpush2.xpose.msra.mxu0 0.0
        %2173 = vmatprep.subr.mxu0 0.0
        %2174 = vmatpush2.xpose.msra.mxu0 0.0
        %2175 = vmatprep.subr.mxu0 0.0
        %2176 = vmatpush2.xpose.msra.mxu0 0.0
        %2177 = vmatprep.subr.mxu0 0.0
        %2178 = vmatpush2.xpose.msra.mxu0 0.0
        %2179 = vmatprep.subr.mxu0 0.0
        %2180 = vmatpush2.xpose.msra.mxu0 0.0
        %2181 = vmatprep.subr.mxu0 0.0
        %2182 = vmatpush2.xpose.msra.mxu0 0.0
        %2183 = vmatprep.subr.mxu0 0.0
        %2184 = vmatpush2.xpose.msra.mxu0 0.0
        %2185 = vmatprep.subr.mxu0 0.0
        %2186 = vmatpush2.xpose.msra.mxu0 0.0
        %2187 = vmatprep.subr.mxu0 0.0
        %2188 = vmatpush2.xpose.msra.mxu0 0.0
        %2189 = vmatprep.subr.mxu0 0.0
        %2190 = vmatpush2.xpose.msra.mxu0 0.0
        %2191 = vmatprep.subr.mxu0 0.0
        %2192 = vmatpush2.xpose.msra.mxu0 0.0
        %2193 = vmatprep.subr.mxu0 0.0
        %2194 = vmatpush2.xpose.msra.mxu0 0.0
        %2195 = vmatprep.mubr.f32.mxu0 0.0
        %2196 = vmatmul.mubr.f32.gmra.mxu0 %v2127
        %v2197 = vpop.f32.mrf.mxu0
        %v2198 = vadd.f32 0.0, %v2197
        %v2199 = vpop.f32.mrf.mxu0
        %2200 = vdwg.mxu0
        %v2201 = vmul.f32 %v2198, 0.35355338
        %v2202 = vadd.f32 %v2201, %v1566
        %v2203 = vsel %vm615, %v2202, -inf
        %2204 = vmax.xlane.f32.xlu0 %v2203
        %v2205 = vpop.xlane.xlu0 %2204
        %v2206 = vsub.f32 %v2202, %v2205
        %v2207 = vmul.f32 %v2206, 1.442695
        %v2208 = vpow.pop %v2207
        %v2209 = vsel %vm615, %v2208, 0.0
        %2210 = vadd.xlane.f32.xlu0 %v2209
        %v2211 = vpop.xlane.xlu0 %2210
        %v2212 = vrcp.pop %v2211
        %v2213 = vmul.f32 %v2208, %v2212
        %2214 = vrot.lane.b32.xlu0 %v605, 40
        %v2215 = vpop.permute.xlu0 %2214
        %v2218 = vsel %vm615, %v2213, 0
        %2220 = vmatprep.subr.mxu0 0.0
        %2221 = vmatpush1.msra.mxu0 0.0
        %2222 = vmatprep.subr.mxu0 0.0
        %2223 = vmatpush1.msra.mxu0 0.0
        %2224 = vmatprep.subr.mxu0 0.0
        %2225 = vmatpush1.msra.mxu0 0.0
        %2226 = vmatprep.subr.mxu0 0.0
        %2227 = vmatpush1.msra.mxu0 0.0
        %2228 = vmatprep.subr.mxu0 0.0
        %2229 = vmatpush1.msra.mxu0 0.0
        %2230 = vmatprep.subr.mxu0 0.0
        %2231 = vmatpush1.msra.mxu0 0.0
        %2232 = vmatprep.subr.mxu0 0.0
        %2233 = vmatpush1.msra.mxu0 0.0
        %2234 = vmatprep.subr.mxu0 0.0
        %2235 = vmatpush1.msra.mxu0 0.0
        %2236 = vmatprep.subr.mxu0 0.0
        %2237 = vmatpush1.msra.mxu0 0.0
        %2238 = vmatprep.subr.mxu0 0.0
        %2239 = vmatpush1.msra.mxu0 0.0
        %2240 = vmatprep.subr.mxu0 0.0
        %2241 = vmatpush1.msra.mxu0 0.0
        %2242 = vmatprep.subr.mxu0 0.0
        %2243 = vmatpush1.msra.mxu0 0.0
        %2244 = vmatprep.subr.mxu0 0.0
        %2245 = vmatpush1.msra.mxu0 0.0
        %2246 = vmatprep.subr.mxu0 0.0
        %2247 = vmatpush1.msra.mxu0 0.0
        %2248 = vmatprep.subr.mxu0 0.0
        %2249 = vmatpush1.msra.mxu0 0.0
        %2250 = vmatprep.subr.mxu0 0.0
        %2251 = vmatpush1.msra.mxu0 %v2215
        %2252 = vmatprep.subr.mxu0 0.0
        %2253 = vmatpush2.msra.mxu0 0.0
        %2254 = vmatprep.subr.mxu0 0.0
        %2255 = vmatpush2.msra.mxu0 0.0
        %2256 = vmatprep.subr.mxu0 0.0
        %2257 = vmatpush2.msra.mxu0 0.0
        %2258 = vmatprep.subr.mxu0 0.0
        %2259 = vmatpush2.msra.mxu0 0.0
        %2260 = vmatprep.subr.mxu0 0.0
        %2261 = vmatpush2.msra.mxu0 0.0
        %2262 = vmatprep.subr.mxu0 0.0
        %2263 = vmatpush2.msra.mxu0 0.0
        %2264 = vmatprep.subr.mxu0 0.0
        %2265 = vmatpush2.msra.mxu0 0.0
        %2266 = vmatprep.subr.mxu0 0.0
        %2267 = vmatpush2.msra.mxu0 0.0
        %2268 = vmatprep.subr.mxu0 0.0
        %2269 = vmatpush2.msra.mxu0 0.0
        %2270 = vmatprep.subr.mxu0 0.0
        %2271 = vmatpush2.msra.mxu0 0.0
        %2272 = vmatprep.subr.mxu0 0.0
        %2273 = vmatpush2.msra.mxu0 0.0
        %2274 = vmatprep.subr.mxu0 0.0
        %2275 = vmatpush2.msra.mxu0 0.0
        %2276 = vmatprep.subr.mxu0 0.0
        %2277 = vmatpush2.msra.mxu0 0.0
        %2278 = vmatprep.subr.mxu0 0.0
        %2279 = vmatpush2.msra.mxu0 0.0
        %2280 = vmatprep.subr.mxu0 0.0
        %2281 = vmatpush2.msra.mxu0 0.0
        %2282 = vmatprep.subr.mxu0 0.0
        %2283 = vmatpush2.msra.mxu0 0.0
        %2284 = vmatprep.mubr.f32.mxu0 0.0
        %2285 = vmatmul.mubr.f32.gmra.mxu0 %v2218
        %v2286 = vpop.f32.mrf.mxu0
        %v2287 = vadd.f32 0.0, %v2286
        %v2288 = vpop.f32.mrf.mxu0
        %2289 = vdwg.mxu0
        %v2290 = vpack.c.bf16 %v2287, %v2287
        %v2292 = vsel %vm615, %v2290, 0
        %2294 = vmatprep.subr.bf16.mxu0 0
        %2295 = vmatpush1.bf16.msra.mxu0 0
        %2296 = vmatprep.subr.bf16.mxu0 0
        %2297 = vmatpush1.bf16.msra.mxu0 0
        %2298 = vmatprep.subr.bf16.mxu0 0
        %2299 = vmatpush1.bf16.msra.mxu0 0
        %2300 = vmatprep.subr.bf16.mxu0 0
        %2301 = vmatpush1.bf16.msra.mxu0 0
        %2302 = vmatprep.subr.bf16.mxu0 0
        %2303 = vmatpush1.bf16.msra.mxu0 0
        %2304 = vmatprep.subr.bf16.mxu0 0
        %2305 = vmatpush1.bf16.msra.mxu0 0
        %2306 = vmatprep.subr.bf16.mxu0 0
        %2307 = vmatpush1.bf16.msra.mxu0 0
        %2308 = vmatprep.subr.bf16.mxu0 0
        %2309 = vmatpush1.bf16.msra.mxu0 %v1434
        %2310 = vmatprep.subr.bf16.mxu0 0
        %2311 = vmatpush2.bf16.msra.mxu0 0
        %2312 = vmatprep.subr.bf16.mxu0 0
        %2313 = vmatpush2.bf16.msra.mxu0 0
        %2314 = vmatprep.subr.bf16.mxu0 0
        %2315 = vmatpush2.bf16.msra.mxu0 0
        %2316 = vmatprep.subr.bf16.mxu0 0
        %2317 = vmatpush2.bf16.msra.mxu0 0
        %2318 = vmatprep.subr.bf16.mxu0 0
        %2319 = vmatpush2.bf16.msra.mxu0 0
        %2320 = vmatprep.subr.bf16.mxu0 0
        %2321 = vmatpush2.bf16.msra.mxu0 0
        %2322 = vmatprep.subr.bf16.mxu0 0
        %2323 = vmatpush2.bf16.msra.mxu0 0
        %2324 = vmatprep.subr.bf16.mxu0 0
        %2325 = vmatpush2.bf16.msra.mxu0 0
        %2326 = vmatprep.mubr.bf16.mxu0 0
        %2327 = vmatmul.mubr.bf16.gmra.mxu0 %v2292
        %v2328 = vpop.f32.mrf.mxu0
        %v2329 = vadd.f32 0.0, %v2328
        %v2330 = vpop.f32.mrf.mxu0
        %v2331 = vpop.f32.mrf.mxu0
        %v2332 = vpop.f32.mrf.mxu0
        %2333 = vdwg.mxu0
        %v2334 = vadd.f32 %v2122, %v2329
        %v2335 = vadd.f32 %v478, %v2334
        %v2336 = vadd.f32 %v2335, %v1481
        %s2337 = scalar_lea.vmem [#allocation5], 8
        %2338 = vst.msk [vmem:[%s2337] sm:$0xff] %vm485, %v2336
        %v2339 = vld [vmem:[#allocation5] sm:$0xff]
        %v2340 = vld [vmem:[#allocation5 + $0x8] sm:$0xff]
        %v2341 = vsel %vm485, %v2339, 0.0
        %2342 = vadd.xlane.f32.xlu0 %v2341
        %v2343 = vpop.xlane.xlu0 %2342
        %v2344 = vsel %vm485, %v2340, 0.0
        %2345 = vadd.xlane.f32.xlu0 %v2344
        %v2346 = vpop.xlane.xlu0 %2345
        %v2347 = vmul.f32 %v2343, %v492
        %v2348 = vmul.f32 %v2346, %v492
        %v2349 = vsub.f32 %v2339, %v2347
        %v2350 = vsub.f32 %v2340, %v2348
        %v2351 = vmul.f32 %v2349, %v2349
        %v2352 = vmul.f32 %v2350, %v2350
        %v2353 = vsel %vm485, %v2351, 0.0
        %2354 = vadd.xlane.f32.xlu0 %v2353
        %v2355 = vpop.xlane.xlu0 %2354
        %v2356 = vsel %vm485, %v2352, 0.0
        %2357 = vadd.xlane.f32.xlu0 %v2356
        %v2358 = vpop.xlane.xlu0 %2357
        %v2359 = vmul.f32 %v2355, %v505
        %v2360 = vmul.f32 %v2358, %v505
        %v2361 = vrsqrt.pop %v2359
        %v2362 = vmul.f32 %v2359, %v2361
        %vm2363 = vcmp.eq.f32.partialorder %v2359, inf
        %v2364 = vsel %vm2363, %v2359, %v2362
        %vm2365 = vcmp.eq.f32.partialorder %v2359, 0.0
        %v2366 = vand.u32 %v2359, 2147483648
        %v2367 = vsel %vm2365, %v2366, %v2364
        %v2368 = vrsqrt.pop %v2360
        %v2369 = vmul.f32 %v2360, %v2368
        %vm2370 = vcmp.eq.f32.partialorder %v2360, inf
        %v2371 = vsel %vm2370, %v2360, %v2369
        %vm2372 = vcmp.eq.f32.partialorder %v2360, 0.0
        %v2373 = vand.u32 %v2360, 2147483648
        %v2374 = vsel %vm2372, %v2373, %v2371
        %v2375 = vlaneseq
        %v2376 = vshrl.u32 %v2375, 7
        %v2377 = vsub.s32 2, %v2376
        %v2378 = vrot.slane %v476, %v2377
        %v2379 = vmul.f32 %v2378, %v2349
        %v2380 = vmul.f32 %v2378, %v2350
        %v2381 = vadd.f32 %v2367, 1e-06
        %v2382 = vadd.f32 %v2374, 1e-06
        %v2383 = vrcp.pop %v2381
        %v2384 = vmul.f32 %v2379, %v2383
        %v2385 = vrcp.pop %v2382
        %v2386 = vmul.f32 %v2380, %v2385
        %v2387 = vlaneseq
        %v2388 = vshrl.u32 %v2387, 7
        %v2389 = vsub.s32 3, %v2388
        %v2390 = vrot.slane %v476, %v2389
        %v2391 = vadd.f32 %v2384, %v2390
        %v2392 = vadd.f32 %v2386, %v2390
        %v2393 = vpack.c.bf16 %v2392, %v2391
        %v2394 = vld [vmem:[%s453] sm:$0xf]
        %v2395 = vld [vmem:[%s453 + $0x4] sm:$0xf]
        %v2396 = vld [vmem:[%s453 + $0x8] sm:$0xf]
        %v2397 = vld [vmem:[%s453 + $0xc] sm:$0xf]
        %v2398 = vld [vmem:[%s456] sm:$0x1]
        %v2400 = vlaneseq
        %v2401 = vshrl.u32 %v2400, 7
        %v2402 = vsub.s32 0, %v2401
        %v2403 = vrot.slane %v2398, %v2402
        %v2409 = vunpack.c.l.b16 %v2394
        %v2410 = vunpack.c.l.b16 %v2395
        %v2411 = vunpack.c.l.b16 %v2396
        %v2412 = vunpack.c.l.b16 %v2397
        %v2413 = vpack.c.b16 %v2410, %v2409
        %v2414 = vpack.c.b16 %v2412, %v2411
        %v2418 = vsel %vm485, %v2393, 0
        %2420 = vmatprep.subr.bf16.mxu0 0
        %2421 = vmatpush1.bf16.msra.mxu0 0
        %2422 = vmatprep.subr.bf16.mxu0 0
        %2423 = vmatpush1.bf16.msra.mxu0 0
        %2424 = vmatprep.subr.bf16.mxu0 0
        %2425 = vmatpush1.bf16.msra.mxu0 0
        %2426 = vmatprep.subr.bf16.mxu0 0
        %2427 = vmatpush1.bf16.msra.mxu0 0
        %2428 = vmatprep.subr.bf16.mxu0 0
        %2429 = vmatpush1.bf16.msra.mxu0 0
        %2430 = vmatprep.subr.bf16.mxu0 0
        %2431 = vmatpush1.bf16.msra.mxu0 0
        %2432 = vmatprep.subr.bf16.mxu0 0
        %2433 = vmatpush1.bf16.msra.mxu0 %v2414
        %2434 = vmatprep.subr.bf16.mxu0 0
        %2435 = vmatpush1.bf16.msra.mxu0 %v2413
        %2436 = vmatprep.subr.bf16.mxu0 0
        %2437 = vmatpush2.bf16.msra.mxu0 0
        %2438 = vmatprep.subr.bf16.mxu0 0
        %2439 = vmatpush2.bf16.msra.mxu0 0
        %2440 = vmatprep.subr.bf16.mxu0 0
        %2441 = vmatpush2.bf16.msra.mxu0 0
        %2442 = vmatprep.subr.bf16.mxu0 0
        %2443 = vmatpush2.bf16.msra.mxu0 0
        %2444 = vmatprep.subr.bf16.mxu0 0
        %2445 = vmatpush2.bf16.msra.mxu0 0
        %2446 = vmatprep.subr.bf16.mxu0 0
        %2447 = vmatpush2.bf16.msra.mxu0 0
        %2448 = vmatprep.subr.bf16.mxu0 0
        %2449 = vmatpush2.bf16.msra.mxu0 0
        %2450 = vmatprep.subr.bf16.mxu0 0
        %2451 = vmatpush2.bf16.msra.mxu0 0
        %2452 = vmatprep.mubr.bf16.mxu0 0
        %2453 = vmatmul.mubr.bf16.gmra.mxu0 %v2418
        %v2454 = vpop.f32.mrf.mxu0
        %v2455 = vadd.f32 %v2403, %v2454
        %v2456 = vpop.f32.mrf.mxu0
        %v2457 = vpop.f32.mrf.mxu0
        %v2458 = vadd.f32 %v2403, %v2457
        %v2459 = vpop.f32.mrf.mxu0
        %2460 = vdwg.mxu0
        %v2461 = vmax.f32 %v2455, 0.0
        %v2462 = vmax.f32 %v2458, 0.0
        %v2463 = vpack.c.bf16 %v2462, %v2461
        %v2464 = vld [vmem:[%s461] sm:$0xf]
        %v2465 = vld [vmem:[%s461 + $0x4] sm:$0xf]
        %v2466 = vld [vmem:[%s461 + $0x8] sm:$0xf]
        %v2467 = vld [vmem:[%s461 + $0xc] sm:$0xf]
        %v2468 = vld [vmem:[%s461 + $0x10] sm:$0xf]
        %v2469 = vld [vmem:[%s461 + $0x14] sm:$0xf]
        %v2470 = vld [vmem:[%s461 + $0x18] sm:$0xf]
        %v2471 = vld [vmem:[%s461 + $0x1c] sm:$0xf]
        %v2472 = vlaneseq
        %v2473 = vshrl.u32 %v2472, 7
        %v2474 = vsub.s32 5, %v2473
        %v2475 = vrot.slane %v476, %v2474
        %v2484 = vunpack.c.l.b16 %v2464
        %v2485 = vunpack.c.l.b16 %v2465
        %v2486 = vunpack.c.l.b16 %v2466
        %v2487 = vunpack.c.l.b16 %v2467
        %v2488 = vunpack.c.l.b16 %v2468
        %v2489 = vunpack.c.l.b16 %v2469
        %v2490 = vunpack.c.l.b16 %v2470
        %v2491 = vunpack.c.l.b16 %v2471
        %v2492 = vpack.c.b16 %v2485, %v2484
        %v2493 = vpack.c.b16 %v2487, %v2486
        %v2494 = vpack.c.b16 %v2489, %v2488
        %v2495 = vpack.c.b16 %v2491, %v2490
        %vm2500 = vcmask 523264
        %v2502 = vsel %vm2500, %v2463, 0
        %2504 = vmatprep.subr.bf16.mxu0 0
        %2505 = vmatpush1.bf16.msra.mxu0 0
        %2506 = vmatprep.subr.bf16.mxu0 0
        %2507 = vmatpush1.bf16.msra.mxu0 0
        %2508 = vmatprep.subr.bf16.mxu0 0
        %2509 = vmatpush1.bf16.msra.mxu0 0
        %2510 = vmatprep.subr.bf16.mxu0 0
        %2511 = vmatpush1.bf16.msra.mxu0 0
        %2512 = vmatprep.subr.bf16.mxu0 0
        %2513 = vmatpush1.bf16.msra.mxu0 %v2495
        %2514 = vmatprep.subr.bf16.mxu0 0
        %2515 = vmatpush1.bf16.msra.mxu0 %v2494
        %2516 = vmatprep.subr.bf16.mxu0 0
        %2517 = vmatpush1.bf16.msra.mxu0 %v2493
        %2518 = vmatprep.subr.bf16.mxu0 0
        %2519 = vmatpush1.bf16.msra.mxu0 %v2492
        %2520 = vmatprep.subr.bf16.mxu0 0
        %2521 = vmatpush2.bf16.msra.mxu0 0
        %2522 = vmatprep.subr.bf16.mxu0 0
        %2523 = vmatpush2.bf16.msra.mxu0 0
        %2524 = vmatprep.subr.bf16.mxu0 0
        %2525 = vmatpush2.bf16.msra.mxu0 0
        %2526 = vmatprep.subr.bf16.mxu0 0
        %2527 = vmatpush2.bf16.msra.mxu0 0
        %2528 = vmatprep.subr.bf16.mxu0 0
        %2529 = vmatpush2.bf16.msra.mxu0 0
        %2530 = vmatprep.subr.bf16.mxu0 0
        %2531 = vmatpush2.bf16.msra.mxu0 0
        %2532 = vmatprep.subr.bf16.mxu0 0
        %2533 = vmatpush2.bf16.msra.mxu0 0
        %2534 = vmatprep.subr.bf16.mxu0 0
        %2535 = vmatpush2.bf16.msra.mxu0 0
        %2536 = vmatprep.mubr.bf16.mxu0 0
        %2537 = vmatmul.mubr.bf16.gmra.mxu0 %v2502
        %v2538 = vpop.f32.mrf.mxu0
        %v2539 = vadd.f32 %v2475, %v2538
        %v2540 = vpop.f32.mrf.mxu0
        %v2541 = vpop.f32.mrf.mxu0
        %v2542 = vadd.f32 %v2475, %v2541
        %v2543 = vpop.f32.mrf.mxu0
        %2544 = vdwg.mxu0
        %v2545 = vadd.f32 %v2339, %v2539
        %v2546 = vadd.f32 %v2340, %v2542
        %2547 = vst.msk [vmem:[#allocation5] sm:$0xff] %vm485, %v2545
        %2548 = vst.msk [vmem:[#allocation5 + $0x8] sm:$0xff] %vm485, %v2546
        %p2549 = scmp.eq.s32.totalorder %s23, 1
        // Predicated region
        $region69: #{tpu_custom_call.1} parent=59 // pred_check
          %p2550 = pneg %p2549
        $region70: #{tpu_custom_call.1} parent=59 // pred_check_branch
          %2552 = sbr.rel (%p2550) target = $region72
        $region71: #{tpu_custom_call.1} parent=59 // pred_region
          %v2553 = vld [vmem:[%s9] sm:$0x3]
          %v2554 = vld [vmem:[#allocation5] sm:$0xff]
          %v2555 = vld [vmem:[#allocation5 + $0x8] sm:$0xff]
          %v2556 = vsel %vm485, %v2554, 0.0
          %2557 = vadd.xlane.f32.xlu0 %v2556
          %v2558 = vpop.xlane.xlu0 %2557
          %v2559 = vsel %vm485, %v2555, 0.0
          %2560 = vadd.xlane.f32.xlu0 %v2559
          %v2561 = vpop.xlane.xlu0 %2560
          %v2562 = vmul.f32 %v2558, %v492
          %v2563 = vmul.f32 %v2561, %v492
          %v2564 = vsub.f32 %v2554, %v2562
          %v2565 = vsub.f32 %v2555, %v2563
          %v2566 = vmul.f32 %v2564, %v2564
          %v2567 = vmul.f32 %v2565, %v2565
          %v2568 = vsel %vm485, %v2566, 0.0
          %2569 = vadd.xlane.f32.xlu0 %v2568
          %v2570 = vpop.xlane.xlu0 %2569
          %v2571 = vsel %vm485, %v2567, 0.0
          %2572 = vadd.xlane.f32.xlu0 %v2571
          %v2573 = vpop.xlane.xlu0 %2572
          %v2574 = vmul.f32 %v2570, %v505
          %v2575 = vmul.f32 %v2573, %v505
          %v2576 = vrsqrt.pop %v2574
          %v2577 = vmul.f32 %v2574, %v2576
          %vm2578 = vcmp.eq.f32.partialorder %v2574, inf
          %v2579 = vsel %vm2578, %v2574, %v2577
          %vm2580 = vcmp.eq.f32.partialorder %v2574, 0.0
          %v2581 = vand.u32 %v2574, 2147483648
          %v2582 = vsel %vm2580, %v2581, %v2579
          %v2583 = vrsqrt.pop %v2575
          %v2584 = vmul.f32 %v2575, %v2583
          %vm2585 = vcmp.eq.f32.partialorder %v2575, inf
          %v2586 = vsel %vm2585, %v2575, %v2584
          %vm2587 = vcmp.eq.f32.partialorder %v2575, 0.0
          %v2588 = vand.u32 %v2575, 2147483648
          %v2589 = vsel %vm2587, %v2588, %v2586
          %v2590 = vlaneseq
          %v2591 = vshrl.u32 %v2590, 7
          %v2592 = vsub.s32 0, %v2591
          %v2593 = vrot.slane %v2553, %v2592
          %v2594 = vmul.f32 %v2593, %v2564
          %v2595 = vmul.f32 %v2593, %v2565
          %v2596 = vadd.f32 %v2582, 1e-06
          %v2597 = vadd.f32 %v2589, 1e-06
          %v2598 = vrcp.pop %v2596
          %v2599 = vmul.f32 %v2594, %v2598
          %v2600 = vrcp.pop %v2597
          %v2601 = vmul.f32 %v2595, %v2600
          %v2602 = vlaneseq
          %v2603 = vshrl.u32 %v2602, 7
          %v2604 = vsub.s32 1, %v2603
          %v2605 = vrot.slane %v2553, %v2604
          %v2606 = vadd.f32 %v2599, %v2605
          %v2607 = vadd.f32 %v2601, %v2605
          %2608 = vst.msk [vmem:[#allocation5] sm:$0xff] %vm485, %v2606
          %2609 = vst.msk [vmem:[#allocation5 + $0x8] sm:$0xff] %vm485, %v2607
        $region72: #{tpu_custom_call.1} parent=59 // pred_fallthru
          _
        // Predicated region
        $region73: #{tpu_custom_call.1} parent=59 // pred_check
          %p2610 = pneg %p281
        $region74: #{tpu_custom_call.1} parent=59 // pred_check_branch
          %2612 = sbr.rel (%p2610) target = $region76
        $region75: #{tpu_custom_call.1} parent=59 // pred_region
          %s2614 = ssub.s32 256, 256
          %2615 = vsyncadd [#allocation4], %s2614
          %s2616 = sshll.u32 [#allocation5], 4
          %s2617 = int_to_ptr.vmem [resolvable:$true] %s2616
          %2622 = dma.vmem_to_hbm [thread:$0]  %s2617, 256, %s10, [#allocation4], 128, 128, 8
        $region76: #{tpu_custom_call.1} parent=59 // pred_fallthru
          _
        // Predicated region
        $region77: #{tpu_custom_call.1} parent=59 // pred_check
          %p2623 = pneg %p281
        $region78: #{tpu_custom_call.1} parent=59 // pred_check_branch
          %2625 = sbr.rel (%p2623) target = $region80
        $region79: #{tpu_custom_call.1} parent=59 // pred_region
          %2626 = dma.done [#allocation4], 256
        $region80: #{tpu_custom_call.1} parent=59 // pred_fallthru
          _
      $region60: #{tpu_custom_call.1} parent=5 // pred_fallthru
        _
      %p2627 = scmp.le.s32.totalorder 2, %s18
      // Predicated region
      $region81: #{tpu_custom_call.1} parent=5 // pred_check
        %p2628 = pneg %p2627
      $region82: #{tpu_custom_call.1} parent=5 // pred_check_branch
        %2630 = sbr.rel (%p2628) target = $region84
      $region83: #{tpu_custom_call.1} parent=5 // pred_region
        %s2631 = ssub.s32 %s18, 2
      $region84: #{tpu_custom_call.1} parent=5 // pred_fallthru
        _
    $region6: #{tpu_custom_call.1} parent=1 // loop_footer
      %s22 = sadd.s32 1, %s18
    $region7: #{tpu_custom_call.1} parent=1 // loop_footer_branch
      %17 = sbr.rel target = $region3
    $region8: #{tpu_custom_call.1} parent=1 // loop_exit
      _
    %2632 = vsyncpa [#allocation3], 1
    %s2633 = scalar_lea.sflag [#allocation3], 1
    %2634 = vsyncpa %s2633, 1
    %2635 = vsyncpa [#allocation4], 1
    %s2636 = scalar_lea.sflag [#allocation4], 1
    %2637 = vsyncpa %s2636, 1

</llo_original>
